<compile_context>
chip_gen: v7x
topology: tpu7x:2x2x1
jax: 0.10.0
libtpu: 0.0.40
codegen_flags: <defaults>
</compile_context>

<pallas_src>
import functools

import jax
import jax.numpy as jnp
from jax import lax
from jax.experimental import pallas as pl
from jax.experimental.pallas import tpu as pltpu  # noqa: F401  (TPU backend)

LR = 5e-5
PERCENT_WINNER = 0.2


# ----------------------------------------------------------------------------- fused kernel
def _hidden_layer_t(x_in, w_t, b, lr_over_b, extra=None):
    """Linear + ReLU + Hebbian row-normalised modified weights, all in the
    transposed (In, H) weight layout.

    Returns (y, nmw_T, extra_corr) where
      y          : (B, H)      post-ReLU activations
      nmw_T      : (In, H)     normalised modified weights (transposed layout)
      extra_corr : (E, H)|None extra^T @ (y*lr/B) if `extra` (B, E) was given
    """
    # linear: x @ w_t + b   (standard MK x KN MXU matmul, no transposes)
    y = jnp.dot(x_in, w_t, preferred_element_type=jnp.float32) + b
    y = jnp.maximum(y, 0.0)                                   # ReLU

    # Hebbian/Oja delta in transposed layout, lr/B folded into one scale of y:
    #   mod_T = w_t + (x^T ys) - w_t @ triu(y^T ys),   ys = y * lr/B
    ys = y * lr_over_b
    if extra is None:
        left = jnp.concatenate([y, x_in], axis=1)             # (B, H+In)
    else:
        left = jnp.concatenate([y, x_in, extra], axis=1)      # (B, H+In+E)
    # ONE batch-contracted matmul for all statistics (K = B is tiny; halving
    # the matmul count per layer shortens the latency-bound critical path).
    stats = lax.dot_general(left, ys, (((0,), (0,)), ((), ())),
                            preferred_element_type=jnp.float32)  # (H+In[+E], H)

    H = y.shape[1]
    In = x_in.shape[1]
    C = stats[:H, :]                 # y^T ys      (H, H)  (symmetric, lr/B-scaled Gram)
    A = stats[H:H + In, :]           # x^T ys      (In, H)
    extra_corr = stats[H + In:, :] if extra is not None else None

    # upper-triangular mask (== transpose of the reference's tril on the
    # symmetric Gram) from broadcasting iotas -- no (H,H) int32 temporaries.
    r = lax.broadcasted_iota(jnp.int32, (H, 1), 0)
    c = lax.broadcasted_iota(jnp.int32, (1, H), 1)
    C_up = jnp.where(r <= c, C, 0.0)                          # (H, H)

    lateral_T = jnp.dot(w_t, C_up, preferred_element_type=jnp.float32)   # (In, H)
    mod_T = w_t + (A - lateral_T)

    # column L2 normalisation with clamp(norm, 1e-8): mod / max(||mod||, 1e-8)
    sq = jnp.sum(mod_T * mod_T, axis=0, keepdims=True)        # (1, H)
    inv = jnp.where(sq >= 1e-16, lax.rsqrt(jnp.maximum(sq, 1e-30)), 1e8)
    nmw_T = mod_T * inv
    return y, nmw_T, extra_corr


def _fused_forward_kernel(x_ref, t_ref,
                          w0_ref, b0_ref, w1_ref, b1_ref,
                          w2_ref, b2_ref, w3_ref, b3_ref,
                          out_ref, nmw0_ref, nmw1_ref, nmw2_ref, scale3_ref,
                          s0_ref, s1_ref, s2_ref,
                          *, lr):
    x = x_ref[...]
    tgt = t_ref[...]
    B = x.shape[0]
    lr_over_b = lr / B

    x1, nmw0_t, _ = _hidden_layer_t(x, w0_ref[...], b0_ref[...], lr_over_b)
    nmw0_ref[...] = nmw0_t
    s0_ref[...] = jnp.sqrt(jnp.sum(nmw0_t * nmw0_t, axis=0, keepdims=True))

    x2, nmw1_t, _ = _hidden_layer_t(x1, w1_ref[...], b1_ref[...], lr_over_b)
    nmw1_ref[...] = nmw1_t
    s1_ref[...] = jnp.sqrt(jnp.sum(nmw1_t * nmw1_t, axis=0, keepdims=True))

    # Fuse the final-layer supervised correlation (target^T x3 / B) into the
    # last hidden layer's batch-contracted statistics matmul.
    x3, nmw2_t, tcorr = _hidden_layer_t(x2, w2_ref[...], b2_ref[...], lr_over_b,
                                        extra=tgt)
    nmw2_ref[...] = nmw2_t
    s2_ref[...] = jnp.sqrt(jnp.sum(nmw2_t * nmw2_t, axis=0, keepdims=True))

    # final layer: linear, no ReLU
    logits = jnp.dot(x3, w3_ref[...], preferred_element_type=jnp.float32) + b3_ref[...]

    # supervised correlation: tcorr = target^T @ (x3*lr/B)  ->  /lr == target^T x3 / B
    corr = tcorr * (1.0 / lr)                                  # (Out, h2)
    mn = jnp.min(corr)
    mx = jnp.max(corr)
    denom = mx - mn
    scale3_ref[...] = jnp.where(denom > 1e-8,
                                (corr - mn) / jnp.maximum(denom, 1e-8),
                                corr)

    # softmax over dim 1 (exact divide: the (B,1) denominator is tiny, accuracy free)
    m = jnp.max(logits, axis=1, keepdims=True)
    e = jnp.exp(logits - m)
    out_ref[...] = e / jnp.sum(e, axis=1, keepdims=True)


def fused_forward(x, target, ws_t, bs, lr=LR):
    """Single pallas_call for the whole forward.  All operands are whole-array
    VMEM-resident blocks (no grid, nothing to pipeline).  Weights are consumed
    pre-transposed in (In, H) layout."""
    B, In = x.shape
    Out = target.shape[1]
    h0, h1, h2 = ws_t[0].shape[1], ws_t[1].shape[1], ws_t[2].shape[1]

    out_shapes = (
        jax.ShapeDtypeStruct((B, Out), jnp.float32),    # softmax output
        jax.ShapeDtypeStruct((In, h0), jnp.float32),    # nmw layer 0 (transposed, lane-dense)
        jax.ShapeDtypeStruct((h0, h1), jnp.float32),    # nmw layer 1 (transposed)
        jax.ShapeDtypeStruct((h1, h2), jnp.float32),    # nmw layer 2 (transposed)
        jax.ShapeDtypeStruct((Out, h2), jnp.float32),   # final-layer scale (min-max corr)
        jax.ShapeDtypeStruct((1, h0), jnp.float32),     # selection scores layer 0
        jax.ShapeDtypeStruct((1, h1), jnp.float32),     # selection scores layer 1
        jax.ShapeDtypeStruct((1, h2), jnp.float32),     # selection scores layer 2
    )

    # advisory cost estimate so XLA can schedule the surrounding glue around us
    dims = [In, h0, h1, h2, Out]
    flops = 0
    for i in range(4):
        flops += 2 * B * dims[i] * dims[i + 1]                        # forward linears
    for (i_, h_), e_ in zip(((In, h0), (h0, h1), (h1, h2)), (0, 0, Out)):
        flops += 2 * (h_ + i_ + e_) * B * h_                          # fused batch stats
        flops += 2 * i_ * h_ * h_                                     # lateral term
    transcendentals = B * Out + 2 * (h0 + h1 + h2)                    # exp + rsqrt/sqrt
    bytes_in = 4 * (x.size + target.size
                    + sum(int(w.size) for w in ws_t) + sum(int(b.size) for b in bs))
    bytes_out = 4 * (B * Out + In * h0 + h0 * h1 + h1 * h2 + Out * h2 + h0 + h1 + h2)
    cost = pl.CostEstimate(flops=flops, transcendentals=transcendentals,
                           bytes_accessed=bytes_in + bytes_out)

    return pl.pallas_call(
        functools.partial(_fused_forward_kernel, lr=lr),
        out_shape=out_shapes,
        cost_estimate=cost,
    )(x, target, ws_t[0], bs[0], ws_t[1], bs[1], ws_t[2], bs[2], ws_t[3], bs[3])


# ----------------------------------------------------------------------------- selection glue (static sizes, no scatters/gathers)
def _select_hidden(nmw_t, scores_row, h_size):
    """Winner selection for a hidden layer.  nmw_t is (In, H) transposed."""
    num_winners = int(PERCENT_WINNER * h_size)
    if num_winners == 0 and h_size > 0:
        num_winners = 1
    scores = scores_row[0]                                     # (H,)  == ||rows of nmw||
    _, topk_idx = lax.top_k(scores, num_winners)
    mask = jnp.sum(jax.nn.one_hot(topk_idx, h_size, dtype=jnp.float32), axis=0)  # (H,)
    non_winners = jnp.where(mask == 0, size=h_size - num_winners)[0]

    mrow = (mask > 0.5)[None, :]                               # (1, H) winner-column mask
    wmin = jnp.min(jnp.where(mrow, nmw_t, jnp.inf))            # min over winner rows
    wmax = jnp.max(jnp.where(mrow, nmw_t, -jnp.inf))           # max over winner rows
    denom = wmax - wmin
    scale_t = jnp.where(mrow, nmw_t, wmin)
    scale_t = jnp.where(denom > 1e-8,
                        (scale_t - wmin) / jnp.maximum(denom, 1e-8),
                        jnp.zeros_like(scale_t))
    # returned in reference (H, In) layout (matches gd_layer.weight shape)
    return scale_t.T, non_winners, mask[None, :]


def _select_final(scale3, o_size):
    num_winners = int(PERCENT_WINNER * o_size)
    scores = jnp.sqrt(jnp.sum(scale3 * scale3, axis=1))
    _, topk_idx = lax.top_k(scores, num_winners)
    mask = jnp.sum(jax.nn.one_hot(topk_idx, o_size, dtype=jnp.float32), axis=0)
    non_winners = jnp.where(mask == 0, size=o_size - num_winners)[0]
    return non_winners, mask[None, :]


# ----------------------------------------------------------------------------- forward
@jax.jit
def nn_forward(x, target, params):
    """Equivalent of NN.forward(x, target=target, indices_old=[None]*4,
    masks=None, scalers=None, selection_method='hebbian')."""
    ws_t, bs = params["w_t"], params["b"]
    (out, nmw0_t, nmw1_t, nmw2_t, scale3, s0, s1, s2) = fused_forward(x, target, ws_t, bs)

    hebbian_scores, hebbian_indices, hebbian_masks = [], [], []
    for nmw_t, srow in zip((nmw0_t, nmw1_t, nmw2_t), (s0, s1, s2)):
        scale, non_win, mask = _select_hidden(nmw_t, srow, nmw_t.shape[1])
        hebbian_scores.append(scale)
        hebbian_indices.append(non_win)
        hebbian_masks.append(mask)

    non_win, mask = _select_final(scale3, scale3.shape[0])
    hebbian_scores.append(scale3)
    hebbian_indices.append(non_win)
    hebbian_masks.append(mask)

    common_indices = []  # indices_old is None for every layer -> stays empty
    return out, hebbian_scores, hebbian_indices, hebbian_masks, common_indices


# ----------------------------------------------------------------------------- pure-JAX reference (for validation)
def _ref_forward(x, target, ws_t, bs, lr=LR):
    """Plain-JAX replica of the PyTorch math (weights given transposed)."""
    B = x.shape[0]
    nmws_t = []
    for i in range(3):
        w = ws_t[i].T                                # PyTorch (H, In) layout
        b = bs[i]
        y = jnp.maximum(x @ w.T + b, 0.0)
        y_x = y.T @ x / B
        y_yT = y.T @ y / B
        lateral = (y_yT * jnp.tril(jnp.ones_like(y_yT))) @ w
        mod = w + lr * (y_x - lateral)
        norm = jnp.maximum(jnp.linalg.norm(mod, axis=1, keepdims=True), 1e-8)
        nmws_t.append((mod / norm).T)                # compare in transposed layout
        x = y
    logits = x @ ws_t[3] + bs[3]
    corr = target.T @ x / B
    mn, mx = jnp.min(corr), jnp.max(corr)
    scale3 = jnp.where(mx - mn > 1e-8, (corr - mn) / (mx - mn), corr)
    out = jax.nn.softmax(logits, axis=1)
    return out, nmws_t, scale3


# ----------------------------------------------------------------------------- parameter init
def init_params(key, input_size, output_size):
    """Weights stored pre-transposed (In, H): kaiming-normal entries are i.i.d.
    so drawing directly in transposed layout is distribution-equivalent and
    saves four per-call transposes on the kernel's critical path."""
    sizes = [input_size, 256, 128, 64, output_size]
    ws_t, bs = [], []
    for i in range(4):
        key, kw, kb = jax.random.split(key, 3)
        fan_in, fan_out = sizes[i], sizes[i + 1]
        w_t = jax.random.normal(kw, (fan_in, fan_out), jnp.float32) * jnp.sqrt(2.0 / fan_in)
        b = jax.random.normal(kb, (1, fan_out), jnp.float32) * 0.01   # (1, H): lane-dense
        ws_t.append(w_t)
        bs.append(b)
    return {"w_t": ws_t, "b": bs}


# ----------------------------------------------------------------------------- main
if __name__ == "__main__":
    key = jax.random.PRNGKey(0)
    batch, input_size, output_size = 8, 32, 16

    key, kx, kt = jax.random.split(key, 3)
    x = jax.random.normal(kx, (batch, input_size), jnp.float32)
    labels = jax.random.randint(kt, (batch,), 0, output_size)
    target = jax.nn.one_hot(labels, output_size, dtype=jnp.float32)

    params = init_params(key, input_size, output_size)

    out, scores, indices, masks, common = nn_forward(x, target, params)
    jax.block_until_ready((out, scores, indices, masks))

    # --- shape / structure checks -------------------------------------------
    assert out.shape == (batch, output_size)
    assert [s.shape for s in scores] == [(256, input_size), (128, 256),
                                         (64, 128), (output_size, 64)]
    assert [m.shape for m in masks] == [(1, 256), (1, 128), (1, 64), (1, output_size)]
    assert [i.shape for i in indices] == [(205,), (103,), (52,), (13,)]
    assert common == []

    # --- numeric sanity -------------------------------------------------------
    assert bool(jnp.allclose(jnp.sum(out, axis=1), 1.0, atol=1e-3))  # exact divide now
    assert bool(jnp.all(out >= 0.0))
    for m, nw in zip(masks, (51, 25, 12, 3)):
        assert int(jnp.sum(m)) == nw

    # --- compare raw kernel outputs against a plain-JAX reference ------------
    k_raw = jax.block_until_ready(fused_forward(x, target, params["w_t"], params["b"]))
    k_out, k_nmw0_t, k_nmw1_t, k_nmw2_t, k_scale3 = k_raw[:5]
    with jax.default_matmul_precision("float32"):
        r_out, r_nmws_t, r_scale3 = _ref_forward(x, target, params["w_t"], params["b"])
    assert bool(jnp.allclose(k_out, r_out, atol=1e-2))
    for k_nmw, r_nmw in zip((k_nmw0_t, k_nmw1_t, k_nmw2_t), r_nmws_t):
        assert bool(jnp.allclose(k_nmw, r_nmw, atol=5e-2))
    assert bool(jnp.allclose(k_scale3, r_scale3, atol=5e-2))

    print("KERNEL_OK")
</pallas_src>

<mosaic_0001>
module attributes {stable_mosaic.version = 11 : i64} {
  func.func private @main(%arg0: i32) attributes {dimension_semantics = [#tpu.dimension_semantics<core_parallel>], iteration_bounds = array<i64: 2>, tpu.core_type = #tpu.core_type<sc_scalar_subcore>, window_params = []} {
    return
  }
}

module attributes {stable_mosaic.version = 11 : i64} {
  func.func private @main(%arg0: i32) attributes {dimension_semantics = [#tpu.dimension_semantics<core_parallel>], iteration_bounds = array<i64: 2>, tpu.core_type = #tpu.core_type<sc_scalar_subcore>, window_params = []} {
    return
  }
}

module attributes {stable_mosaic.version = 11 : i64} {
  func.func @_fused_forward_kernel(%arg0: memref<8x32xf32, #tpu.memory_space<vmem>>, %arg1: memref<8x16xf32, #tpu.memory_space<vmem>>, %arg2: memref<32x256xf32, #tpu.memory_space<vmem>>, %arg3: memref<1x256xf32, #tpu.memory_space<vmem>>, %arg4: memref<256x128xf32, #tpu.memory_space<vmem>>, %arg5: memref<1x128xf32, #tpu.memory_space<vmem>>, %arg6: memref<128x64xf32, #tpu.memory_space<vmem>>, %arg7: memref<1x64xf32, #tpu.memory_space<vmem>>, %arg8: memref<64x16xf32, #tpu.memory_space<vmem>>, %arg9: memref<1x16xf32, #tpu.memory_space<vmem>>, %arg10: memref<8x16xf32, #tpu.memory_space<vmem>>, %arg11: memref<32x256xf32, #tpu.memory_space<vmem>>, %arg12: memref<256x128xf32, #tpu.memory_space<vmem>>, %arg13: memref<128x64xf32, #tpu.memory_space<vmem>>, %arg14: memref<16x64xf32, #tpu.memory_space<vmem>>, %arg15: memref<1x256xf32, #tpu.memory_space<vmem>>, %arg16: memref<1x128xf32, #tpu.memory_space<vmem>>, %arg17: memref<1x64xf32, #tpu.memory_space<vmem>>) attributes {dimension_semantics = [], scalar_prefetch = 0 : i64, scratch_operands = 0 : i64, tpu.core_type = #tpu.core_type<tc>} {
    %c0 = arith.constant 0 : index
    %c0_0 = arith.constant 0 : index
    %0 = vector.load %arg0[%c0, %c0_0] : memref<8x32xf32, #tpu.memory_space<vmem>>, vector<8x32xf32>
    %c0_1 = arith.constant 0 : index
    %c0_2 = arith.constant 0 : index
    %1 = vector.load %arg1[%c0_1, %c0_2] : memref<8x16xf32, #tpu.memory_space<vmem>>, vector<8x16xf32>
    %c0_3 = arith.constant 0 : index
    %c0_4 = arith.constant 0 : index
    %2 = vector.load %arg2[%c0_3, %c0_4] : memref<32x256xf32, #tpu.memory_space<vmem>>, vector<32x256xf32>
    %c0_5 = arith.constant 0 : index
    %c0_6 = arith.constant 0 : index
    %3 = vector.load %arg3[%c0_5, %c0_6] : memref<1x256xf32, #tpu.memory_space<vmem>>, vector<1x256xf32>
    %cst = arith.constant dense<0.000000e+00> : vector<8x256xf32>
    %4 = tpu.matmul %0, %2, %cst {dimension_numbers = #tpu.dot_dimension_numbers<[1], [0], [0], [1], [0, 0, 1, 1], [], []>} : vector<8x32xf32>, vector<32x256xf32>, vector<8x256xf32> -> vector<8x256xf32>
    %5 = vector.broadcast %3 : vector<1x256xf32> to vector<8x256xf32>
    %6 = arith.addf %4, %5 : vector<8x256xf32>
    %cst_7 = arith.constant 0.000000e+00 : f32
    %7 = vector.broadcast %cst_7 : f32 to vector<8x256xf32>
    %8 = arith.maximumf %6, %7 : vector<8x256xf32>
    %cst_8 = arith.constant 6.250000e-06 : f32
    %9 = vector.broadcast %cst_8 : f32 to vector<8x256xf32>
    %10 = arith.mulf %8, %9 : vector<8x256xf32>
    %11 = tpu.concatenate %8, %0 in 1 : vector<8x256xf32>, vector<8x32xf32> -> vector<8x288xf32>
    %cst_9 = arith.constant dense<0.000000e+00> : vector<288x256xf32>
    %12 = tpu.matmul %11, %10, %cst_9 {dimension_numbers = #tpu.dot_dimension_numbers<[0], [0], [1], [1], [0, 1, 1, 1], [], []>} : vector<8x288xf32>, vector<8x256xf32>, vector<288x256xf32> -> vector<288x256xf32>
    %13 = vector.extract_strided_slice %12 {offsets = [0, 0], sizes = [256, 256], strides = [1, 1]} : vector<288x256xf32> to vector<256x256xf32>
    %14 = vector.extract_strided_slice %12 {offsets = [256, 0], sizes = [32, 256], strides = [1, 1]} : vector<288x256xf32> to vector<32x256xf32>
    %15 = tpu.iota {dimensions = array<i32: 0>} : vector<256x1xi32>
    %16 = tpu.iota {dimensions = array<i32: 1>} : vector<1x256xi32>
    %17 = vector.broadcast %15 : vector<256x1xi32> to vector<256x256xi32>
    %18 = vector.broadcast %16 : vector<1x256xi32> to vector<256x256xi32>
    %19 = arith.cmpi sle, %17, %18 : vector<256x256xi32>
    %cst_10 = arith.constant 0.000000e+00 : f32
    %20 = vector.broadcast %cst_10 : f32 to vector<256x256xf32>
    %21 = arith.select %19, %13, %20 : vector<256x256xi1>, vector<256x256xf32>
    %cst_11 = arith.constant dense<0.000000e+00> : vector<32x256xf32>
    %22 = tpu.matmul %2, %21, %cst_11 {dimension_numbers = #tpu.dot_dimension_numbers<[1], [0], [0], [1], [0, 0, 1, 1], [], []>} : vector<32x256xf32>, vector<256x256xf32>, vector<32x256xf32> -> vector<32x256xf32>
    %23 = arith.subf %14, %22 : vector<32x256xf32>
    %24 = arith.addf %2, %23 : vector<32x256xf32>
    %25 = arith.mulf %24, %24 : vector<32x256xf32>
    %cst_12 = arith.constant dense<0.000000e+00> : vector<256xf32>
    %26 = vector.multi_reduction <add>, %25, %cst_12 [0] : vector<32x256xf32> to vector<256xf32>
    %27 = vector.shape_cast %26 : vector<256xf32> to vector<1x256xf32>
    %cst_13 = arith.constant 1.000000e-16 : f32
    %28 = vector.broadcast %cst_13 : f32 to vector<1x256xf32>
    %29 = arith.cmpf oge, %27, %28 : vector<1x256xf32>
    %cst_14 = arith.constant 1.000000e-30 : f32
    %30 = vector.broadcast %cst_14 : f32 to vector<1x256xf32>
    %31 = arith.maximumf %27, %30 : vector<1x256xf32>
    %32 = math.rsqrt %31 : vector<1x256xf32>
    %cst_15 = arith.constant 1.000000e+08 : f32
    %33 = vector.broadcast %cst_15 : f32 to vector<1x256xf32>
    %34 = arith.select %29, %32, %33 : vector<1x256xi1>, vector<1x256xf32>
    %35 = vector.broadcast %34 : vector<1x256xf32> to vector<32x256xf32>
    %36 = arith.mulf %24, %35 : vector<32x256xf32>
    %c0_16 = arith.constant 0 : index
    %c0_17 = arith.constant 0 : index
    %37 = vector.load %arg11[%c0_16, %c0_17] : memref<32x256xf32, #tpu.memory_space<vmem>>, vector<32x256xf32>
    tpu.vector_store %arg11[%c0_16, %c0_17], %36 {strides = array<i32>} : memref<32x256xf32, #tpu.memory_space<vmem>>, vector<32x256xf32>,
    %38 = arith.mulf %36, %36 : vector<32x256xf32>
    %cst_18 = arith.constant dense<0.000000e+00> : vector<256xf32>
    %39 = vector.multi_reduction <add>, %38, %cst_18 [0] : vector<32x256xf32> to vector<256xf32>
    %40 = vector.shape_cast %39 : vector<256xf32> to vector<1x256xf32>
    %41 = math.sqrt %40 : vector<1x256xf32>
    %c0_19 = arith.constant 0 : index
    %c0_20 = arith.constant 0 : index
    %42 = vector.load %arg15[%c0_19, %c0_20] : memref<1x256xf32, #tpu.memory_space<vmem>>, vector<1x256xf32>
    tpu.vector_store %arg15[%c0_19, %c0_20], %41 {strides = array<i32>} : memref<1x256xf32, #tpu.memory_space<vmem>>, vector<1x256xf32>,
    %c0_21 = arith.constant 0 : index
    %c0_22 = arith.constant 0 : index
    %43 = vector.load %arg4[%c0_21, %c0_22] : memref<256x128xf32, #tpu.memory_space<vmem>>, vector<256x128xf32>
    %c0_23 = arith.constant 0 : index
    %c0_24 = arith.constant 0 : index
    %44 = vector.load %arg5[%c0_23, %c0_24] : memref<1x128xf32, #tpu.memory_space<vmem>>, vector<1x128xf32>
    %cst_25 = arith.constant dense<0.000000e+00> : vector<8x128xf32>
    %45 = tpu.matmul %8, %43, %cst_25 {dimension_numbers = #tpu.dot_dimension_numbers<[1], [0], [0], [1], [0, 0, 1, 1], [], []>} : vector<8x256xf32>, vector<256x128xf32>, vector<8x128xf32> -> vector<8x128xf32>
    %46 = vector.broadcast %44 : vector<1x128xf32> to vector<8x128xf32>
    %47 = arith.addf %45, %46 : vector<8x128xf32>
    %cst_26 = arith.constant 0.000000e+00 : f32
    %48 = vector.broadcast %cst_26 : f32 to vector<8x128xf32>
    %49 = arith.maximumf %47, %48 : vector<8x128xf32>
    %cst_27 = arith.constant 6.250000e-06 : f32
    %50 = vector.broadcast %cst_27 : f32 to vector<8x128xf32>
    %51 = arith.mulf %49, %50 : vector<8x128xf32>
    %52 = tpu.concatenate %49, %8 in 1 : vector<8x128xf32>, vector<8x256xf32> -> vector<8x384xf32>
    %cst_28 = arith.constant dense<0.000000e+00> : vector<384x128xf32>
    %53 = tpu.matmul %52, %51, %cst_28 {dimension_numbers = #tpu.dot_dimension_numbers<[0], [0], [1], [1], [0, 1, 1, 1], [], []>} : vector<8x384xf32>, vector<8x128xf32>, vector<384x128xf32> -> vector<384x128xf32>
    %54 = vector.extract_strided_slice %53 {offsets = [0, 0], sizes = [128, 128], strides = [1, 1]} : vector<384x128xf32> to vector<128x128xf32>
    %55 = vector.extract_strided_slice %53 {offsets = [128, 0], sizes = [256, 128], strides = [1, 1]} : vector<384x128xf32> to vector<256x128xf32>
    %56 = tpu.iota {dimensions = array<i32: 0>} : vector<128x1xi32>
    %57 = tpu.iota {dimensions = array<i32: 1>} : vector<1x128xi32>
    %58 = vector.broadcast %56 : vector<128x1xi32> to vector<128x128xi32>
    %59 = vector.broadcast %57 : vector<1x128xi32> to vector<128x128xi32>
    %60 = arith.cmpi sle, %58, %59 : vector<128x128xi32>
    %cst_29 = arith.constant 0.000000e+00 : f32
    %61 = vector.broadcast %cst_29 : f32 to vector<128x128xf32>
    %62 = arith.select %60, %54, %61 : vector<128x128xi1>, vector<128x128xf32>
    %cst_30 = arith.constant dense<0.000000e+00> : vector<256x128xf32>
    %63 = tpu.matmul %43, %62, %cst_30 {dimension_numbers = #tpu.dot_dimension_numbers<[1], [0], [0], [1], [0, 0, 1, 1], [], []>} : vector<256x128xf32>, vector<128x128xf32>, vector<256x128xf32> -> vector<256x128xf32>
    %64 = arith.subf %55, %63 : vector<256x128xf32>
    %65 = arith.addf %43, %64 : vector<256x128xf32>
    %66 = arith.mulf %65, %65 : vector<256x128xf32>
    %cst_31 = arith.constant dense<0.000000e+00> : vector<128xf32>
    %67 = vector.multi_reduction <add>, %66, %cst_31 [0] : vector<256x128xf32> to vector<128xf32>
    %68 = vector.shape_cast %67 : vector<128xf32> to vector<1x128xf32>
    %cst_32 = arith.constant 1.000000e-16 : f32
    %69 = vector.broadcast %cst_32 : f32 to vector<1x128xf32>
    %70 = arith.cmpf oge, %68, %69 : vector<1x128xf32>
    %cst_33 = arith.constant 1.000000e-30 : f32
    %71 = vector.broadcast %cst_33 : f32 to vector<1x128xf32>
    %72 = arith.maximumf %68, %71 : vector<1x128xf32>
    %73 = math.rsqrt %72 : vector<1x128xf32>
    %cst_34 = arith.constant 1.000000e+08 : f32
    %74 = vector.broadcast %cst_34 : f32 to vector<1x128xf32>
    %75 = arith.select %70, %73, %74 : vector<1x128xi1>, vector<1x128xf32>
    %76 = vector.broadcast %75 : vector<1x128xf32> to vector<256x128xf32>
    %77 = arith.mulf %65, %76 : vector<256x128xf32>
    %c0_35 = arith.constant 0 : index
    %c0_36 = arith.constant 0 : index
    %78 = vector.load %arg12[%c0_35, %c0_36] : memref<256x128xf32, #tpu.memory_space<vmem>>, vector<256x128xf32>
    tpu.vector_store %arg12[%c0_35, %c0_36], %77 {strides = array<i32>} : memref<256x128xf32, #tpu.memory_space<vmem>>, vector<256x128xf32>,
    %79 = arith.mulf %77, %77 : vector<256x128xf32>
    %cst_37 = arith.constant dense<0.000000e+00> : vector<128xf32>
    %80 = vector.multi_reduction <add>, %79, %cst_37 [0] : vector<256x128xf32> to vector<128xf32>
    %81 = vector.shape_cast %80 : vector<128xf32> to vector<1x128xf32>
    %82 = math.sqrt %81 : vector<1x128xf32>
    %c0_38 = arith.constant 0 : index
    %c0_39 = arith.constant 0 : index
    %83 = vector.load %arg16[%c0_38, %c0_39] : memref<1x128xf32, #tpu.memory_space<vmem>>, vector<1x128xf32>
    tpu.vector_store %arg16[%c0_38, %c0_39], %82 {strides = array<i32>} : memref<1x128xf32, #tpu.memory_space<vmem>>, vector<1x128xf32>,
    %c0_40 = arith.constant 0 : index
    %c0_41 = arith.constant 0 : index
    %84 = vector.load %arg6[%c0_40, %c0_41] : memref<128x64xf32, #tpu.memory_space<vmem>>, vector<128x64xf32>
    %c0_42 = arith.constant 0 : index
    %c0_43 = arith.constant 0 : index
    %85 = vector.load %arg7[%c0_42, %c0_43] : memref<1x64xf32, #tpu.memory_space<vmem>>, vector<1x64xf32>
    %cst_44 = arith.constant dense<0.000000e+00> : vector<8x64xf32>
    %86 = tpu.matmul %49, %84, %cst_44 {dimension_numbers = #tpu.dot_dimension_numbers<[1], [0], [0], [1], [0, 0, 1, 1], [], []>} : vector<8x128xf32>, vector<128x64xf32>, vector<8x64xf32> -> vector<8x64xf32>
    %87 = vector.broadcast %85 : vector<1x64xf32> to vector<8x64xf32>
    %88 = arith.addf %86, %87 : vector<8x64xf32>
    %cst_45 = arith.constant 0.000000e+00 : f32
    %89 = vector.broadcast %cst_45 : f32 to vector<8x64xf32>
    %90 = arith.maximumf %88, %89 : vector<8x64xf32>
    %cst_46 = arith.constant 6.250000e-06 : f32
    %91 = vector.broadcast %cst_46 : f32 to vector<8x64xf32>
    %92 = arith.mulf %90, %91 : vector<8x64xf32>
    %93 = tpu.concatenate %90, %49, %1 in 1 : vector<8x64xf32>, vector<8x128xf32>, vector<8x16xf32> -> vector<8x208xf32>
    %cst_47 = arith.constant dense<0.000000e+00> : vector<208x64xf32>
    %94 = tpu.matmul %93, %92, %cst_47 {dimension_numbers = #tpu.dot_dimension_numbers<[0], [0], [1], [1], [0, 1, 1, 1], [], []>} : vector<8x208xf32>, vector<8x64xf32>, vector<208x64xf32> -> vector<208x64xf32>
    %95 = vector.extract_strided_slice %94 {offsets = [0, 0], sizes = [64, 64], strides = [1, 1]} : vector<208x64xf32> to vector<64x64xf32>
    %96 = vector.extract_strided_slice %94 {offsets = [64, 0], sizes = [128, 64], strides = [1, 1]} : vector<208x64xf32> to vector<128x64xf32>
    %97 = vector.extract_strided_slice %94 {offsets = [192, 0], sizes = [16, 64], strides = [1, 1]} : vector<208x64xf32> to vector<16x64xf32>
    %98 = tpu.iota {dimensions = array<i32: 0>} : vector<64x1xi32>
    %99 = tpu.iota {dimensions = array<i32: 1>} : vector<1x64xi32>
    %100 = vector.broadcast %98 : vector<64x1xi32> to vector<64x64xi32>
    %101 = vector.broadcast %99 : vector<1x64xi32> to vector<64x64xi32>
    %102 = arith.cmpi sle, %100, %101 : vector<64x64xi32>
    %cst_48 = arith.constant 0.000000e+00 : f32
    %103 = vector.broadcast %cst_48 : f32 to vector<64x64xf32>
    %104 = arith.select %102, %95, %103 : vector<64x64xi1>, vector<64x64xf32>
    %cst_49 = arith.constant dense<0.000000e+00> : vector<128x64xf32>
    %105 = tpu.matmul %84, %104, %cst_49 {dimension_numbers = #tpu.dot_dimension_numbers<[1], [0], [0], [1], [0, 0, 1, 1], [], []>} : vector<128x64xf32>, vector<64x64xf32>, vector<128x64xf32> -> vector<128x64xf32>
    %106 = arith.subf %96, %105 : vector<128x64xf32>
    %107 = arith.addf %84, %106 : vector<128x64xf32>
    %108 = arith.mulf %107, %107 : vector<128x64xf32>
    %cst_50 = arith.constant dense<0.000000e+00> : vector<64xf32>
    %109 = vector.multi_reduction <add>, %108, %cst_50 [0] : vector<128x64xf32> to vector<64xf32>
    %110 = vector.shape_cast %109 : vector<64xf32> to vector<1x64xf32>
    %cst_51 = arith.constant 1.000000e-16 : f32
    %111 = vector.broadcast %cst_51 : f32 to vector<1x64xf32>
    %112 = arith.cmpf oge, %110, %111 : vector<1x64xf32>
    %cst_52 = arith.constant 1.000000e-30 : f32
    %113 = vector.broadcast %cst_52 : f32 to vector<1x64xf32>
    %114 = arith.maximumf %110, %113 : vector<1x64xf32>
    %115 = math.rsqrt %114 : vector<1x64xf32>
    %cst_53 = arith.constant 1.000000e+08 : f32
    %116 = vector.broadcast %cst_53 : f32 to vector<1x64xf32>
    %117 = arith.select %112, %115, %116 : vector<1x64xi1>, vector<1x64xf32>
    %118 = vector.broadcast %117 : vector<1x64xf32> to vector<128x64xf32>
    %119 = arith.mulf %107, %118 : vector<128x64xf32>
    %c0_54 = arith.constant 0 : index
    %c0_55 = arith.constant 0 : index
    %120 = vector.load %arg13[%c0_54, %c0_55] : memref<128x64xf32, #tpu.memory_space<vmem>>, vector<128x64xf32>
    tpu.vector_store %arg13[%c0_54, %c0_55], %119 {strides = array<i32>} : memref<128x64xf32, #tpu.memory_space<vmem>>, vector<128x64xf32>,
    %121 = arith.mulf %119, %119 : vector<128x64xf32>
    %cst_56 = arith.constant dense<0.000000e+00> : vector<64xf32>
    %122 = vector.multi_reduction <add>, %121, %cst_56 [0] : vector<128x64xf32> to vector<64xf32>
    %123 = vector.shape_cast %122 : vector<64xf32> to vector<1x64xf32>
    %124 = math.sqrt %123 : vector<1x64xf32>
    %c0_57 = arith.constant 0 : index
    %c0_58 = arith.constant 0 : index
    %125 = vector.load %arg17[%c0_57, %c0_58] : memref<1x64xf32, #tpu.memory_space<vmem>>, vector<1x64xf32>
    tpu.vector_store %arg17[%c0_57, %c0_58], %124 {strides = array<i32>} : memref<1x64xf32, #tpu.memory_space<vmem>>, vector<1x64xf32>,
    %c0_59 = arith.constant 0 : index
    %c0_60 = arith.constant 0 : index
    %126 = vector.load %arg8[%c0_59, %c0_60] : memref<64x16xf32, #tpu.memory_space<vmem>>, vector<64x16xf32>
    %cst_61 = arith.constant dense<0.000000e+00> : vector<8x16xf32>
    %127 = tpu.matmul %90, %126, %cst_61 {dimension_numbers = #tpu.dot_dimension_numbers<[1], [0], [0], [1], [0, 0, 1, 1], [], []>} : vector<8x64xf32>, vector<64x16xf32>, vector<8x16xf32> -> vector<8x16xf32>
    %c0_62 = arith.constant 0 : index
    %c0_63 = arith.constant 0 : index
    %128 = vector.load %arg9[%c0_62, %c0_63] : memref<1x16xf32, #tpu.memory_space<vmem>>, vector<1x16xf32>
    %129 = vector.broadcast %128 : vector<1x16xf32> to vector<8x16xf32>
    %130 = arith.addf %127, %129 : vector<8x16xf32>
    %cst_64 = arith.constant 2.000000e+04 : f32
    %131 = vector.broadcast %cst_64 : f32 to vector<16x64xf32>
    %132 = arith.mulf %97, %131 : vector<16x64xf32>
    %133 = vector.shape_cast %132 : vector<16x64xf32> to vector<1x16x64xf32>
    %cst_65 = arith.constant dense<0x7F800000> : vector<1xf32>
    %134 = vector.multi_reduction <minimumf>, %133, %cst_65 [1, 2] : vector<1x16x64xf32> to vector<1xf32>
    %135 = vector.shape_cast %134 : vector<1xf32> to vector<1x1x1xf32>
    %136 = vector.extract %135[0, 0, 0] : f32 from vector<1x1x1xf32>
    %137 = vector.shape_cast %132 : vector<16x64xf32> to vector<1x16x64xf32>
    %cst_66 = arith.constant dense<0xFF800000> : vector<1xf32>
    %138 = vector.multi_reduction <maximumf>, %137, %cst_66 [1, 2] : vector<1x16x64xf32> to vector<1xf32>
    %139 = vector.shape_cast %138 : vector<1xf32> to vector<1x1x1xf32>
    %140 = vector.extract %139[0, 0, 0] : f32 from vector<1x1x1xf32>
    %141 = arith.subf %140, %136 : f32
    %cst_67 = arith.constant 9.99999993E-9 : f32
    %142 = arith.cmpf ogt, %141, %cst_67 : f32
    %143 = vector.broadcast %136 : f32 to vector<16x64xf32>
    %144 = arith.subf %132, %143 : vector<16x64xf32>
    %cst_68 = arith.constant 9.99999993E-9 : f32
    %145 = arith.maximumf %141, %cst_68 : f32
    %146 = vector.broadcast %145 : f32 to vector<16x64xf32>
    %147 = arith.divf %144, %146 : vector<16x64xf32>
    %148 = arith.select %142, %147, %132 : vector<16x64xf32>
    %c0_69 = arith.constant 0 : index
    %c0_70 = arith.constant 0 : index
    %149 = vector.load %arg14[%c0_69, %c0_70] : memref<16x64xf32, #tpu.memory_space<vmem>>, vector<16x64xf32>
    tpu.vector_store %arg14[%c0_69, %c0_70], %148 {strides = array<i32>} : memref<16x64xf32, #tpu.memory_space<vmem>>, vector<16x64xf32>,
    %cst_71 = arith.constant dense<0xFF800000> : vector<8xf32>
    %150 = vector.multi_reduction <maximumf>, %130, %cst_71 [1] : vector<8x16xf32> to vector<8xf32>
    %151 = vector.shape_cast %150 : vector<8xf32> to vector<8x1xf32>
    %152 = vector.broadcast %151 : vector<8x1xf32> to vector<8x16xf32>
    %153 = arith.subf %130, %152 : vector<8x16xf32>
    %154 = math.exp %153 : vector<8x16xf32>
    %cst_72 = arith.constant dense<0.000000e+00> : vector<8xf32>
    %155 = vector.multi_reduction <add>, %154, %cst_72 [1] : vector<8x16xf32> to vector<8xf32>
    %156 = vector.shape_cast %155 : vector<8xf32> to vector<8x1xf32>
    %157 = vector.broadcast %156 : vector<8x1xf32> to vector<8x16xf32>
    %158 = arith.divf %154, %157 : vector<8x16xf32>
    %c0_73 = arith.constant 0 : index
    %c0_74 = arith.constant 0 : index
    %159 = vector.load %arg10[%c0_73, %c0_74] : memref<8x16xf32, #tpu.memory_space<vmem>>, vector<8x16xf32>
    tpu.vector_store %arg10[%c0_73, %c0_74], %158 {strides = array<i32>} : memref<8x16xf32, #tpu.memory_space<vmem>>, vector<8x16xf32>,
    return
  }
}

</mosaic_0001>

<llo_original>
// kernel: nn_forward.1
$region0: #{nn_forward.1}
  #allocation0 [shape = 'u32[]', space=smem, size = 0x4, offset = 0x4, fixed_abs, tag = 'smem constant byte address 0x4 - core index']
  #allocation1 [shape = 'u32[144,128]{1,0:T(1,128)}', space=vmem, size = 0x12000, scoped, tag = 'internal scratch']
  %s0 = inlined_call_operand.vmem [shape: f32[8,32], index: 0, kind: input, shape index: {}]
  %s1 = inlined_call_operand.vmem [shape: f32[8,16], index: 1, kind: input, shape index: {}]
  %s2 = inlined_call_operand.hbm [shape: f32[32,256], index: 2, kind: input, shape index: {}]
  %s3 = inlined_call_operand.vmem [shape: f32[1,256], index: 3, kind: input, shape index: {}]
  %s4 = inlined_call_operand.vmem [shape: f32[256,128], index: 4, kind: input, shape index: {}]
  %s5 = inlined_call_operand.vmem [shape: f32[1,128], index: 5, kind: input, shape index: {}]
  %s6 = inlined_call_operand.vmem [shape: f32[128,64], index: 6, kind: input, shape index: {}]
  %s7 = inlined_call_operand.vmem [shape: f32[1,64], index: 7, kind: input, shape index: {}]
  %s8 = inlined_call_operand.vmem [shape: f32[64,16], index: 8, kind: input, shape index: {}]
  %s9 = inlined_call_operand.vmem [shape: f32[1,16], index: 9, kind: input, shape index: {}]
  %s10 = inlined_call_operand.hbm [shape: f32[8,16], index: 10, kind: output, shape index: {0}]
  %s11 = inlined_call_operand.vmem [shape: f32[32,256], index: 11, kind: output, shape index: {1}]
  %s12 = inlined_call_operand.vmem [shape: f32[256,128], index: 12, kind: output, shape index: {2}]
  %s13 = inlined_call_operand.vmem [shape: f32[128,64], index: 13, kind: output, shape index: {3}]
  %s14 = inlined_call_operand.vmem [shape: f32[16,64], index: 14, kind: output, shape index: {4}]
  %s15 = inlined_call_operand.vmem [shape: f32[1,256], index: 15, kind: output, shape index: {5}]
  %s16 = inlined_call_operand.vmem [shape: f32[1,128], index: 16, kind: output, shape index: {6}]
  %s17 = inlined_call_operand.vmem [shape: f32[1,64], index: 17, kind: output, shape index: {7}]
  %18 = xla_tuple %s10, %s11, %s12, %s13, %s14, %s15, %s16, %s17
  %s19 = sld [smem:[#allocation0]]
  $region110: #{nn_forward.1} parent=0
    _
  %s21 = ssub.s32 1, %s19
  %s22 = scalar_select 0, %s21, %s19
  $region1: #{nn_forward.1} parent=0
    #allocation2 [shape = 'u8[32768]{0}', space=vmem, size = 0x8000, scoped, tag = 'input window, operand 2, single buffered']
    #allocation3 [shape = 's32[1]{0}', space=sflag, size = 0x4, scoped, tag = 'scoped memory for nn_forward.1']
    #allocation4 [shape = 's32[1]{0}', space=sflag, size = 0x4, scoped, tag = 'scoped memory for nn_forward.1']
    #allocation5 [shape = 'u8[4096]{0}', space=vmem, size = 0x1000, scoped, tag = 'output window, operand 0, single buffered']
    %23 = vsyncpa [#allocation3], 0
    %24 = vsyncpa [#allocation4], 0
    // Predicated region
    $region2: #{nn_forward.1} parent=1 // pred_check
      _
    $region3: #{nn_forward.1} parent=1 // pred_check_branch
      %26 = sbr.rel (0) target = $region5
    $region4: #{nn_forward.1} parent=1 // pred_region
      _
    $region5: #{nn_forward.1} parent=1 // pred_fallthru
      _
    // Predicated region
    $region6: #{nn_forward.1} parent=1 // pred_check
      _
    $region7: #{nn_forward.1} parent=1 // pred_check_branch
      %28 = sbr.rel (0) target = $region9
    $region8: #{nn_forward.1} parent=1 // pred_region
      _
    $region9: #{nn_forward.1} parent=1 // pred_fallthru
      _
    // Predicated region
    $region10: #{nn_forward.1} parent=1 // pred_check
      _
    $region11: #{nn_forward.1} parent=1 // pred_check_branch
      %30 = sbr.rel (0) target = $region13
    $region12: #{nn_forward.1} parent=1 // pred_region
      %s32 = ssub.s32 1024, 1024
      %33 = vsyncadd [#allocation3], %s32
      %s34 = sshll.u32 [#allocation2], 4
      %s35 = int_to_ptr.vmem [resolvable:$true] %s34
      %40 = dma.hbm_to_vmem [thread:$0]  %s2, 1024, %s35, [#allocation3], 256, 256, 16
    $region13: #{nn_forward.1} parent=1 // pred_fallthru
      _
    // Predicated region
    $region14: #{nn_forward.1} parent=1 // pred_check
      _
    $region15: #{nn_forward.1} parent=1 // pred_check_branch
      %42 = sbr.rel (0) target = $region17
    $region16: #{nn_forward.1} parent=1 // pred_region
      _
    $region17: #{nn_forward.1} parent=1 // pred_fallthru
      _
    // Predicated region
    $region18: #{nn_forward.1} parent=1 // pred_check
      _
    $region19: #{nn_forward.1} parent=1 // pred_check_branch
      %44 = sbr.rel (0) target = $region21
    $region20: #{nn_forward.1} parent=1 // pred_region
      _
    $region21: #{nn_forward.1} parent=1 // pred_fallthru
      _
    // Predicated region
    $region22: #{nn_forward.1} parent=1 // pred_check
      _
    $region23: #{nn_forward.1} parent=1 // pred_check_branch
      %46 = sbr.rel (0) target = $region25
    $region24: #{nn_forward.1} parent=1 // pred_region
      _
    $region25: #{nn_forward.1} parent=1 // pred_fallthru
      _
    // Predicated region
    $region26: #{nn_forward.1} parent=1 // pred_check
      _
    $region27: #{nn_forward.1} parent=1 // pred_check_branch
      %48 = sbr.rel (0) target = $region29
    $region28: #{nn_forward.1} parent=1 // pred_region
      _
    $region29: #{nn_forward.1} parent=1 // pred_fallthru
      _
    // Predicated region
    $region30: #{nn_forward.1} parent=1 // pred_check
      _
    $region31: #{nn_forward.1} parent=1 // pred_check_branch
      %50 = sbr.rel (0) target = $region33
    $region32: #{nn_forward.1} parent=1 // pred_region
      _
    $region33: #{nn_forward.1} parent=1 // pred_fallthru
      _
    // Predicated region
    $region34: #{nn_forward.1} parent=1 // pred_check
      _
    $region35: #{nn_forward.1} parent=1 // pred_check_branch
      %52 = sbr.rel (0) target = $region37
    $region36: #{nn_forward.1} parent=1 // pred_region
      _
    $region37: #{nn_forward.1} parent=1 // pred_fallthru
      _
    // Predicated region
    $region38: #{nn_forward.1} parent=1 // pred_check
      _
    $region39: #{nn_forward.1} parent=1 // pred_check_branch
      %54 = sbr.rel (0) target = $region41
    $region40: #{nn_forward.1} parent=1 // pred_region
      _
    $region41: #{nn_forward.1} parent=1 // pred_fallthru
      _
    // Predicated region
    $region42: #{nn_forward.1} parent=1 // pred_check
      _
    $region43: #{nn_forward.1} parent=1 // pred_check_branch
      %56 = sbr.rel (0) target = $region45
    $region44: #{nn_forward.1} parent=1 // pred_region
      %57 = dma.done [#allocation3], 1024
    $region45: #{nn_forward.1} parent=1 // pred_fallthru
      _
    %v58 = vld [vmem:[%s0] sm:$0xff]
    %v59 = vld [vmem:[%s1] sm:$0xff]
    %v60 = vld [vmem:[#allocation2] sm:$0xff]
    %v61 = vld [vmem:[#allocation2 + $0x8] sm:$0xff]
    %v62 = vld [vmem:[#allocation2 + $0x10] sm:$0xff]
    %v63 = vld [vmem:[#allocation2 + $0x18] sm:$0xff]
    %v64 = vld [vmem:[#allocation2 + $0x20] sm:$0xff]
    %v65 = vld [vmem:[#allocation2 + $0x28] sm:$0xff]
    %v66 = vld [vmem:[#allocation2 + $0x30] sm:$0xff]
    %v67 = vld [vmem:[#allocation2 + $0x38] sm:$0xff]
    %v68 = vld [vmem:[%s3] sm:$0x3]
    %v70 = vlaneseq
    %v71 = vshrl.u32 %v70, 7
    %v72 = vsub.s32 0, %v71
    %v73 = vrot.slane %v68, %v72
    %v74 = vlaneseq
    %v75 = vshrl.u32 %v74, 7
    %v76 = vsub.s32 1, %v75
    %v77 = vrot.slane %v68, %v76
    %vm80 = vcmask 261120
    %v82 = vsel %vm80, %v58, 0
    %84 = vmatprep.subr.mxu0 %v61
    %85 = vmatpush1.msra.mxu0 %v60
    %86 = vmatprep.subr.mxu0 %v63
    %87 = vmatpush1.msra.mxu0 %v62
    %88 = vmatprep.subr.mxu0 %v65
    %89 = vmatpush1.msra.mxu0 %v64
    %90 = vmatprep.subr.mxu0 %v67
    %91 = vmatpush1.msra.mxu0 %v66
    %92 = vmatprep.subr.mxu0 0.0
    %93 = vmatpush1.msra.mxu0 0.0
    %94 = vmatprep.subr.mxu0 0.0
    %95 = vmatpush1.msra.mxu0 0.0
    %96 = vmatprep.subr.mxu0 0.0
    %97 = vmatpush1.msra.mxu0 0.0
    %98 = vmatprep.subr.mxu0 0.0
    %99 = vmatpush1.msra.mxu0 0.0
    %100 = vmatprep.subr.mxu0 0.0
    %101 = vmatpush1.msra.mxu0 0.0
    %102 = vmatprep.subr.mxu0 0.0
    %103 = vmatpush1.msra.mxu0 0.0
    %104 = vmatprep.subr.mxu0 0.0
    %105 = vmatpush1.msra.mxu0 0.0
    %106 = vmatprep.subr.mxu0 0.0
    %107 = vmatpush1.msra.mxu0 0.0
    %108 = vmatprep.subr.mxu0 0.0
    %109 = vmatpush1.msra.mxu0 0.0
    %110 = vmatprep.subr.mxu0 0.0
    %111 = vmatpush1.msra.mxu0 0.0
    %112 = vmatprep.subr.mxu0 0.0
    %113 = vmatpush1.msra.mxu0 0.0
    %114 = vmatprep.subr.mxu0 0.0
    %115 = vmatpush1.msra.mxu0 0.0
    %116 = vmatprep.subr.mxu0 0.0
    %117 = vmatpush1.msra.mxu0 0.0
    %118 = vmatprep.subr.mxu0 0.0
    %119 = vmatpush1.msra.mxu0 0.0
    %120 = vmatprep.subr.mxu0 0.0
    %121 = vmatpush1.msra.mxu0 0.0
    %122 = vmatprep.subr.mxu0 0.0
    %123 = vmatpush1.msra.mxu0 0.0
    %124 = vmatprep.subr.mxu0 0.0
    %125 = vmatpush1.msra.mxu0 0.0
    %126 = vmatprep.subr.mxu0 0.0
    %127 = vmatpush1.msra.mxu0 0.0
    %128 = vmatprep.subr.mxu0 0.0
    %129 = vmatpush1.msra.mxu0 0.0
    %130 = vmatprep.subr.mxu0 0.0
    %131 = vmatpush1.msra.mxu0 0.0
    %132 = vmatprep.subr.mxu0 0.0
    %133 = vmatpush1.msra.mxu0 0.0
    %134 = vmatprep.subr.mxu0 0.0
    %135 = vmatpush1.msra.mxu0 0.0
    %136 = vmatprep.subr.mxu0 0.0
    %137 = vmatpush1.msra.mxu0 0.0
    %138 = vmatprep.subr.mxu0 0.0
    %139 = vmatpush1.msra.mxu0 0.0
    %140 = vmatprep.subr.mxu0 0.0
    %141 = vmatpush1.msra.mxu0 0.0
    %142 = vmatprep.subr.mxu0 0.0
    %143 = vmatpush1.msra.mxu0 0.0
    %144 = vmatprep.subr.mxu0 0.0
    %145 = vmatpush1.msra.mxu0 0.0
    %146 = vmatprep.subr.mxu0 0.0
    %147 = vmatpush1.msra.mxu0 0.0
    %148 = vmatprep.mubr.f32.mxu0 0.0
    %149 = vmatmul.mubr.f32.gmra.mrb[0].mxu0 %v82
    %v150 = vpop.f32.mrb[0].mxu0
    %v151 = vadd.f32 %v73, %v150
    %v152 = vpop.f32.mrb[0].mxu0
    %v153 = vadd.f32 %v77, %v152
    %154 = vdwg.mxu0
    %v155 = vmax.f32 %v151, 0.0
    %v156 = vmax.f32 %v153, 0.0
    %v157 = vmul.f32 %v155, 6.25e-06
    %v158 = vmul.f32 %v156, 6.25e-06
    %159 = vxpose.xlu0.b32.start [1/16] %v155, 128
    %160 = vxpose.xlu0.b32.cont [2/16] 0.0, 128
    %161 = vxpose.xlu0.b32.cont [3/16] 0.0, 128
    %162 = vxpose.xlu0.b32.cont [4/16] 0.0, 128
    %163 = vxpose.xlu0.b32.cont [5/16] 0.0, 128
    %164 = vxpose.xlu0.b32.cont [6/16] 0.0, 128
    %165 = vxpose.xlu0.b32.cont [7/16] 0.0, 128
    %166 = vxpose.xlu0.b32.cont [8/16] 0.0, 128
    %167 = vxpose.xlu0.b32.cont [9/16] 0.0, 128
    %168 = vxpose.xlu0.b32.cont [10/16] 0.0, 128
    %169 = vxpose.xlu0.b32.cont [11/16] 0.0, 128
    %170 = vxpose.xlu0.b32.cont [12/16] 0.0, 128
    %171 = vxpose.xlu0.b32.cont [13/16] 0.0, 128
    %172 = vxpose.xlu0.b32.cont [14/16] 0.0, 128
    %173 = vxpose.xlu0.b32.cont [15/16] 0.0, 128
    %174 = vxpose.xlu0.b32.end [16/16] 0.0, 128
    %v175 = vpop.trf.xlu0
    %v176 = vpop.trf.xlu0
    %v177 = vpop.trf.xlu0
    %v178 = vpop.trf.xlu0
    %v179 = vpop.trf.xlu0
    %v180 = vpop.trf.xlu0
    %v181 = vpop.trf.xlu0
    %v182 = vpop.trf.xlu0
    %v183 = vpop.trf.xlu0
    %v184 = vpop.trf.xlu0
    %v185 = vpop.trf.xlu0
    %v186 = vpop.trf.xlu0
    %v187 = vpop.trf.xlu0
    %v188 = vpop.trf.xlu0
    %v189 = vpop.trf.xlu0
    %v190 = vpop.trf.xlu0
    %191 = vxpose.xlu0.b32.start [1/16] %v156, 128
    %192 = vxpose.xlu0.b32.cont [2/16] 0.0, 128
    %193 = vxpose.xlu0.b32.cont [3/16] 0.0, 128
    %194 = vxpose.xlu0.b32.cont [4/16] 0.0, 128
    %195 = vxpose.xlu0.b32.cont [5/16] 0.0, 128
    %196 = vxpose.xlu0.b32.cont [6/16] 0.0, 128
    %197 = vxpose.xlu0.b32.cont [7/16] 0.0, 128
    %198 = vxpose.xlu0.b32.cont [8/16] 0.0, 128
    %199 = vxpose.xlu0.b32.cont [9/16] 0.0, 128
    %200 = vxpose.xlu0.b32.cont [10/16] 0.0, 128
    %201 = vxpose.xlu0.b32.cont [11/16] 0.0, 128
    %202 = vxpose.xlu0.b32.cont [12/16] 0.0, 128
    %203 = vxpose.xlu0.b32.cont [13/16] 0.0, 128
    %204 = vxpose.xlu0.b32.cont [14/16] 0.0, 128
    %205 = vxpose.xlu0.b32.cont [15/16] 0.0, 128
    %206 = vxpose.xlu0.b32.end [16/16] 0.0, 128
    %v207 = vpop.trf.xlu0
    %v208 = vpop.trf.xlu0
    %v209 = vpop.trf.xlu0
    %v210 = vpop.trf.xlu0
    %v211 = vpop.trf.xlu0
    %v212 = vpop.trf.xlu0
    %v213 = vpop.trf.xlu0
    %v214 = vpop.trf.xlu0
    %v215 = vpop.trf.xlu0
    %v216 = vpop.trf.xlu0
    %v217 = vpop.trf.xlu0
    %v218 = vpop.trf.xlu0
    %v219 = vpop.trf.xlu0
    %v220 = vpop.trf.xlu0
    %v221 = vpop.trf.xlu0
    %v222 = vpop.trf.xlu0
    %223 = vxpose.xlu0.b32.start [1/16] %v58, 128
    %224 = vxpose.xlu0.b32.cont [2/16] 0.0, 128
    %225 = vxpose.xlu0.b32.cont [3/16] 0.0, 128
    %226 = vxpose.xlu0.b32.cont [4/16] 0.0, 128
    %227 = vxpose.xlu0.b32.cont [5/16] 0.0, 128
    %228 = vxpose.xlu0.b32.cont [6/16] 0.0, 128
    %229 = vxpose.xlu0.b32.cont [7/16] 0.0, 128
    %230 = vxpose.xlu0.b32.cont [8/16] 0.0, 128
    %231 = vxpose.xlu0.b32.cont [9/16] 0.0, 128
    %232 = vxpose.xlu0.b32.cont [10/16] 0.0, 128
    %233 = vxpose.xlu0.b32.cont [11/16] 0.0, 128
    %234 = vxpose.xlu0.b32.cont [12/16] 0.0, 128
    %235 = vxpose.xlu0.b32.cont [13/16] 0.0, 128
    %236 = vxpose.xlu0.b32.cont [14/16] 0.0, 128
    %237 = vxpose.xlu0.b32.cont [15/16] 0.0, 128
    %238 = vxpose.xlu0.b32.end [16/16] 0.0, 128
    %v239 = vpop.trf.xlu0
    %v240 = vpop.trf.xlu0
    %v241 = vpop.trf.xlu0
    %v242 = vpop.trf.xlu0
    %v243 = vpop.trf.xlu0
    %v244 = vpop.trf.xlu0
    %v245 = vpop.trf.xlu0
    %v246 = vpop.trf.xlu0
    %v247 = vpop.trf.xlu0
    %v248 = vpop.trf.xlu0
    %v249 = vpop.trf.xlu0
    %v250 = vpop.trf.xlu0
    %v251 = vpop.trf.xlu0
    %v252 = vpop.trf.xlu0
    %v253 = vpop.trf.xlu0
    %v254 = vpop.trf.xlu0
    %vm255 = vcmask 64512
    %v257 = vsel %vm255, %v175, 0
    %v260 = vsel %vm255, %v176, 0
    %v263 = vsel %vm255, %v177, 0
    %v266 = vsel %vm255, %v178, 0
    %v269 = vsel %vm255, %v179, 0
    %v272 = vsel %vm255, %v180, 0
    %v275 = vsel %vm255, %v181, 0
    %v278 = vsel %vm255, %v182, 0
    %v281 = vsel %vm255, %v183, 0
    %v284 = vsel %vm255, %v184, 0
    %v287 = vsel %vm255, %v185, 0
    %v290 = vsel %vm255, %v186, 0
    %v293 = vsel %vm255, %v187, 0
    %v296 = vsel %vm255, %v188, 0
    %v299 = vsel %vm255, %v189, 0
    %v302 = vsel %vm255, %v190, 0
    %v305 = vsel %vm255, %v207, 0
    %v308 = vsel %vm255, %v208, 0
    %v311 = vsel %vm255, %v209, 0
    %v314 = vsel %vm255, %v210, 0
    %v317 = vsel %vm255, %v211, 0
    %v320 = vsel %vm255, %v212, 0
    %v323 = vsel %vm255, %v213, 0
    %v326 = vsel %vm255, %v214, 0
    %v329 = vsel %vm255, %v215, 0
    %v332 = vsel %vm255, %v216, 0
    %v335 = vsel %vm255, %v217, 0
    %v338 = vsel %vm255, %v218, 0
    %v341 = vsel %vm255, %v219, 0
    %v344 = vsel %vm255, %v220, 0
    %v347 = vsel %vm255, %v221, 0
    %v350 = vsel %vm255, %v222, 0
    %v353 = vsel %vm255, %v239, 0
    %v356 = vsel %vm255, %v240, 0
    %v359 = vsel %vm255, %v241, 0
    %v362 = vsel %vm255, %v242, 0
    %364 = vmatprep.subr.mxu0 %v158
    %365 = vmatpush1.msra.mxu0 %v157
    %366 = vmatprep.subr.mxu0 0.0
    %367 = vmatpush1.msra.mxu0 0.0
    %368 = vmatprep.subr.mxu0 0.0
    %369 = vmatpush1.msra.mxu0 0.0
    %370 = vmatprep.subr.mxu0 0.0
    %371 = vmatpush1.msra.mxu0 0.0
    %372 = vmatprep.subr.mxu0 0.0
    %373 = vmatpush1.msra.mxu0 0.0
    %374 = vmatprep.subr.mxu0 0.0
    %375 = vmatpush1.msra.mxu0 0.0
    %376 = vmatprep.subr.mxu0 0.0
    %377 = vmatpush1.msra.mxu0 0.0
    %378 = vmatprep.subr.mxu0 0.0
    %379 = vmatpush1.msra.mxu0 0.0
    %380 = vmatprep.subr.mxu0 0.0
    %381 = vmatpush1.msra.mxu0 0.0
    %382 = vmatprep.subr.mxu0 0.0
    %383 = vmatpush1.msra.mxu0 0.0
    %384 = vmatprep.subr.mxu0 0.0
    %385 = vmatpush1.msra.mxu0 0.0
    %386 = vmatprep.subr.mxu0 0.0
    %387 = vmatpush1.msra.mxu0 0.0
    %388 = vmatprep.subr.mxu0 0.0
    %389 = vmatpush1.msra.mxu0 0.0
    %390 = vmatprep.subr.mxu0 0.0
    %391 = vmatpush1.msra.mxu0 0.0
    %392 = vmatprep.subr.mxu0 0.0
    %393 = vmatpush1.msra.mxu0 0.0
    %394 = vmatprep.subr.mxu0 0.0
    %395 = vmatpush1.msra.mxu0 0.0
    %396 = vmatprep.subr.mxu0 0.0
    %397 = vmatpush1.msra.mxu0 0.0
    %398 = vmatprep.subr.mxu0 0.0
    %399 = vmatpush1.msra.mxu0 0.0
    %400 = vmatprep.subr.mxu0 0.0
    %401 = vmatpush1.msra.mxu0 0.0
    %402 = vmatprep.subr.mxu0 0.0
    %403 = vmatpush1.msra.mxu0 0.0
    %404 = vmatprep.subr.mxu0 0.0
    %405 = vmatpush1.msra.mxu0 0.0
    %406 = vmatprep.subr.mxu0 0.0
    %407 = vmatpush1.msra.mxu0 0.0
    %408 = vmatprep.subr.mxu0 0.0
    %409 = vmatpush1.msra.mxu0 0.0
    %410 = vmatprep.subr.mxu0 0.0
    %411 = vmatpush1.msra.mxu0 0.0
    %412 = vmatprep.subr.mxu0 0.0
    %413 = vmatpush1.msra.mxu0 0.0
    %414 = vmatprep.subr.mxu0 0.0
    %415 = vmatpush1.msra.mxu0 0.0
    %416 = vmatprep.subr.mxu0 0.0
    %417 = vmatpush1.msra.mxu0 0.0
    %418 = vmatprep.subr.mxu0 0.0
    %419 = vmatpush1.msra.mxu0 0.0
    %420 = vmatprep.subr.mxu0 0.0
    %421 = vmatpush1.msra.mxu0 0.0
    %422 = vmatprep.subr.mxu0 0.0
    %423 = vmatpush1.msra.mxu0 0.0
    %424 = vmatprep.subr.mxu0 0.0
    %425 = vmatpush1.msra.mxu0 0.0
    %426 = vmatprep.subr.mxu0 0.0
    %427 = vmatpush1.msra.mxu0 0.0
    %428 = vmatprep.mubr.f32.mxu0 0.0
    %429 = vmatmul.mubr.f32.gmra.mrb[0].mxu0 %v257
    %v430 = vpop.f32.mrb[0].mxu0
    %v431 = vadd.f32 0.0, %v430
    %v432 = vpop.f32.mrb[0].mxu0
    %v433 = vadd.f32 0.0, %v432
    %434 = vmatprep.mubr.f32.mxu0 0.0
    %435 = vmatmul.mubr.f32.gmra.mrb[0].mxu0 %v260
    %v436 = vpop.f32.mrb[0].mxu0
    %v437 = vadd.f32 0.0, %v436
    %v438 = vpop.f32.mrb[0].mxu0
    %v439 = vadd.f32 0.0, %v438
    %440 = vmatprep.mubr.f32.mxu0 0.0
    %441 = vmatmul.mubr.f32.gmra.mrb[0].mxu0 %v263
    %v442 = vpop.f32.mrb[0].mxu0
    %v443 = vadd.f32 0.0, %v442
    %v444 = vpop.f32.mrb[0].mxu0
    %v445 = vadd.f32 0.0, %v444
    %446 = vmatprep.mubr.f32.mxu0 0.0
    %447 = vmatmul.mubr.f32.gmra.mrb[0].mxu0 %v266
    %v448 = vpop.f32.mrb[0].mxu0
    %v449 = vadd.f32 0.0, %v448
    %v450 = vpop.f32.mrb[0].mxu0
    %v451 = vadd.f32 0.0, %v450
    %452 = vmatprep.mubr.f32.mxu0 0.0
    %453 = vmatmul.mubr.f32.gmra.mrb[0].mxu0 %v269
    %v454 = vpop.f32.mrb[0].mxu0
    %v455 = vadd.f32 0.0, %v454
    %v456 = vpop.f32.mrb[0].mxu0
    %v457 = vadd.f32 0.0, %v456
    %458 = vmatprep.mubr.f32.mxu0 0.0
    %459 = vmatmul.mubr.f32.gmra.mrb[0].mxu0 %v272
    %v460 = vpop.f32.mrb[0].mxu0
    %v461 = vadd.f32 0.0, %v460
    %v462 = vpop.f32.mrb[0].mxu0
    %v463 = vadd.f32 0.0, %v462
    %464 = vmatprep.mubr.f32.mxu0 0.0
    %465 = vmatmul.mubr.f32.gmra.mrb[0].mxu0 %v275
    %v466 = vpop.f32.mrb[0].mxu0
    %v467 = vadd.f32 0.0, %v466
    %v468 = vpop.f32.mrb[0].mxu0
    %v469 = vadd.f32 0.0, %v468
    %470 = vmatprep.mubr.f32.mxu0 0.0
    %471 = vmatmul.mubr.f32.gmra.mrb[0].mxu0 %v278
    %v472 = vpop.f32.mrb[0].mxu0
    %v473 = vadd.f32 0.0, %v472
    %v474 = vpop.f32.mrb[0].mxu0
    %v475 = vadd.f32 0.0, %v474
    %476 = vmatprep.mubr.f32.mxu0 0.0
    %477 = vmatmul.mubr.f32.gmra.mrb[0].mxu0 %v281
    %v478 = vpop.f32.mrb[0].mxu0
    %v479 = vadd.f32 0.0, %v478
    %v480 = vpop.f32.mrb[0].mxu0
    %v481 = vadd.f32 0.0, %v480
    %482 = vmatprep.mubr.f32.mxu0 0.0
    %483 = vmatmul.mubr.f32.gmra.mrb[0].mxu0 %v284
    %v484 = vpop.f32.mrb[0].mxu0
    %v485 = vadd.f32 0.0, %v484
    %v486 = vpop.f32.mrb[0].mxu0
    %v487 = vadd.f32 0.0, %v486
    %488 = vmatprep.mubr.f32.mxu0 0.0
    %489 = vmatmul.mubr.f32.gmra.mrb[0].mxu0 %v287
    %v490 = vpop.f32.mrb[0].mxu0
    %v491 = vadd.f32 0.0, %v490
    %v492 = vpop.f32.mrb[0].mxu0
    %v493 = vadd.f32 0.0, %v492
    %494 = vmatprep.mubr.f32.mxu0 0.0
    %495 = vmatmul.mubr.f32.gmra.mrb[0].mxu0 %v290
    %v496 = vpop.f32.mrb[0].mxu0
    %v497 = vadd.f32 0.0, %v496
    %v498 = vpop.f32.mrb[0].mxu0
    %v499 = vadd.f32 0.0, %v498
    %500 = vmatprep.mubr.f32.mxu0 0.0
    %501 = vmatmul.mubr.f32.gmra.mrb[0].mxu0 %v293
    %v502 = vpop.f32.mrb[0].mxu0
    %v503 = vadd.f32 0.0, %v502
    %v504 = vpop.f32.mrb[0].mxu0
    %v505 = vadd.f32 0.0, %v504
    %506 = vmatprep.mubr.f32.mxu0 0.0
    %507 = vmatmul.mubr.f32.gmra.mrb[0].mxu0 %v296
    %v508 = vpop.f32.mrb[0].mxu0
    %v509 = vadd.f32 0.0, %v508
    %v510 = vpop.f32.mrb[0].mxu0
    %v511 = vadd.f32 0.0, %v510
    %512 = vmatprep.mubr.f32.mxu0 0.0
    %513 = vmatmul.mubr.f32.gmra.mrb[0].mxu0 %v299
    %v514 = vpop.f32.mrb[0].mxu0
    %v515 = vadd.f32 0.0, %v514
    %v516 = vpop.f32.mrb[0].mxu0
    %v517 = vadd.f32 0.0, %v516
    %518 = vmatprep.mubr.f32.mxu0 0.0
    %519 = vmatmul.mubr.f32.gmra.mrb[0].mxu0 %v302
    %v520 = vpop.f32.mrb[0].mxu0
    %v521 = vadd.f32 0.0, %v520
    %v522 = vpop.f32.mrb[0].mxu0
    %v523 = vadd.f32 0.0, %v522
    %524 = vmatprep.mubr.f32.mxu0 0.0
    %525 = vmatmul.mubr.f32.gmra.mrb[0].mxu0 %v305
    %v526 = vpop.f32.mrb[0].mxu0
    %v527 = vadd.f32 0.0, %v526
    %v528 = vpop.f32.mrb[0].mxu0
    %v529 = vadd.f32 0.0, %v528
    %530 = vmatprep.mubr.f32.mxu0 0.0
    %531 = vmatmul.mubr.f32.gmra.mrb[0].mxu0 %v308
    %v532 = vpop.f32.mrb[0].mxu0
    %v533 = vadd.f32 0.0, %v532
    %v534 = vpop.f32.mrb[0].mxu0
    %v535 = vadd.f32 0.0, %v534
    %536 = vmatprep.mubr.f32.mxu0 0.0
    %537 = vmatmul.mubr.f32.gmra.mrb[0].mxu0 %v311
    %v538 = vpop.f32.mrb[0].mxu0
    %v539 = vadd.f32 0.0, %v538
    %v540 = vpop.f32.mrb[0].mxu0
    %v541 = vadd.f32 0.0, %v540
    %542 = vmatprep.mubr.f32.mxu0 0.0
    %543 = vmatmul.mubr.f32.gmra.mrb[0].mxu0 %v314
    %v544 = vpop.f32.mrb[0].mxu0
    %v545 = vadd.f32 0.0, %v544
    %v546 = vpop.f32.mrb[0].mxu0
    %v547 = vadd.f32 0.0, %v546
    %548 = vmatprep.mubr.f32.mxu0 0.0
    %549 = vmatmul.mubr.f32.gmra.mrb[0].mxu0 %v317
    %v550 = vpop.f32.mrb[0].mxu0
    %v551 = vadd.f32 0.0, %v550
    %v552 = vpop.f32.mrb[0].mxu0
    %v553 = vadd.f32 0.0, %v552
    %554 = vmatprep.mubr.f32.mxu0 0.0
    %555 = vmatmul.mubr.f32.gmra.mrb[0].mxu0 %v320
    %v556 = vpop.f32.mrb[0].mxu0
    %v557 = vadd.f32 0.0, %v556
    %v558 = vpop.f32.mrb[0].mxu0
    %v559 = vadd.f32 0.0, %v558
    %560 = vmatprep.mubr.f32.mxu0 0.0
    %561 = vmatmul.mubr.f32.gmra.mrb[0].mxu0 %v323
    %v562 = vpop.f32.mrb[0].mxu0
    %v563 = vadd.f32 0.0, %v562
    %v564 = vpop.f32.mrb[0].mxu0
    %v565 = vadd.f32 0.0, %v564
    %566 = vmatprep.mubr.f32.mxu0 0.0
    %567 = vmatmul.mubr.f32.gmra.mrb[0].mxu0 %v326
    %v568 = vpop.f32.mrb[0].mxu0
    %v569 = vadd.f32 0.0, %v568
    %v570 = vpop.f32.mrb[0].mxu0
    %v571 = vadd.f32 0.0, %v570
    %572 = vmatprep.mubr.f32.mxu0 0.0
    %573 = vmatmul.mubr.f32.gmra.mrb[0].mxu0 %v329
    %v574 = vpop.f32.mrb[0].mxu0
    %v575 = vadd.f32 0.0, %v574
    %v576 = vpop.f32.mrb[0].mxu0
    %v577 = vadd.f32 0.0, %v576
    %578 = vmatprep.mubr.f32.mxu0 0.0
    %579 = vmatmul.mubr.f32.gmra.mrb[0].mxu0 %v332
    %v580 = vpop.f32.mrb[0].mxu0
    %v581 = vadd.f32 0.0, %v580
    %v582 = vpop.f32.mrb[0].mxu0
    %v583 = vadd.f32 0.0, %v582
    %584 = vmatprep.mubr.f32.mxu0 0.0
    %585 = vmatmul.mubr.f32.gmra.mrb[0].mxu0 %v335
    %v586 = vpop.f32.mrb[0].mxu0
    %v587 = vadd.f32 0.0, %v586
    %v588 = vpop.f32.mrb[0].mxu0
    %v589 = vadd.f32 0.0, %v588
    %590 = vmatprep.mubr.f32.mxu0 0.0
    %591 = vmatmul.mubr.f32.gmra.mrb[0].mxu0 %v338
    %v592 = vpop.f32.mrb[0].mxu0
    %v593 = vadd.f32 0.0, %v592
    %v594 = vpop.f32.mrb[0].mxu0
    %v595 = vadd.f32 0.0, %v594
    %596 = vmatprep.mubr.f32.mxu0 0.0
    %597 = vmatmul.mubr.f32.gmra.mrb[0].mxu0 %v341
    %v598 = vpop.f32.mrb[0].mxu0
    %v599 = vadd.f32 0.0, %v598
    %v600 = vpop.f32.mrb[0].mxu0
    %v601 = vadd.f32 0.0, %v600
    %602 = vmatprep.mubr.f32.mxu0 0.0
    %603 = vmatmul.mubr.f32.gmra.mrb[0].mxu0 %v344
    %v604 = vpop.f32.mrb[0].mxu0
    %v605 = vadd.f32 0.0, %v604
    %v606 = vpop.f32.mrb[0].mxu0
    %v607 = vadd.f32 0.0, %v606
    %608 = vmatprep.mubr.f32.mxu0 0.0
    %609 = vmatmul.mubr.f32.gmra.mrb[0].mxu0 %v347
    %v610 = vpop.f32.mrb[0].mxu0
    %v611 = vadd.f32 0.0, %v610
    %v612 = vpop.f32.mrb[0].mxu0
    %v613 = vadd.f32 0.0, %v612
    %614 = vmatprep.mubr.f32.mxu0 0.0
    %615 = vmatmul.mubr.f32.gmra.mrb[0].mxu0 %v350
    %v616 = vpop.f32.mrb[0].mxu0
    %v617 = vadd.f32 0.0, %v616
    %v618 = vpop.f32.mrb[0].mxu0
    %v619 = vadd.f32 0.0, %v618
    %620 = vmatprep.mubr.f32.mxu0 0.0
    %621 = vmatmul.mubr.f32.gmra.mrb[0].mxu0 %v353
    %v622 = vpop.f32.mrb[0].mxu0
    %v623 = vadd.f32 0.0, %v622
    %v624 = vpop.f32.mrb[0].mxu0
    %v625 = vadd.f32 0.0, %v624
    %626 = vmatprep.mubr.f32.mxu0 0.0
    %627 = vmatmul.mubr.f32.gmra.mrb[0].mxu0 %v356
    %v628 = vpop.f32.mrb[0].mxu0
    %v629 = vadd.f32 0.0, %v628
    %v630 = vpop.f32.mrb[0].mxu0
    %v631 = vadd.f32 0.0, %v630
    %632 = vmatprep.mubr.f32.mxu0 0.0
    %633 = vmatmul.mubr.f32.gmra.mrb[0].mxu0 %v359
    %v634 = vpop.f32.mrb[0].mxu0
    %v635 = vadd.f32 0.0, %v634
    %v636 = vpop.f32.mrb[0].mxu0
    %v637 = vadd.f32 0.0, %v636
    %638 = vmatprep.mubr.f32.mxu0 0.0
    %639 = vmatmul.mubr.f32.gmra.mrb[0].mxu0 %v362
    %v640 = vpop.f32.mrb[0].mxu0
    %v641 = vadd.f32 0.0, %v640
    %v642 = vpop.f32.mrb[0].mxu0
    %v643 = vadd.f32 0.0, %v642
    %644 = vdwg.mxu0
    %v645 = vlaneseq
    %v646 = vshrl.u32 %v645, 7
    %v647 = vadd.s32 %v646, 8
    %v648 = vadd.s32 %v646, 16
    %v649 = vadd.s32 %v646, 24
    %v650 = vadd.s32 %v646, 32
    %v651 = vadd.s32 %v646, 40
    %v652 = vadd.s32 %v646, 48
    %v653 = vadd.s32 %v646, 56
    %v654 = vadd.s32 %v646, 64
    %v655 = vadd.s32 %v646, 72
    %v656 = vadd.s32 %v646, 80
    %v657 = vadd.s32 %v646, 88
    %v658 = vadd.s32 %v646, 96
    %v659 = vadd.s32 %v646, 104
    %v660 = vadd.s32 %v646, 112
    %v661 = vadd.s32 %v646, 120
    %v662 = vadd.s32 %v646, 128
    %v663 = vadd.s32 %v646, 136
    %v664 = vadd.s32 %v646, 144
    %v665 = vadd.s32 %v646, 152
    %v666 = vadd.s32 %v646, 160
    %v667 = vadd.s32 %v646, 168
    %v668 = vadd.s32 %v646, 176
    %v669 = vadd.s32 %v646, 184
    %v670 = vadd.s32 %v646, 192
    %v671 = vadd.s32 %v646, 200
    %v672 = vadd.s32 %v646, 208
    %v673 = vadd.s32 %v646, 216
    %v674 = vadd.s32 %v646, 224
    %v675 = vadd.s32 %v646, 232
    %v676 = vadd.s32 %v646, 240
    %v677 = vadd.s32 %v646, 248
    %v678 = vlaneseq
    %v679 = vand.u32 %v678, 127
    %v680 = vadd.s32 %v679, 128
    %vm681 = vcmp.le.s32.totalorder %v646, %v679
    %vm682 = vcmp.le.s32.totalorder %v646, %v680
    %vm683 = vcmp.le.s32.totalorder %v647, %v679
    %vm684 = vcmp.le.s32.totalorder %v647, %v680
    %vm685 = vcmp.le.s32.totalorder %v648, %v679
    %vm686 = vcmp.le.s32.totalorder %v648, %v680
    %vm687 = vcmp.le.s32.totalorder %v649, %v679
    %vm688 = vcmp.le.s32.totalorder %v649, %v680
    %vm689 = vcmp.le.s32.totalorder %v650, %v679
    %vm690 = vcmp.le.s32.totalorder %v650, %v680
    %vm691 = vcmp.le.s32.totalorder %v651, %v679
    %vm692 = vcmp.le.s32.totalorder %v651, %v680
    %vm693 = vcmp.le.s32.totalorder %v652, %v679
    %vm694 = vcmp.le.s32.totalorder %v652, %v680
    %vm695 = vcmp.le.s32.totalorder %v653, %v679
    %vm696 = vcmp.le.s32.totalorder %v653, %v680
    %vm697 = vcmp.le.s32.totalorder %v654, %v679
    %vm698 = vcmp.le.s32.totalorder %v654, %v680
    %vm699 = vcmp.le.s32.totalorder %v655, %v679
    %vm700 = vcmp.le.s32.totalorder %v655, %v680
    %vm701 = vcmp.le.s32.totalorder %v656, %v679
    %vm702 = vcmp.le.s32.totalorder %v656, %v680
    %vm703 = vcmp.le.s32.totalorder %v657, %v679
    %vm704 = vcmp.le.s32.totalorder %v657, %v680
    %vm705 = vcmp.le.s32.totalorder %v658, %v679
    %vm706 = vcmp.le.s32.totalorder %v658, %v680
    %vm707 = vcmp.le.s32.totalorder %v659, %v679
    %vm708 = vcmp.le.s32.totalorder %v659, %v680
    %vm709 = vcmp.le.s32.totalorder %v660, %v679
    %vm710 = vcmp.le.s32.totalorder %v660, %v680
    %vm711 = vcmp.le.s32.totalorder %v661, %v679
    %vm712 = vcmp.le.s32.totalorder %v661, %v680
    %vm713 = vcmp.le.s32.totalorder %v662, %v679
    %vm714 = vcmp.le.s32.totalorder %v662, %v680
    %vm715 = vcmp.le.s32.totalorder %v663, %v679
    %vm716 = vcmp.le.s32.totalorder %v663, %v680
    %vm717 = vcmp.le.s32.totalorder %v664, %v679
    %vm718 = vcmp.le.s32.totalorder %v664, %v680
    %vm719 = vcmp.le.s32.totalorder %v665, %v679
    %vm720 = vcmp.le.s32.totalorder %v665, %v680
    %vm721 = vcmp.le.s32.totalorder %v666, %v679
    %vm722 = vcmp.le.s32.totalorder %v666, %v680
    %vm723 = vcmp.le.s32.totalorder %v667, %v679
    %vm724 = vcmp.le.s32.totalorder %v667, %v680
    %vm725 = vcmp.le.s32.totalorder %v668, %v679
    %vm726 = vcmp.le.s32.totalorder %v668, %v680
    %vm727 = vcmp.le.s32.totalorder %v669, %v679
    %vm728 = vcmp.le.s32.totalorder %v669, %v680
    %vm729 = vcmp.le.s32.totalorder %v670, %v679
    %vm730 = vcmp.le.s32.totalorder %v670, %v680
    %vm731 = vcmp.le.s32.totalorder %v671, %v679
    %vm732 = vcmp.le.s32.totalorder %v671, %v680
    %vm733 = vcmp.le.s32.totalorder %v672, %v679
    %vm734 = vcmp.le.s32.totalorder %v672, %v680
    %vm735 = vcmp.le.s32.totalorder %v673, %v679
    %vm736 = vcmp.le.s32.totalorder %v673, %v680
    %vm737 = vcmp.le.s32.totalorder %v674, %v679
    %vm738 = vcmp.le.s32.totalorder %v674, %v680
    %vm739 = vcmp.le.s32.totalorder %v675, %v679
    %vm740 = vcmp.le.s32.totalorder %v675, %v680
    %vm741 = vcmp.le.s32.totalorder %v676, %v679
    %vm742 = vcmp.le.s32.totalorder %v676, %v680
    %vm743 = vcmp.le.s32.totalorder %v677, %v679
    %vm744 = vcmp.le.s32.totalorder %v677, %v680
    %v745 = vsel %vm681, %v431, 0.0
    %v746 = vsel %vm682, %v433, 0.0
    %v747 = vsel %vm683, %v437, 0.0
    %v748 = vsel %vm684, %v439, 0.0
    %v749 = vsel %vm685, %v443, 0.0
    %v750 = vsel %vm686, %v445, 0.0
    %v751 = vsel %vm687, %v449, 0.0
    %v752 = vsel %vm688, %v451, 0.0
    %v753 = vsel %vm689, %v455, 0.0
    %v754 = vsel %vm690, %v457, 0.0
    %v755 = vsel %vm691, %v461, 0.0
    %v756 = vsel %vm692, %v463, 0.0
    %v757 = vsel %vm693, %v467, 0.0
    %v758 = vsel %vm694, %v469, 0.0
    %v759 = vsel %vm695, %v473, 0.0
    %v760 = vsel %vm696, %v475, 0.0
    %v761 = vsel %vm697, %v479, 0.0
    %v762 = vsel %vm698, %v481, 0.0
    %v763 = vsel %vm699, %v485, 0.0
    %v764 = vsel %vm700, %v487, 0.0
    %v765 = vsel %vm701, %v491, 0.0
    %v766 = vsel %vm702, %v493, 0.0
    %v767 = vsel %vm703, %v497, 0.0
    %v768 = vsel %vm704, %v499, 0.0
    %v769 = vsel %vm705, %v503, 0.0
    %v770 = vsel %vm706, %v505, 0.0
    %v771 = vsel %vm707, %v509, 0.0
    %v772 = vsel %vm708, %v511, 0.0
    %v773 = vsel %vm709, %v515, 0.0
    %v774 = vsel %vm710, %v517, 0.0
    %v775 = vsel %vm711, %v521, 0.0
    %v776 = vsel %vm712, %v523, 0.0
    %v777 = vsel %vm713, %v527, 0.0
    %v778 = vsel %vm714, %v529, 0.0
    %v779 = vsel %vm715, %v533, 0.0
    %v780 = vsel %vm716, %v535, 0.0
    %v781 = vsel %vm717, %v539, 0.0
    %v782 = vsel %vm718, %v541, 0.0
    %v783 = vsel %vm719, %v545, 0.0
    %v784 = vsel %vm720, %v547, 0.0
    %v785 = vsel %vm721, %v551, 0.0
    %v786 = vsel %vm722, %v553, 0.0
    %v787 = vsel %vm723, %v557, 0.0
    %v788 = vsel %vm724, %v559, 0.0
    %v789 = vsel %vm725, %v563, 0.0
    %v790 = vsel %vm726, %v565, 0.0
    %v791 = vsel %vm727, %v569, 0.0
    %v792 = vsel %vm728, %v571, 0.0
    %v793 = vsel %vm729, %v575, 0.0
    %v794 = vsel %vm730, %v577, 0.0
    %v795 = vsel %vm731, %v581, 0.0
    %v796 = vsel %vm732, %v583, 0.0
    %v797 = vsel %vm733, %v587, 0.0
    %v798 = vsel %vm734, %v589, 0.0
    %v799 = vsel %vm735, %v593, 0.0
    %v800 = vsel %vm736, %v595, 0.0
    %v801 = vsel %vm737, %v599, 0.0
    %v802 = vsel %vm738, %v601, 0.0
    %v803 = vsel %vm739, %v605, 0.0
    %v804 = vsel %vm740, %v607, 0.0
    %v805 = vsel %vm741, %v611, 0.0
    %v806 = vsel %vm742, %v613, 0.0
    %v807 = vsel %vm743, %v617, 0.0
    %v808 = vsel %vm744, %v619, 0.0
    %809 = vmatprep.subr.mxu0 %v746
    %810 = vmatpush1.msra.mxu0 %v745
    %811 = vmatprep.subr.mxu0 %v748
    %812 = vmatpush1.msra.mxu0 %v747
    %813 = vmatprep.subr.mxu0 %v750
    %814 = vmatpush1.msra.mxu0 %v749
    %815 = vmatprep.subr.mxu0 %v752
    %816 = vmatpush1.msra.mxu0 %v751
    %817 = vmatprep.subr.mxu0 %v754
    %818 = vmatpush1.msra.mxu0 %v753
    %819 = vmatprep.subr.mxu0 %v756
    %820 = vmatpush1.msra.mxu0 %v755
    %821 = vmatprep.subr.mxu0 %v758
    %822 = vmatpush1.msra.mxu0 %v757
    %823 = vmatprep.subr.mxu0 %v760
    %824 = vmatpush1.msra.mxu0 %v759
    %825 = vmatprep.subr.mxu0 %v762
    %826 = vmatpush1.msra.mxu0 %v761
    %827 = vmatprep.subr.mxu0 %v764
    %828 = vmatpush1.msra.mxu0 %v763
    %829 = vmatprep.subr.mxu0 %v766
    %830 = vmatpush1.msra.mxu0 %v765
    %831 = vmatprep.subr.mxu0 %v768
    %832 = vmatpush1.msra.mxu0 %v767
    %833 = vmatprep.subr.mxu0 %v770
    %834 = vmatpush1.msra.mxu0 %v769
    %835 = vmatprep.subr.mxu0 %v772
    %836 = vmatpush1.msra.mxu0 %v771
    %837 = vmatprep.subr.mxu0 %v774
    %838 = vmatpush1.msra.mxu0 %v773
    %839 = vmatprep.subr.mxu0 %v776
    %840 = vmatpush1.msra.mxu0 %v775
    %841 = vmatprep.subr.mxu0 %v778
    %842 = vmatpush1.msra.mxu0 %v777
    %843 = vmatprep.subr.mxu0 %v780
    %844 = vmatpush1.msra.mxu0 %v779
    %845 = vmatprep.subr.mxu0 %v782
    %846 = vmatpush1.msra.mxu0 %v781
    %847 = vmatprep.subr.mxu0 %v784
    %848 = vmatpush1.msra.mxu0 %v783
    %849 = vmatprep.subr.mxu0 %v786
    %850 = vmatpush1.msra.mxu0 %v785
    %851 = vmatprep.subr.mxu0 %v788
    %852 = vmatpush1.msra.mxu0 %v787
    %853 = vmatprep.subr.mxu0 %v790
    %854 = vmatpush1.msra.mxu0 %v789
    %855 = vmatprep.subr.mxu0 %v792
    %856 = vmatpush1.msra.mxu0 %v791
    %857 = vmatprep.subr.mxu0 %v794
    %858 = vmatpush1.msra.mxu0 %v793
    %859 = vmatprep.subr.mxu0 %v796
    %860 = vmatpush1.msra.mxu0 %v795
    %861 = vmatprep.subr.mxu0 %v798
    %862 = vmatpush1.msra.mxu0 %v797
    %863 = vmatprep.subr.mxu0 %v800
    %864 = vmatpush1.msra.mxu0 %v799
    %865 = vmatprep.subr.mxu0 %v802
    %866 = vmatpush1.msra.mxu0 %v801
    %867 = vmatprep.subr.mxu0 %v804
    %868 = vmatpush1.msra.mxu0 %v803
    %869 = vmatprep.subr.mxu0 %v806
    %870 = vmatpush1.msra.mxu0 %v805
    %871 = vmatprep.subr.mxu0 %v808
    %872 = vmatpush1.msra.mxu0 %v807
    %873 = vmatprep.mubr.f32.mxu0 %v61
    %874 = vmatmul.mubr.f32.gmra.mrb[0].mxu0 %v60
    %v875 = vpop.f32.mrb[0].mxu0
    %v876 = vadd.f32 0.0, %v875
    %v877 = vpop.f32.mrb[0].mxu0
    %v878 = vadd.f32 0.0, %v877
    %879 = vmatprep.mubr.f32.mxu0 %v63
    %880 = vmatmul.mubr.f32.gmra.mrb[0].mxu0 %v62
    %v881 = vpop.f32.mrb[0].mxu0
    %v882 = vadd.f32 0.0, %v881
    %v883 = vpop.f32.mrb[0].mxu0
    %v884 = vadd.f32 0.0, %v883
    %885 = vmatprep.mubr.f32.mxu0 %v65
    %886 = vmatmul.mubr.f32.gmra.mrb[0].mxu0 %v64
    %v887 = vpop.f32.mrb[0].mxu0
    %v888 = vadd.f32 0.0, %v887
    %v889 = vpop.f32.mrb[0].mxu0
    %v890 = vadd.f32 0.0, %v889
    %891 = vmatprep.mubr.f32.mxu0 %v67
    %892 = vmatmul.mubr.f32.gmra.mrb[0].mxu0 %v66
    %v893 = vpop.f32.mrb[0].mxu0
    %v894 = vadd.f32 0.0, %v893
    %v895 = vpop.f32.mrb[0].mxu0
    %v896 = vadd.f32 0.0, %v895
    %897 = vdwg.mxu0
    %v898 = vsub.f32 %v623, %v876
    %v899 = vsub.f32 %v625, %v878
    %v900 = vsub.f32 %v629, %v882
    %v901 = vsub.f32 %v631, %v884
    %v902 = vsub.f32 %v635, %v888
    %v903 = vsub.f32 %v637, %v890
    %v904 = vsub.f32 %v641, %v894
    %v905 = vsub.f32 %v643, %v896
    %v906 = vadd.f32 %v60, %v898
    %v907 = vadd.f32 %v61, %v899
    %v908 = vadd.f32 %v62, %v900
    %v909 = vadd.f32 %v63, %v901
    %v910 = vadd.f32 %v64, %v902
    %v911 = vadd.f32 %v65, %v903
    %v912 = vadd.f32 %v66, %v904
    %v913 = vadd.f32 %v67, %v905
    %v914 = vmul.f32 %v906, %v906
    %v915 = vmul.f32 %v907, %v907
    %v916 = vmul.f32 %v908, %v908
    %v917 = vmul.f32 %v909, %v909
    %v918 = vmul.f32 %v910, %v910
    %v919 = vmul.f32 %v911, %v911
    %v920 = vmul.f32 %v912, %v912
    %v921 = vmul.f32 %v913, %v913
    %v922 = vadd.f32 %v914, %v916
    %v923 = vadd.f32 %v922, %v918
    %v924 = vadd.f32 %v923, %v920
    %v925 = vrot.slane %v924, 4
    %v926 = vadd.f32 %v924, %v925
    %v927 = vrot.slane %v926, 2
    %v928 = vadd.f32 %v926, %v927
    %v929 = vrot.slane %v928, 1
    %v930 = vadd.f32 %v928, %v929
    %v931 = vadd.f32 %v915, %v917
    %v932 = vadd.f32 %v931, %v919
    %v933 = vadd.f32 %v932, %v921
    %v934 = vrot.slane %v933, 4
    %v935 = vadd.f32 %v933, %v934
    %v936 = vrot.slane %v935, 2
    %v937 = vadd.f32 %v935, %v936
    %v938 = vrot.slane %v937, 1
    %v939 = vadd.f32 %v937, %v938
    %vm940 = vcmp.ge.f32.partialorder %v930, 1e-16
    %vm941 = vcmp.ge.f32.partialorder %v939, 1e-16
    %v942 = vmax.f32 %v930, 1e-30
    %v943 = vmax.f32 %v939, 1e-30
    %v944 = vrsqrt.pop %v942
    %v945 = vrsqrt.pop %v943
    %v946 = vsel %vm940, %v944, 1e+08
    %v947 = vsel %vm941, %v945, 1e+08
    %v948 = vmul.f32 %v906, %v946
    %v949 = vmul.f32 %v907, %v947
    %v950 = vmul.f32 %v908, %v946
    %v951 = vmul.f32 %v909, %v947
    %v952 = vmul.f32 %v910, %v946
    %v953 = vmul.f32 %v911, %v947
    %v954 = vmul.f32 %v912, %v946
    %v955 = vmul.f32 %v913, %v947
    %956 = vst [vmem:[%s11] sm:$0xff] %v948
    %957 = vst [vmem:[%s11 + $0x8] sm:$0xff] %v949
    %958 = vst [vmem:[%s11 + $0x10] sm:$0xff] %v950
    %959 = vst [vmem:[%s11 + $0x18] sm:$0xff] %v951
    %960 = vst [vmem:[%s11 + $0x20] sm:$0xff] %v952
    %961 = vst [vmem:[%s11 + $0x28] sm:$0xff] %v953
    %962 = vst [vmem:[%s11 + $0x30] sm:$0xff] %v954
    %963 = vst [vmem:[%s11 + $0x38] sm:$0xff] %v955
    %v964 = vmul.f32 %v948, %v948
    %v965 = vmul.f32 %v949, %v949
    %v966 = vmul.f32 %v950, %v950
    %v967 = vmul.f32 %v951, %v951
    %v968 = vmul.f32 %v952, %v952
    %v969 = vmul.f32 %v953, %v953
    %v970 = vmul.f32 %v954, %v954
    %v971 = vmul.f32 %v955, %v955
    %v972 = vadd.f32 %v964, %v966
    %v973 = vadd.f32 %v972, %v968
    %v974 = vadd.f32 %v973, %v970
    %v975 = vrot.slane %v974, 4
    %v976 = vadd.f32 %v974, %v975
    %v977 = vrot.slane %v976, 2
    %v978 = vadd.f32 %v976, %v977
    %v979 = vrot.slane %v978, 1
    %v980 = vadd.f32 %v978, %v979
    %v981 = vadd.f32 %v965, %v967
    %v982 = vadd.f32 %v981, %v969
    %v983 = vadd.f32 %v982, %v971
    %v984 = vrot.slane %v983, 4
    %v985 = vadd.f32 %v983, %v984
    %v986 = vrot.slane %v985, 2
    %v987 = vadd.f32 %v985, %v986
    %v988 = vrot.slane %v987, 1
    %v989 = vadd.f32 %v987, %v988
    %v990 = vrsqrt.pop %v980
    %v991 = vmul.f32 %v980, %v990
    %vm992 = vcmp.eq.f32.partialorder %v980, inf
    %v993 = vsel %vm992, %v980, %v991
    %vm994 = vcmp.eq.f32.partialorder %v980, 0.0
    %v995 = vand.u32 %v980, 2147483648
    %v996 = vsel %vm994, %v995, %v993
    %v997 = vrsqrt.pop %v989
    %v998 = vmul.f32 %v989, %v997
    %vm999 = vcmp.eq.f32.partialorder %v989, inf
    %v1000 = vsel %vm999, %v989, %v998
    %vm1001 = vcmp.eq.f32.partialorder %v989, 0.0
    %v1002 = vand.u32 %v989, 2147483648
    %v1003 = vsel %vm1001, %v1002, %v1000
    %v1006 = vcombine.low %v996, %v1003
    %v1008 = vunpack.c.l.s4 1966171168
    %v1009 = vunpack.c.0.s8 %v1008
    %v1010 = vlaneseq
    %v1011 = vshrl.u32 %v1010, 7
    %v1012 = vsub.s32 %v1009, %v1011
    %v1013 = vrot.slane %v1006, %v1012
    %v1015 = vunpack.c.l.s4 1966171168
    %v1016 = vunpack.c.0.s8 %v1015
    %v1017 = vlaneseq
    %v1018 = vshrl.u32 %v1017, 7
    %v1019 = vsub.s32 %v1016, %v1018
    %v1020 = vrot.slane %v1013, %v1019
    %v1022 = vlaneseq
    %vm1023 = vcmp.ge.s32.totalorder %v1022, 0
    %vm1024 = vcmp.lt.s32.totalorder %v1022, 256
    %vm1025 = vmand %vm1023, %vm1024
    %1026 = vst.msk [vmem:[%s15] sm:$0x3] %vm1025, %v1020
    %v1027 = vld [vmem:[%s4] sm:$0xff]
    %v1028 = vld [vmem:[%s4 + $0x8] sm:$0xff]
    %v1029 = vld [vmem:[%s4 + $0x10] sm:$0xff]
    %v1030 = vld [vmem:[%s4 + $0x18] sm:$0xff]
    %v1031 = vld [vmem:[%s4 + $0x20] sm:$0xff]
    %v1032 = vld [vmem:[%s4 + $0x28] sm:$0xff]
    %v1033 = vld [vmem:[%s4 + $0x30] sm:$0xff]
    %v1034 = vld [vmem:[%s4 + $0x38] sm:$0xff]
    %v1035 = vld [vmem:[%s4 + $0x40] sm:$0xff]
    %v1036 = vld [vmem:[%s4 + $0x48] sm:$0xff]
    %v1037 = vld [vmem:[%s4 + $0x50] sm:$0xff]
    %v1038 = vld [vmem:[%s4 + $0x58] sm:$0xff]
    %v1039 = vld [vmem:[%s4 + $0x60] sm:$0xff]
    %v1040 = vld [vmem:[%s4 + $0x68] sm:$0xff]
    %v1041 = vld [vmem:[%s4 + $0x70] sm:$0xff]
    %v1042 = vld [vmem:[%s4 + $0x78] sm:$0xff]
    %v1043 = vld [vmem:[%s4 + $0x80] sm:$0xff]
    %v1044 = vld [vmem:[%s4 + $0x88] sm:$0xff]
    %v1045 = vld [vmem:[%s4 + $0x90] sm:$0xff]
    %v1046 = vld [vmem:[%s4 + $0x98] sm:$0xff]
    %v1047 = vld [vmem:[%s4 + $0xa0] sm:$0xff]
    %v1048 = vld [vmem:[%s4 + $0xa8] sm:$0xff]
    %v1049 = vld [vmem:[%s4 + $0xb0] sm:$0xff]
    %v1050 = vld [vmem:[%s4 + $0xb8] sm:$0xff]
    %v1051 = vld [vmem:[%s4 + $0xc0] sm:$0xff]
    %v1052 = vld [vmem:[%s4 + $0xc8] sm:$0xff]
    %v1053 = vld [vmem:[%s4 + $0xd0] sm:$0xff]
    %v1054 = vld [vmem:[%s4 + $0xd8] sm:$0xff]
    %v1055 = vld [vmem:[%s4 + $0xe0] sm:$0xff]
    %v1056 = vld [vmem:[%s4 + $0xe8] sm:$0xff]
    %v1057 = vld [vmem:[%s4 + $0xf0] sm:$0xff]
    %v1058 = vld [vmem:[%s4 + $0xf8] sm:$0xff]
    %v1059 = vld [vmem:[%s5] sm:$0x1]
    %v1061 = vlaneseq
    %v1062 = vshrl.u32 %v1061, 7
    %v1063 = vsub.s32 0, %v1062
    %v1064 = vrot.slane %v1059, %v1063
    %1066 = vmatprep.subr.mxu0 0.0
    %1067 = vmatpush1.msra.mxu0 %v1027
    %1068 = vmatprep.subr.mxu0 0.0
    %1069 = vmatpush1.msra.mxu0 %v1028
    %1070 = vmatprep.subr.mxu0 0.0
    %1071 = vmatpush1.msra.mxu0 %v1029
    %1072 = vmatprep.subr.mxu0 0.0
    %1073 = vmatpush1.msra.mxu0 %v1030
    %1074 = vmatprep.subr.mxu0 0.0
    %1075 = vmatpush1.msra.mxu0 %v1031
    %1076 = vmatprep.subr.mxu0 0.0
    %1077 = vmatpush1.msra.mxu0 %v1032
    %1078 = vmatprep.subr.mxu0 0.0
    %1079 = vmatpush1.msra.mxu0 %v1033
    %1080 = vmatprep.subr.mxu0 0.0
    %1081 = vmatpush1.msra.mxu0 %v1034
    %1082 = vmatprep.subr.mxu0 0.0
    %1083 = vmatpush1.msra.mxu0 %v1035
    %1084 = vmatprep.subr.mxu0 0.0
    %1085 = vmatpush1.msra.mxu0 %v1036
    %1086 = vmatprep.subr.mxu0 0.0
    %1087 = vmatpush1.msra.mxu0 %v1037
    %1088 = vmatprep.subr.mxu0 0.0
    %1089 = vmatpush1.msra.mxu0 %v1038
    %1090 = vmatprep.subr.mxu0 0.0
    %1091 = vmatpush1.msra.mxu0 %v1039
    %1092 = vmatprep.subr.mxu0 0.0
    %1093 = vmatpush1.msra.mxu0 %v1040
    %1094 = vmatprep.subr.mxu0 0.0
    %1095 = vmatpush1.msra.mxu0 %v1041
    %1096 = vmatprep.subr.mxu0 0.0
    %1097 = vmatpush1.msra.mxu0 %v1042
    %1098 = vmatprep.subr.mxu0 0.0
    %1099 = vmatpush1.msra.mxu0 %v1043
    %1100 = vmatprep.subr.mxu0 0.0
    %1101 = vmatpush1.msra.mxu0 %v1044
    %1102 = vmatprep.subr.mxu0 0.0
    %1103 = vmatpush1.msra.mxu0 %v1045
    %1104 = vmatprep.subr.mxu0 0.0
    %1105 = vmatpush1.msra.mxu0 %v1046
    %1106 = vmatprep.subr.mxu0 0.0
    %1107 = vmatpush1.msra.mxu0 %v1047
    %1108 = vmatprep.subr.mxu0 0.0
    %1109 = vmatpush1.msra.mxu0 %v1048
    %1110 = vmatprep.subr.mxu0 0.0
    %1111 = vmatpush1.msra.mxu0 %v1049
    %1112 = vmatprep.subr.mxu0 0.0
    %1113 = vmatpush1.msra.mxu0 %v1050
    %1114 = vmatprep.subr.mxu0 0.0
    %1115 = vmatpush1.msra.mxu0 %v1051
    %1116 = vmatprep.subr.mxu0 0.0
    %1117 = vmatpush1.msra.mxu0 %v1052
    %1118 = vmatprep.subr.mxu0 0.0
    %1119 = vmatpush1.msra.mxu0 %v1053
    %1120 = vmatprep.subr.mxu0 0.0
    %1121 = vmatpush1.msra.mxu0 %v1054
    %1122 = vmatprep.subr.mxu0 0.0
    %1123 = vmatpush1.msra.mxu0 %v1055
    %1124 = vmatprep.subr.mxu0 0.0
    %1125 = vmatpush1.msra.mxu0 %v1056
    %1126 = vmatprep.subr.mxu0 0.0
    %1127 = vmatpush1.msra.mxu0 %v1057
    %1128 = vmatprep.subr.mxu0 0.0
    %1129 = vmatpush1.msra.mxu0 %v1058
    %1130 = vmatprep.mubr.f32.mxu0 %v156
    %1131 = vmatmul.mubr.f32.gmra.mrb[0].mxu0 %v155
    %v1132 = vpop.f32.mrb[0].mxu0
    %v1133 = vadd.f32 %v1064, %v1132
    %v1134 = vpop.f32.mrb[0].mxu0
    %1135 = vdwg.mxu0
    %v1136 = vmax.f32 %v1133, 0.0
    %v1137 = vmul.f32 %v1136, 6.25e-06
    %1138 = vxpose.xlu0.b32.start [1/16] %v1136, 128
    %1139 = vxpose.xlu0.b32.cont [2/16] 0.0, 128
    %1140 = vxpose.xlu0.b32.cont [3/16] 0.0, 128
    %1141 = vxpose.xlu0.b32.cont [4/16] 0.0, 128
    %1142 = vxpose.xlu0.b32.cont [5/16] 0.0, 128
    %1143 = vxpose.xlu0.b32.cont [6/16] 0.0, 128
    %1144 = vxpose.xlu0.b32.cont [7/16] 0.0, 128
    %1145 = vxpose.xlu0.b32.cont [8/16] 0.0, 128
    %1146 = vxpose.xlu0.b32.cont [9/16] 0.0, 128
    %1147 = vxpose.xlu0.b32.cont [10/16] 0.0, 128
    %1148 = vxpose.xlu0.b32.cont [11/16] 0.0, 128
    %1149 = vxpose.xlu0.b32.cont [12/16] 0.0, 128
    %1150 = vxpose.xlu0.b32.cont [13/16] 0.0, 128
    %1151 = vxpose.xlu0.b32.cont [14/16] 0.0, 128
    %1152 = vxpose.xlu0.b32.cont [15/16] 0.0, 128
    %1153 = vxpose.xlu0.b32.end [16/16] 0.0, 128
    %v1154 = vpop.trf.xlu0
    %v1155 = vpop.trf.xlu0
    %v1156 = vpop.trf.xlu0
    %v1157 = vpop.trf.xlu0
    %v1158 = vpop.trf.xlu0
    %v1159 = vpop.trf.xlu0
    %v1160 = vpop.trf.xlu0
    %v1161 = vpop.trf.xlu0
    %v1162 = vpop.trf.xlu0
    %v1163 = vpop.trf.xlu0
    %v1164 = vpop.trf.xlu0
    %v1165 = vpop.trf.xlu0
    %v1166 = vpop.trf.xlu0
    %v1167 = vpop.trf.xlu0
    %v1168 = vpop.trf.xlu0
    %v1169 = vpop.trf.xlu0
    %v1171 = vsel %vm255, %v1154, 0
    %v1174 = vsel %vm255, %v1155, 0
    %v1177 = vsel %vm255, %v1156, 0
    %v1180 = vsel %vm255, %v1157, 0
    %v1183 = vsel %vm255, %v1158, 0
    %v1186 = vsel %vm255, %v1159, 0
    %v1189 = vsel %vm255, %v1160, 0
    %v1192 = vsel %vm255, %v1161, 0
    %v1195 = vsel %vm255, %v1162, 0
    %v1198 = vsel %vm255, %v1163, 0
    %v1201 = vsel %vm255, %v1164, 0
    %v1204 = vsel %vm255, %v1165, 0
    %v1207 = vsel %vm255, %v1166, 0
    %v1210 = vsel %vm255, %v1167, 0
    %v1213 = vsel %vm255, %v1168, 0
    %v1216 = vsel %vm255, %v1169, 0
    %1218 = vmatprep.subr.mxu0 0.0
    %1219 = vmatpush1.msra.mxu0 %v1137
    %1220 = vmatprep.subr.mxu0 0.0
    %1221 = vmatpush1.msra.mxu0 0.0
    %1222 = vmatprep.subr.mxu0 0.0
    %1223 = vmatpush1.msra.mxu0 0.0
    %1224 = vmatprep.subr.mxu0 0.0
    %1225 = vmatpush1.msra.mxu0 0.0
    %1226 = vmatprep.subr.mxu0 0.0
    %1227 = vmatpush1.msra.mxu0 0.0
    %1228 = vmatprep.subr.mxu0 0.0
    %1229 = vmatpush1.msra.mxu0 0.0
    %1230 = vmatprep.subr.mxu0 0.0
    %1231 = vmatpush1.msra.mxu0 0.0
    %1232 = vmatprep.subr.mxu0 0.0
    %1233 = vmatpush1.msra.mxu0 0.0
    %1234 = vmatprep.subr.mxu0 0.0
    %1235 = vmatpush1.msra.mxu0 0.0
    %1236 = vmatprep.subr.mxu0 0.0
    %1237 = vmatpush1.msra.mxu0 0.0
    %1238 = vmatprep.subr.mxu0 0.0
    %1239 = vmatpush1.msra.mxu0 0.0
    %1240 = vmatprep.subr.mxu0 0.0
    %1241 = vmatpush1.msra.mxu0 0.0
    %1242 = vmatprep.subr.mxu0 0.0
    %1243 = vmatpush1.msra.mxu0 0.0
    %1244 = vmatprep.subr.mxu0 0.0
    %1245 = vmatpush1.msra.mxu0 0.0
    %1246 = vmatprep.subr.mxu0 0.0
    %1247 = vmatpush1.msra.mxu0 0.0
    %1248 = vmatprep.subr.mxu0 0.0
    %1249 = vmatpush1.msra.mxu0 0.0
    %1250 = vmatprep.subr.mxu0 0.0
    %1251 = vmatpush1.msra.mxu0 0.0
    %1252 = vmatprep.subr.mxu0 0.0
    %1253 = vmatpush1.msra.mxu0 0.0
    %1254 = vmatprep.subr.mxu0 0.0
    %1255 = vmatpush1.msra.mxu0 0.0
    %1256 = vmatprep.subr.mxu0 0.0
    %1257 = vmatpush1.msra.mxu0 0.0
    %1258 = vmatprep.subr.mxu0 0.0
    %1259 = vmatpush1.msra.mxu0 0.0
    %1260 = vmatprep.subr.mxu0 0.0
    %1261 = vmatpush1.msra.mxu0 0.0
    %1262 = vmatprep.subr.mxu0 0.0
    %1263 = vmatpush1.msra.mxu0 0.0
    %1264 = vmatprep.subr.mxu0 0.0
    %1265 = vmatpush1.msra.mxu0 0.0
    %1266 = vmatprep.subr.mxu0 0.0
    %1267 = vmatpush1.msra.mxu0 0.0
    %1268 = vmatprep.subr.mxu0 0.0
    %1269 = vmatpush1.msra.mxu0 0.0
    %1270 = vmatprep.subr.mxu0 0.0
    %1271 = vmatpush1.msra.mxu0 0.0
    %1272 = vmatprep.subr.mxu0 0.0
    %1273 = vmatpush1.msra.mxu0 0.0
    %1274 = vmatprep.subr.mxu0 0.0
    %1275 = vmatpush1.msra.mxu0 0.0
    %1276 = vmatprep.subr.mxu0 0.0
    %1277 = vmatpush1.msra.mxu0 0.0
    %1278 = vmatprep.subr.mxu0 0.0
    %1279 = vmatpush1.msra.mxu0 0.0
    %1280 = vmatprep.subr.mxu0 0.0
    %1281 = vmatpush1.msra.mxu0 0.0
    %1282 = vmatprep.mubr.f32.mxu0 0.0
    %1283 = vmatmul.mubr.f32.gmra.mrb[0].mxu0 %v1171
    %v1284 = vpop.f32.mrb[0].mxu0
    %v1285 = vadd.f32 0.0, %v1284
    %v1286 = vpop.f32.mrb[0].mxu0
    %1287 = vmatprep.mubr.f32.mxu0 0.0
    %1288 = vmatmul.mubr.f32.gmra.mrb[0].mxu0 %v1174
    %v1289 = vpop.f32.mrb[0].mxu0
    %v1290 = vadd.f32 0.0, %v1289
    %v1291 = vpop.f32.mrb[0].mxu0
    %1292 = vmatprep.mubr.f32.mxu0 0.0
    %1293 = vmatmul.mubr.f32.gmra.mrb[0].mxu0 %v1177
    %v1294 = vpop.f32.mrb[0].mxu0
    %v1295 = vadd.f32 0.0, %v1294
    %v1296 = vpop.f32.mrb[0].mxu0
    %1297 = vmatprep.mubr.f32.mxu0 0.0
    %1298 = vmatmul.mubr.f32.gmra.mrb[0].mxu0 %v1180
    %v1299 = vpop.f32.mrb[0].mxu0
    %v1300 = vadd.f32 0.0, %v1299
    %v1301 = vpop.f32.mrb[0].mxu0
    %1302 = vmatprep.mubr.f32.mxu0 0.0
    %1303 = vmatmul.mubr.f32.gmra.mrb[0].mxu0 %v1183
    %v1304 = vpop.f32.mrb[0].mxu0
    %v1305 = vadd.f32 0.0, %v1304
    %v1306 = vpop.f32.mrb[0].mxu0
    %1307 = vmatprep.mubr.f32.mxu0 0.0
    %1308 = vmatmul.mubr.f32.gmra.mrb[0].mxu0 %v1186
    %v1309 = vpop.f32.mrb[0].mxu0
    %v1310 = vadd.f32 0.0, %v1309
    %v1311 = vpop.f32.mrb[0].mxu0
    %1312 = vmatprep.mubr.f32.mxu0 0.0
    %1313 = vmatmul.mubr.f32.gmra.mrb[0].mxu0 %v1189
    %v1314 = vpop.f32.mrb[0].mxu0
    %v1315 = vadd.f32 0.0, %v1314
    %v1316 = vpop.f32.mrb[0].mxu0
    %1317 = vmatprep.mubr.f32.mxu0 0.0
    %1318 = vmatmul.mubr.f32.gmra.mrb[0].mxu0 %v1192
    %v1319 = vpop.f32.mrb[0].mxu0
    %v1320 = vadd.f32 0.0, %v1319
    %v1321 = vpop.f32.mrb[0].mxu0
    %1322 = vmatprep.mubr.f32.mxu0 0.0
    %1323 = vmatmul.mubr.f32.gmra.mrb[0].mxu0 %v1195
    %v1324 = vpop.f32.mrb[0].mxu0
    %v1325 = vadd.f32 0.0, %v1324
    %v1326 = vpop.f32.mrb[0].mxu0
    %1327 = vmatprep.mubr.f32.mxu0 0.0
    %1328 = vmatmul.mubr.f32.gmra.mrb[0].mxu0 %v1198
    %v1329 = vpop.f32.mrb[0].mxu0
    %v1330 = vadd.f32 0.0, %v1329
    %v1331 = vpop.f32.mrb[0].mxu0
    %1332 = vmatprep.mubr.f32.mxu0 0.0
    %1333 = vmatmul.mubr.f32.gmra.mrb[0].mxu0 %v1201
    %v1334 = vpop.f32.mrb[0].mxu0
    %v1335 = vadd.f32 0.0, %v1334
    %v1336 = vpop.f32.mrb[0].mxu0
    %1337 = vmatprep.mubr.f32.mxu0 0.0
    %1338 = vmatmul.mubr.f32.gmra.mrb[0].mxu0 %v1204
    %v1339 = vpop.f32.mrb[0].mxu0
    %v1340 = vadd.f32 0.0, %v1339
    %v1341 = vpop.f32.mrb[0].mxu0
    %1342 = vmatprep.mubr.f32.mxu0 0.0
    %1343 = vmatmul.mubr.f32.gmra.mrb[0].mxu0 %v1207
    %v1344 = vpop.f32.mrb[0].mxu0
    %v1345 = vadd.f32 0.0, %v1344
    %v1346 = vpop.f32.mrb[0].mxu0
    %1347 = vmatprep.mubr.f32.mxu0 0.0
    %1348 = vmatmul.mubr.f32.gmra.mrb[0].mxu0 %v1210
    %v1349 = vpop.f32.mrb[0].mxu0
    %v1350 = vadd.f32 0.0, %v1349
    %v1351 = vpop.f32.mrb[0].mxu0
    %1352 = vmatprep.mubr.f32.mxu0 0.0
    %1353 = vmatmul.mubr.f32.gmra.mrb[0].mxu0 %v1213
    %v1354 = vpop.f32.mrb[0].mxu0
    %v1355 = vadd.f32 0.0, %v1354
    %v1356 = vpop.f32.mrb[0].mxu0
    %1357 = vmatprep.mubr.f32.mxu0 0.0
    %1358 = vmatmul.mubr.f32.gmra.mrb[0].mxu0 %v1216
    %v1359 = vpop.f32.mrb[0].mxu0
    %v1360 = vadd.f32 0.0, %v1359
    %v1361 = vpop.f32.mrb[0].mxu0
    %1362 = vmatprep.mubr.f32.mxu0 0.0
    %1363 = vmatmul.mubr.f32.gmra.mrb[0].mxu0 %v257
    %v1364 = vpop.f32.mrb[0].mxu0
    %v1365 = vadd.f32 0.0, %v1364
    %v1366 = vpop.f32.mrb[0].mxu0
    %1367 = vmatprep.mubr.f32.mxu0 0.0
    %1368 = vmatmul.mubr.f32.gmra.mrb[0].mxu0 %v260
    %v1369 = vpop.f32.mrb[0].mxu0
    %v1370 = vadd.f32 0.0, %v1369
    %v1371 = vpop.f32.mrb[0].mxu0
    %1372 = vmatprep.mubr.f32.mxu0 0.0
    %1373 = vmatmul.mubr.f32.gmra.mrb[0].mxu0 %v263
    %v1374 = vpop.f32.mrb[0].mxu0
    %v1375 = vadd.f32 0.0, %v1374
    %v1376 = vpop.f32.mrb[0].mxu0
    %1377 = vmatprep.mubr.f32.mxu0 0.0
    %1378 = vmatmul.mubr.f32.gmra.mrb[0].mxu0 %v266
    %v1379 = vpop.f32.mrb[0].mxu0
    %v1380 = vadd.f32 0.0, %v1379
    %v1381 = vpop.f32.mrb[0].mxu0
    %1382 = vmatprep.mubr.f32.mxu0 0.0
    %1383 = vmatmul.mubr.f32.gmra.mrb[0].mxu0 %v269
    %v1384 = vpop.f32.mrb[0].mxu0
    %v1385 = vadd.f32 0.0, %v1384
    %v1386 = vpop.f32.mrb[0].mxu0
    %1387 = vmatprep.mubr.f32.mxu0 0.0
    %1388 = vmatmul.mubr.f32.gmra.mrb[0].mxu0 %v272
    %v1389 = vpop.f32.mrb[0].mxu0
    %v1390 = vadd.f32 0.0, %v1389
    %v1391 = vpop.f32.mrb[0].mxu0
    %1392 = vmatprep.mubr.f32.mxu0 0.0
    %1393 = vmatmul.mubr.f32.gmra.mrb[0].mxu0 %v275
    %v1394 = vpop.f32.mrb[0].mxu0
    %v1395 = vadd.f32 0.0, %v1394
    %v1396 = vpop.f32.mrb[0].mxu0
    %1397 = vmatprep.mubr.f32.mxu0 0.0
    %1398 = vmatmul.mubr.f32.gmra.mrb[0].mxu0 %v278
    %v1399 = vpop.f32.mrb[0].mxu0
    %v1400 = vadd.f32 0.0, %v1399
    %v1401 = vpop.f32.mrb[0].mxu0
    %1402 = vmatprep.mubr.f32.mxu0 0.0
    %1403 = vmatmul.mubr.f32.gmra.mrb[0].mxu0 %v281
    %v1404 = vpop.f32.mrb[0].mxu0
    %v1405 = vadd.f32 0.0, %v1404
    %v1406 = vpop.f32.mrb[0].mxu0
    %1407 = vmatprep.mubr.f32.mxu0 0.0
    %1408 = vmatmul.mubr.f32.gmra.mrb[0].mxu0 %v284
    %v1409 = vpop.f32.mrb[0].mxu0
    %v1410 = vadd.f32 0.0, %v1409
    %v1411 = vpop.f32.mrb[0].mxu0
    %1412 = vmatprep.mubr.f32.mxu0 0.0
    %1413 = vmatmul.mubr.f32.gmra.mrb[0].mxu0 %v287
    %v1414 = vpop.f32.mrb[0].mxu0
    %v1415 = vadd.f32 0.0, %v1414
    %v1416 = vpop.f32.mrb[0].mxu0
    %1417 = vmatprep.mubr.f32.mxu0 0.0
    %1418 = vmatmul.mubr.f32.gmra.mrb[0].mxu0 %v290
    %v1419 = vpop.f32.mrb[0].mxu0
    %v1420 = vadd.f32 0.0, %v1419
    %v1421 = vpop.f32.mrb[0].mxu0
    %1422 = vmatprep.mubr.f32.mxu0 0.0
    %1423 = vmatmul.mubr.f32.gmra.mrb[0].mxu0 %v293
    %v1424 = vpop.f32.mrb[0].mxu0
    %v1425 = vadd.f32 0.0, %v1424
    %v1426 = vpop.f32.mrb[0].mxu0
    %1427 = vmatprep.mubr.f32.mxu0 0.0
    %1428 = vmatmul.mubr.f32.gmra.mrb[0].mxu0 %v296
    %v1429 = vpop.f32.mrb[0].mxu0
    %v1430 = vadd.f32 0.0, %v1429
    %v1431 = vpop.f32.mrb[0].mxu0
    %1432 = vmatprep.mubr.f32.mxu0 0.0
    %1433 = vmatmul.mubr.f32.gmra.mrb[0].mxu0 %v299
    %v1434 = vpop.f32.mrb[0].mxu0
    %v1435 = vadd.f32 0.0, %v1434
    %v1436 = vpop.f32.mrb[0].mxu0
    %1437 = vmatprep.mubr.f32.mxu0 0.0
    %1438 = vmatmul.mubr.f32.gmra.mrb[0].mxu0 %v302
    %v1439 = vpop.f32.mrb[0].mxu0
    %v1440 = vadd.f32 0.0, %v1439
    %v1441 = vpop.f32.mrb[0].mxu0
    %1442 = vmatprep.mubr.f32.mxu0 0.0
    %1443 = vmatmul.mubr.f32.gmra.mrb[0].mxu0 %v305
    %v1444 = vpop.f32.mrb[0].mxu0
    %v1445 = vadd.f32 0.0, %v1444
    %v1446 = vpop.f32.mrb[0].mxu0
    %1447 = vmatprep.mubr.f32.mxu0 0.0
    %1448 = vmatmul.mubr.f32.gmra.mrb[0].mxu0 %v308
    %v1449 = vpop.f32.mrb[0].mxu0
    %v1450 = vadd.f32 0.0, %v1449
    %v1451 = vpop.f32.mrb[0].mxu0
    %1452 = vmatprep.mubr.f32.mxu0 0.0
    %1453 = vmatmul.mubr.f32.gmra.mrb[0].mxu0 %v311
    %v1454 = vpop.f32.mrb[0].mxu0
    %v1455 = vadd.f32 0.0, %v1454
    %v1456 = vpop.f32.mrb[0].mxu0
    %1457 = vmatprep.mubr.f32.mxu0 0.0
    %1458 = vmatmul.mubr.f32.gmra.mrb[0].mxu0 %v314
    %v1459 = vpop.f32.mrb[0].mxu0
    %v1460 = vadd.f32 0.0, %v1459
    %v1461 = vpop.f32.mrb[0].mxu0
    %1462 = vmatprep.mubr.f32.mxu0 0.0
    %1463 = vmatmul.mubr.f32.gmra.mrb[0].mxu0 %v317
    %v1464 = vpop.f32.mrb[0].mxu0
    %v1465 = vadd.f32 0.0, %v1464
    %v1466 = vpop.f32.mrb[0].mxu0
    %1467 = vmatprep.mubr.f32.mxu0 0.0
    %1468 = vmatmul.mubr.f32.gmra.mrb[0].mxu0 %v320
    %v1469 = vpop.f32.mrb[0].mxu0
    %v1470 = vadd.f32 0.0, %v1469
    %v1471 = vpop.f32.mrb[0].mxu0
    %1472 = vmatprep.mubr.f32.mxu0 0.0
    %1473 = vmatmul.mubr.f32.gmra.mrb[0].mxu0 %v323
    %v1474 = vpop.f32.mrb[0].mxu0
    %v1475 = vadd.f32 0.0, %v1474
    %v1476 = vpop.f32.mrb[0].mxu0
    %1477 = vmatprep.mubr.f32.mxu0 0.0
    %1478 = vmatmul.mubr.f32.gmra.mrb[0].mxu0 %v326
    %v1479 = vpop.f32.mrb[0].mxu0
    %v1480 = vadd.f32 0.0, %v1479
    %v1481 = vpop.f32.mrb[0].mxu0
    %1482 = vmatprep.mubr.f32.mxu0 0.0
    %1483 = vmatmul.mubr.f32.gmra.mrb[0].mxu0 %v329
    %v1484 = vpop.f32.mrb[0].mxu0
    %v1485 = vadd.f32 0.0, %v1484
    %v1486 = vpop.f32.mrb[0].mxu0
    %1487 = vmatprep.mubr.f32.mxu0 0.0
    %1488 = vmatmul.mubr.f32.gmra.mrb[0].mxu0 %v332
    %v1489 = vpop.f32.mrb[0].mxu0
    %v1490 = vadd.f32 0.0, %v1489
    %v1491 = vpop.f32.mrb[0].mxu0
    %1492 = vmatprep.mubr.f32.mxu0 0.0
    %1493 = vmatmul.mubr.f32.gmra.mrb[0].mxu0 %v335
    %v1494 = vpop.f32.mrb[0].mxu0
    %v1495 = vadd.f32 0.0, %v1494
    %v1496 = vpop.f32.mrb[0].mxu0
    %1497 = vmatprep.mubr.f32.mxu0 0.0
    %1498 = vmatmul.mubr.f32.gmra.mrb[0].mxu0 %v338
    %v1499 = vpop.f32.mrb[0].mxu0
    %v1500 = vadd.f32 0.0, %v1499
    %v1501 = vpop.f32.mrb[0].mxu0
    %1502 = vmatprep.mubr.f32.mxu0 0.0
    %1503 = vmatmul.mubr.f32.gmra.mrb[0].mxu0 %v341
    %v1504 = vpop.f32.mrb[0].mxu0
    %v1505 = vadd.f32 0.0, %v1504
    %v1506 = vpop.f32.mrb[0].mxu0
    %1507 = vmatprep.mubr.f32.mxu0 0.0
    %1508 = vmatmul.mubr.f32.gmra.mrb[0].mxu0 %v344
    %v1509 = vpop.f32.mrb[0].mxu0
    %v1510 = vadd.f32 0.0, %v1509
    %v1511 = vpop.f32.mrb[0].mxu0
    %1512 = vmatprep.mubr.f32.mxu0 0.0
    %1513 = vmatmul.mubr.f32.gmra.mrb[0].mxu0 %v347
    %v1514 = vpop.f32.mrb[0].mxu0
    %v1515 = vadd.f32 0.0, %v1514
    %v1516 = vpop.f32.mrb[0].mxu0
    %1517 = vmatprep.mubr.f32.mxu0 0.0
    %1518 = vmatmul.mubr.f32.gmra.mrb[0].mxu0 %v350
    %v1519 = vpop.f32.mrb[0].mxu0
    %v1520 = vadd.f32 0.0, %v1519
    %v1521 = vpop.f32.mrb[0].mxu0
    %1522 = vdwg.mxu0
    %v1523 = vsel %vm681, %v1285, 0.0
    %v1524 = vsel %vm683, %v1290, 0.0
    %v1525 = vsel %vm685, %v1295, 0.0
    %v1526 = vsel %vm687, %v1300, 0.0
    %v1527 = vsel %vm689, %v1305, 0.0
    %v1528 = vsel %vm691, %v1310, 0.0
    %v1529 = vsel %vm693, %v1315, 0.0
    %v1530 = vsel %vm695, %v1320, 0.0
    %v1531 = vsel %vm697, %v1325, 0.0
    %v1532 = vsel %vm699, %v1330, 0.0
    %v1533 = vsel %vm701, %v1335, 0.0
    %v1534 = vsel %vm703, %v1340, 0.0
    %v1535 = vsel %vm705, %v1345, 0.0
    %v1536 = vsel %vm707, %v1350, 0.0
    %v1537 = vsel %vm709, %v1355, 0.0
    %v1538 = vsel %vm711, %v1360, 0.0
    %1539 = vmatprep.subr.mxu0 0.0
    %1540 = vmatpush1.msra.mxu0 %v1523
    %1541 = vmatprep.subr.mxu0 0.0
    %1542 = vmatpush1.msra.mxu0 %v1524
    %1543 = vmatprep.subr.mxu0 0.0
    %1544 = vmatpush1.msra.mxu0 %v1525
    %1545 = vmatprep.subr.mxu0 0.0
    %1546 = vmatpush1.msra.mxu0 %v1526
    %1547 = vmatprep.subr.mxu0 0.0
    %1548 = vmatpush1.msra.mxu0 %v1527
    %1549 = vmatprep.subr.mxu0 0.0
    %1550 = vmatpush1.msra.mxu0 %v1528
    %1551 = vmatprep.subr.mxu0 0.0
    %1552 = vmatpush1.msra.mxu0 %v1529
    %1553 = vmatprep.subr.mxu0 0.0
    %1554 = vmatpush1.msra.mxu0 %v1530
    %1555 = vmatprep.subr.mxu0 0.0
    %1556 = vmatpush1.msra.mxu0 %v1531
    %1557 = vmatprep.subr.mxu0 0.0
    %1558 = vmatpush1.msra.mxu0 %v1532
    %1559 = vmatprep.subr.mxu0 0.0
    %1560 = vmatpush1.msra.mxu0 %v1533
    %1561 = vmatprep.subr.mxu0 0.0
    %1562 = vmatpush1.msra.mxu0 %v1534
    %1563 = vmatprep.subr.mxu0 0.0
    %1564 = vmatpush1.msra.mxu0 %v1535
    %1565 = vmatprep.subr.mxu0 0.0
    %1566 = vmatpush1.msra.mxu0 %v1536
    %1567 = vmatprep.subr.mxu0 0.0
    %1568 = vmatpush1.msra.mxu0 %v1537
    %1569 = vmatprep.subr.mxu0 0.0
    %1570 = vmatpush1.msra.mxu0 %v1538
    %1571 = vmatprep.subr.mxu0 0.0
    %1572 = vmatpush1.msra.mxu0 0.0
    %1573 = vmatprep.subr.mxu0 0.0
    %1574 = vmatpush1.msra.mxu0 0.0
    %1575 = vmatprep.subr.mxu0 0.0
    %1576 = vmatpush1.msra.mxu0 0.0
    %1577 = vmatprep.subr.mxu0 0.0
    %1578 = vmatpush1.msra.mxu0 0.0
    %1579 = vmatprep.subr.mxu0 0.0
    %1580 = vmatpush1.msra.mxu0 0.0
    %1581 = vmatprep.subr.mxu0 0.0
    %1582 = vmatpush1.msra.mxu0 0.0
    %1583 = vmatprep.subr.mxu0 0.0
    %1584 = vmatpush1.msra.mxu0 0.0
    %1585 = vmatprep.subr.mxu0 0.0
    %1586 = vmatpush1.msra.mxu0 0.0
    %1587 = vmatprep.subr.mxu0 0.0
    %1588 = vmatpush1.msra.mxu0 0.0
    %1589 = vmatprep.subr.mxu0 0.0
    %1590 = vmatpush1.msra.mxu0 0.0
    %1591 = vmatprep.subr.mxu0 0.0
    %1592 = vmatpush1.msra.mxu0 0.0
    %1593 = vmatprep.subr.mxu0 0.0
    %1594 = vmatpush1.msra.mxu0 0.0
    %1595 = vmatprep.subr.mxu0 0.0
    %1596 = vmatpush1.msra.mxu0 0.0
    %1597 = vmatprep.subr.mxu0 0.0
    %1598 = vmatpush1.msra.mxu0 0.0
    %1599 = vmatprep.subr.mxu0 0.0
    %1600 = vmatpush1.msra.mxu0 0.0
    %1601 = vmatprep.subr.mxu0 0.0
    %1602 = vmatpush1.msra.mxu0 0.0
    %1603 = vmatprep.mubr.f32.mxu0 0.0
    %1604 = vmatmul.mubr.f32.gmra.mrb[0].mxu0 %v1027
    %v1605 = vpop.f32.mrb[0].mxu0
    %v1606 = vadd.f32 0.0, %v1605
    %v1607 = vpop.f32.mrb[0].mxu0
    %1608 = vmatprep.mubr.f32.mxu0 0.0
    %1609 = vmatmul.mubr.f32.gmra.mrb[0].mxu0 %v1028
    %v1610 = vpop.f32.mrb[0].mxu0
    %v1611 = vadd.f32 0.0, %v1610
    %v1612 = vpop.f32.mrb[0].mxu0
    %1613 = vmatprep.mubr.f32.mxu0 0.0
    %1614 = vmatmul.mubr.f32.gmra.mrb[0].mxu0 %v1029
    %v1615 = vpop.f32.mrb[0].mxu0
    %v1616 = vadd.f32 0.0, %v1615
    %v1617 = vpop.f32.mrb[0].mxu0
    %1618 = vmatprep.mubr.f32.mxu0 0.0
    %1619 = vmatmul.mubr.f32.gmra.mrb[0].mxu0 %v1030
    %v1620 = vpop.f32.mrb[0].mxu0
    %v1621 = vadd.f32 0.0, %v1620
    %v1622 = vpop.f32.mrb[0].mxu0
    %1623 = vmatprep.mubr.f32.mxu0 0.0
    %1624 = vmatmul.mubr.f32.gmra.mrb[0].mxu0 %v1031
    %v1625 = vpop.f32.mrb[0].mxu0
    %v1626 = vadd.f32 0.0, %v1625
    %v1627 = vpop.f32.mrb[0].mxu0
    %1628 = vmatprep.mubr.f32.mxu0 0.0
    %1629 = vmatmul.mubr.f32.gmra.mrb[0].mxu0 %v1032
    %v1630 = vpop.f32.mrb[0].mxu0
    %v1631 = vadd.f32 0.0, %v1630
    %v1632 = vpop.f32.mrb[0].mxu0
    %1633 = vmatprep.mubr.f32.mxu0 0.0
    %1634 = vmatmul.mubr.f32.gmra.mrb[0].mxu0 %v1033
    %v1635 = vpop.f32.mrb[0].mxu0
    %v1636 = vadd.f32 0.0, %v1635
    %v1637 = vpop.f32.mrb[0].mxu0
    %1638 = vmatprep.mubr.f32.mxu0 0.0
    %1639 = vmatmul.mubr.f32.gmra.mrb[0].mxu0 %v1034
    %v1640 = vpop.f32.mrb[0].mxu0
    %v1641 = vadd.f32 0.0, %v1640
    %v1642 = vpop.f32.mrb[0].mxu0
    %1643 = vmatprep.mubr.f32.mxu0 0.0
    %1644 = vmatmul.mubr.f32.gmra.mrb[0].mxu0 %v1035
    %v1645 = vpop.f32.mrb[0].mxu0
    %v1646 = vadd.f32 0.0, %v1645
    %v1647 = vpop.f32.mrb[0].mxu0
    %1648 = vmatprep.mubr.f32.mxu0 0.0
    %1649 = vmatmul.mubr.f32.gmra.mrb[0].mxu0 %v1036
    %v1650 = vpop.f32.mrb[0].mxu0
    %v1651 = vadd.f32 0.0, %v1650
    %v1652 = vpop.f32.mrb[0].mxu0
    %1653 = vmatprep.mubr.f32.mxu0 0.0
    %1654 = vmatmul.mubr.f32.gmra.mrb[0].mxu0 %v1037
    %v1655 = vpop.f32.mrb[0].mxu0
    %v1656 = vadd.f32 0.0, %v1655
    %v1657 = vpop.f32.mrb[0].mxu0
    %1658 = vmatprep.mubr.f32.mxu0 0.0
    %1659 = vmatmul.mubr.f32.gmra.mrb[0].mxu0 %v1038
    %v1660 = vpop.f32.mrb[0].mxu0
    %v1661 = vadd.f32 0.0, %v1660
    %v1662 = vpop.f32.mrb[0].mxu0
    %1663 = vmatprep.mubr.f32.mxu0 0.0
    %1664 = vmatmul.mubr.f32.gmra.mrb[0].mxu0 %v1039
    %v1665 = vpop.f32.mrb[0].mxu0
    %v1666 = vadd.f32 0.0, %v1665
    %v1667 = vpop.f32.mrb[0].mxu0
    %1668 = vmatprep.mubr.f32.mxu0 0.0
    %1669 = vmatmul.mubr.f32.gmra.mrb[0].mxu0 %v1040
    %v1670 = vpop.f32.mrb[0].mxu0
    %v1671 = vadd.f32 0.0, %v1670
    %v1672 = vpop.f32.mrb[0].mxu0
    %1673 = vmatprep.mubr.f32.mxu0 0.0
    %1674 = vmatmul.mubr.f32.gmra.mrb[0].mxu0 %v1041
    %v1675 = vpop.f32.mrb[0].mxu0
    %v1676 = vadd.f32 0.0, %v1675
    %v1677 = vpop.f32.mrb[0].mxu0
    %1678 = vmatprep.mubr.f32.mxu0 0.0
    %1679 = vmatmul.mubr.f32.gmra.mrb[0].mxu0 %v1042
    %v1680 = vpop.f32.mrb[0].mxu0
    %v1681 = vadd.f32 0.0, %v1680
    %v1682 = vpop.f32.mrb[0].mxu0
    %1683 = vmatprep.mubr.f32.mxu0 0.0
    %1684 = vmatmul.mubr.f32.gmra.mrb[0].mxu0 %v1043
    %v1685 = vpop.f32.mrb[0].mxu0
    %v1686 = vadd.f32 0.0, %v1685
    %v1687 = vpop.f32.mrb[0].mxu0
    %1688 = vmatprep.mubr.f32.mxu0 0.0
    %1689 = vmatmul.mubr.f32.gmra.mrb[0].mxu0 %v1044
    %v1690 = vpop.f32.mrb[0].mxu0
    %v1691 = vadd.f32 0.0, %v1690
    %v1692 = vpop.f32.mrb[0].mxu0
    %1693 = vmatprep.mubr.f32.mxu0 0.0
    %1694 = vmatmul.mubr.f32.gmra.mrb[0].mxu0 %v1045
    %v1695 = vpop.f32.mrb[0].mxu0
    %v1696 = vadd.f32 0.0, %v1695
    %v1697 = vpop.f32.mrb[0].mxu0
    %1698 = vmatprep.mubr.f32.mxu0 0.0
    %1699 = vmatmul.mubr.f32.gmra.mrb[0].mxu0 %v1046
    %v1700 = vpop.f32.mrb[0].mxu0
    %v1701 = vadd.f32 0.0, %v1700
    %v1702 = vpop.f32.mrb[0].mxu0
    %1703 = vmatprep.mubr.f32.mxu0 0.0
    %1704 = vmatmul.mubr.f32.gmra.mrb[0].mxu0 %v1047
    %v1705 = vpop.f32.mrb[0].mxu0
    %v1706 = vadd.f32 0.0, %v1705
    %v1707 = vpop.f32.mrb[0].mxu0
    %1708 = vmatprep.mubr.f32.mxu0 0.0
    %1709 = vmatmul.mubr.f32.gmra.mrb[0].mxu0 %v1048
    %v1710 = vpop.f32.mrb[0].mxu0
    %v1711 = vadd.f32 0.0, %v1710
    %v1712 = vpop.f32.mrb[0].mxu0
    %1713 = vmatprep.mubr.f32.mxu0 0.0
    %1714 = vmatmul.mubr.f32.gmra.mrb[0].mxu0 %v1049
    %v1715 = vpop.f32.mrb[0].mxu0
    %v1716 = vadd.f32 0.0, %v1715
    %v1717 = vpop.f32.mrb[0].mxu0
    %1718 = vmatprep.mubr.f32.mxu0 0.0
    %1719 = vmatmul.mubr.f32.gmra.mrb[0].mxu0 %v1050
    %v1720 = vpop.f32.mrb[0].mxu0
    %v1721 = vadd.f32 0.0, %v1720
    %v1722 = vpop.f32.mrb[0].mxu0
    %1723 = vmatprep.mubr.f32.mxu0 0.0
    %1724 = vmatmul.mubr.f32.gmra.mrb[0].mxu0 %v1051
    %v1725 = vpop.f32.mrb[0].mxu0
    %v1726 = vadd.f32 0.0, %v1725
    %v1727 = vpop.f32.mrb[0].mxu0
    %1728 = vmatprep.mubr.f32.mxu0 0.0
    %1729 = vmatmul.mubr.f32.gmra.mrb[0].mxu0 %v1052
    %v1730 = vpop.f32.mrb[0].mxu0
    %v1731 = vadd.f32 0.0, %v1730
    %v1732 = vpop.f32.mrb[0].mxu0
    %1733 = vmatprep.mubr.f32.mxu0 0.0
    %1734 = vmatmul.mubr.f32.gmra.mrb[0].mxu0 %v1053
    %v1735 = vpop.f32.mrb[0].mxu0
    %v1736 = vadd.f32 0.0, %v1735
    %v1737 = vpop.f32.mrb[0].mxu0
    %1738 = vmatprep.mubr.f32.mxu0 0.0
    %1739 = vmatmul.mubr.f32.gmra.mrb[0].mxu0 %v1054
    %v1740 = vpop.f32.mrb[0].mxu0
    %v1741 = vadd.f32 0.0, %v1740
    %v1742 = vpop.f32.mrb[0].mxu0
    %1743 = vmatprep.mubr.f32.mxu0 0.0
    %1744 = vmatmul.mubr.f32.gmra.mrb[0].mxu0 %v1055
    %v1745 = vpop.f32.mrb[0].mxu0
    %v1746 = vadd.f32 0.0, %v1745
    %v1747 = vpop.f32.mrb[0].mxu0
    %1748 = vmatprep.mubr.f32.mxu0 0.0
    %1749 = vmatmul.mubr.f32.gmra.mrb[0].mxu0 %v1056
    %v1750 = vpop.f32.mrb[0].mxu0
    %v1751 = vadd.f32 0.0, %v1750
    %v1752 = vpop.f32.mrb[0].mxu0
    %1753 = vmatprep.mubr.f32.mxu0 0.0
    %1754 = vmatmul.mubr.f32.gmra.mrb[0].mxu0 %v1057
    %v1755 = vpop.f32.mrb[0].mxu0
    %v1756 = vadd.f32 0.0, %v1755
    %v1757 = vpop.f32.mrb[0].mxu0
    %1758 = vmatprep.mubr.f32.mxu0 0.0
    %1759 = vmatmul.mubr.f32.gmra.mrb[0].mxu0 %v1058
    %v1760 = vpop.f32.mrb[0].mxu0
    %v1761 = vadd.f32 0.0, %v1760
    %v1762 = vpop.f32.mrb[0].mxu0
    %1763 = vdwg.mxu0
    %v1764 = vsub.f32 %v1365, %v1606
    %v1765 = vsub.f32 %v1370, %v1611
    %v1766 = vsub.f32 %v1375, %v1616
    %v1767 = vsub.f32 %v1380, %v1621
    %v1768 = vsub.f32 %v1385, %v1626
    %v1769 = vsub.f32 %v1390, %v1631
    %v1770 = vsub.f32 %v1395, %v1636
    %v1771 = vsub.f32 %v1400, %v1641
    %v1772 = vsub.f32 %v1405, %v1646
    %v1773 = vsub.f32 %v1410, %v1651
    %v1774 = vsub.f32 %v1415, %v1656
    %v1775 = vsub.f32 %v1420, %v1661
    %v1776 = vsub.f32 %v1425, %v1666
    %v1777 = vsub.f32 %v1430, %v1671
    %v1778 = vsub.f32 %v1435, %v1676
    %v1779 = vsub.f32 %v1440, %v1681
    %v1780 = vsub.f32 %v1445, %v1686
    %v1781 = vsub.f32 %v1450, %v1691
    %v1782 = vsub.f32 %v1455, %v1696
    %v1783 = vsub.f32 %v1460, %v1701
    %v1784 = vsub.f32 %v1465, %v1706
    %v1785 = vsub.f32 %v1470, %v1711
    %v1786 = vsub.f32 %v1475, %v1716
    %v1787 = vsub.f32 %v1480, %v1721
    %v1788 = vsub.f32 %v1485, %v1726
    %v1789 = vsub.f32 %v1490, %v1731
    %v1790 = vsub.f32 %v1495, %v1736
    %v1791 = vsub.f32 %v1500, %v1741
    %v1792 = vsub.f32 %v1505, %v1746
    %v1793 = vsub.f32 %v1510, %v1751
    %v1794 = vsub.f32 %v1515, %v1756
    %v1795 = vsub.f32 %v1520, %v1761
    %v1796 = vadd.f32 %v1027, %v1764
    %v1797 = vadd.f32 %v1028, %v1765
    %v1798 = vadd.f32 %v1029, %v1766
    %v1799 = vadd.f32 %v1030, %v1767
    %v1800 = vadd.f32 %v1031, %v1768
    %v1801 = vadd.f32 %v1032, %v1769
    %v1802 = vadd.f32 %v1033, %v1770
    %v1803 = vadd.f32 %v1034, %v1771
    %v1804 = vadd.f32 %v1035, %v1772
    %v1805 = vadd.f32 %v1036, %v1773
    %v1806 = vadd.f32 %v1037, %v1774
    %v1807 = vadd.f32 %v1038, %v1775
    %v1808 = vadd.f32 %v1039, %v1776
    %v1809 = vadd.f32 %v1040, %v1777
    %v1810 = vadd.f32 %v1041, %v1778
    %v1811 = vadd.f32 %v1042, %v1779
    %v1812 = vadd.f32 %v1043, %v1780
    %v1813 = vadd.f32 %v1044, %v1781
    %v1814 = vadd.f32 %v1045, %v1782
    %v1815 = vadd.f32 %v1046, %v1783
    %v1816 = vadd.f32 %v1047, %v1784
    %v1817 = vadd.f32 %v1048, %v1785
    %v1818 = vadd.f32 %v1049, %v1786
    %v1819 = vadd.f32 %v1050, %v1787
    %v1820 = vadd.f32 %v1051, %v1788
    %v1821 = vadd.f32 %v1052, %v1789
    %v1822 = vadd.f32 %v1053, %v1790
    %v1823 = vadd.f32 %v1054, %v1791
    %v1824 = vadd.f32 %v1055, %v1792
    %v1825 = vadd.f32 %v1056, %v1793
    %v1826 = vadd.f32 %v1057, %v1794
    %v1827 = vadd.f32 %v1058, %v1795
    %v1828 = vmul.f32 %v1796, %v1796
    %v1829 = vmul.f32 %v1797, %v1797
    %v1830 = vmul.f32 %v1798, %v1798
    %v1831 = vmul.f32 %v1799, %v1799
    %v1832 = vmul.f32 %v1800, %v1800
    %v1833 = vmul.f32 %v1801, %v1801
    %v1834 = vmul.f32 %v1802, %v1802
    %v1835 = vmul.f32 %v1803, %v1803
    %v1836 = vmul.f32 %v1804, %v1804
    %v1837 = vmul.f32 %v1805, %v1805
    %v1838 = vmul.f32 %v1806, %v1806
    %v1839 = vmul.f32 %v1807, %v1807
    %v1840 = vmul.f32 %v1808, %v1808
    %v1841 = vmul.f32 %v1809, %v1809
    %v1842 = vmul.f32 %v1810, %v1810
    %v1843 = vmul.f32 %v1811, %v1811
    %v1844 = vmul.f32 %v1812, %v1812
    %v1845 = vmul.f32 %v1813, %v1813
    %v1846 = vmul.f32 %v1814, %v1814
    %v1847 = vmul.f32 %v1815, %v1815
    %v1848 = vmul.f32 %v1816, %v1816
    %v1849 = vmul.f32 %v1817, %v1817
    %v1850 = vmul.f32 %v1818, %v1818
    %v1851 = vmul.f32 %v1819, %v1819
    %v1852 = vmul.f32 %v1820, %v1820
    %v1853 = vmul.f32 %v1821, %v1821
    %v1854 = vmul.f32 %v1822, %v1822
    %v1855 = vmul.f32 %v1823, %v1823
    %v1856 = vmul.f32 %v1824, %v1824
    %v1857 = vmul.f32 %v1825, %v1825
    %v1858 = vmul.f32 %v1826, %v1826
    %v1859 = vmul.f32 %v1827, %v1827
    %v1860 = vadd.f32 %v1828, %v1829
    %v1861 = vadd.f32 %v1860, %v1830
    %v1862 = vadd.f32 %v1861, %v1831
    %v1863 = vadd.f32 %v1862, %v1832
    %v1864 = vadd.f32 %v1863, %v1833
    %v1865 = vadd.f32 %v1864, %v1834
    %v1866 = vadd.f32 %v1865, %v1835
    %v1867 = vadd.f32 %v1866, %v1836
    %v1868 = vadd.f32 %v1867, %v1837
    %v1869 = vadd.f32 %v1868, %v1838
    %v1870 = vadd.f32 %v1869, %v1839
    %v1871 = vadd.f32 %v1870, %v1840
    %v1872 = vadd.f32 %v1871, %v1841
    %v1873 = vadd.f32 %v1872, %v1842
    %v1874 = vadd.f32 %v1873, %v1843
    %v1875 = vadd.f32 %v1874, %v1844
    %v1876 = vadd.f32 %v1875, %v1845
    %v1877 = vadd.f32 %v1876, %v1846
    %v1878 = vadd.f32 %v1877, %v1847
    %v1879 = vadd.f32 %v1878, %v1848
    %v1880 = vadd.f32 %v1879, %v1849
    %v1881 = vadd.f32 %v1880, %v1850
    %v1882 = vadd.f32 %v1881, %v1851
    %v1883 = vadd.f32 %v1882, %v1852
    %v1884 = vadd.f32 %v1883, %v1853
    %v1885 = vadd.f32 %v1884, %v1854
    %v1886 = vadd.f32 %v1885, %v1855
    %v1887 = vadd.f32 %v1886, %v1856
    %v1888 = vadd.f32 %v1887, %v1857
    %v1889 = vadd.f32 %v1888, %v1858
    %v1890 = vadd.f32 %v1889, %v1859
    %v1891 = vrot.slane %v1890, 4
    %v1892 = vadd.f32 %v1890, %v1891
    %v1893 = vrot.slane %v1892, 2
    %v1894 = vadd.f32 %v1892, %v1893
    %v1895 = vrot.slane %v1894, 1
    %v1896 = vadd.f32 %v1894, %v1895
    %vm1897 = vcmp.ge.f32.partialorder %v1896, 1e-16
    %v1898 = vmax.f32 %v1896, 1e-30
    %v1899 = vrsqrt.pop %v1898
    %v1900 = vsel %vm1897, %v1899, 1e+08
    %v1901 = vmul.f32 %v1796, %v1900
    %v1902 = vmul.f32 %v1797, %v1900
    %v1903 = vmul.f32 %v1798, %v1900
    %v1904 = vmul.f32 %v1799, %v1900
    %v1905 = vmul.f32 %v1800, %v1900
    %v1906 = vmul.f32 %v1801, %v1900
    %v1907 = vmul.f32 %v1802, %v1900
    %v1908 = vmul.f32 %v1803, %v1900
    %v1909 = vmul.f32 %v1804, %v1900
    %v1910 = vmul.f32 %v1805, %v1900
    %v1911 = vmul.f32 %v1806, %v1900
    %v1912 = vmul.f32 %v1807, %v1900
    %v1913 = vmul.f32 %v1808, %v1900
    %v1914 = vmul.f32 %v1809, %v1900
    %v1915 = vmul.f32 %v1810, %v1900
    %v1916 = vmul.f32 %v1811, %v1900
    %v1917 = vmul.f32 %v1812, %v1900
    %v1918 = vmul.f32 %v1813, %v1900
    %v1919 = vmul.f32 %v1814, %v1900
    %v1920 = vmul.f32 %v1815, %v1900
    %v1921 = vmul.f32 %v1816, %v1900
    %v1922 = vmul.f32 %v1817, %v1900
    %v1923 = vmul.f32 %v1818, %v1900
    %v1924 = vmul.f32 %v1819, %v1900
    %v1925 = vmul.f32 %v1820, %v1900
    %v1926 = vmul.f32 %v1821, %v1900
    %v1927 = vmul.f32 %v1822, %v1900
    %v1928 = vmul.f32 %v1823, %v1900
    %v1929 = vmul.f32 %v1824, %v1900
    %v1930 = vmul.f32 %v1825, %v1900
    %v1931 = vmul.f32 %v1826, %v1900
    %v1932 = vmul.f32 %v1827, %v1900
    %1933 = vst [vmem:[%s12] sm:$0xff] %v1901
    %1934 = vst [vmem:[%s12 + $0x8] sm:$0xff] %v1902
    %1935 = vst [vmem:[%s12 + $0x10] sm:$0xff] %v1903
    %1936 = vst [vmem:[%s12 + $0x18] sm:$0xff] %v1904
    %1937 = vst [vmem:[%s12 + $0x20] sm:$0xff] %v1905
    %1938 = vst [vmem:[%s12 + $0x28] sm:$0xff] %v1906
    %1939 = vst [vmem:[%s12 + $0x30] sm:$0xff] %v1907
    %1940 = vst [vmem:[%s12 + $0x38] sm:$0xff] %v1908
    %1941 = vst [vmem:[%s12 + $0x40] sm:$0xff] %v1909
    %1942 = vst [vmem:[%s12 + $0x48] sm:$0xff] %v1910
    %1943 = vst [vmem:[%s12 + $0x50] sm:$0xff] %v1911
    %1944 = vst [vmem:[%s12 + $0x58] sm:$0xff] %v1912
    %1945 = vst [vmem:[%s12 + $0x60] sm:$0xff] %v1913
    %1946 = vst [vmem:[%s12 + $0x68] sm:$0xff] %v1914
    %1947 = vst [vmem:[%s12 + $0x70] sm:$0xff] %v1915
    %1948 = vst [vmem:[%s12 + $0x78] sm:$0xff] %v1916
    %1949 = vst [vmem:[%s12 + $0x80] sm:$0xff] %v1917
    %1950 = vst [vmem:[%s12 + $0x88] sm:$0xff] %v1918
    %1951 = vst [vmem:[%s12 + $0x90] sm:$0xff] %v1919
    %1952 = vst [vmem:[%s12 + $0x98] sm:$0xff] %v1920
    %1953 = vst [vmem:[%s12 + $0xa0] sm:$0xff] %v1921
    %1954 = vst [vmem:[%s12 + $0xa8] sm:$0xff] %v1922
    %1955 = vst [vmem:[%s12 + $0xb0] sm:$0xff] %v1923
    %1956 = vst [vmem:[%s12 + $0xb8] sm:$0xff] %v1924
    %1957 = vst [vmem:[%s12 + $0xc0] sm:$0xff] %v1925
    %1958 = vst [vmem:[%s12 + $0xc8] sm:$0xff] %v1926
    %1959 = vst [vmem:[%s12 + $0xd0] sm:$0xff] %v1927
    %1960 = vst [vmem:[%s12 + $0xd8] sm:$0xff] %v1928
    %1961 = vst [vmem:[%s12 + $0xe0] sm:$0xff] %v1929
    %1962 = vst [vmem:[%s12 + $0xe8] sm:$0xff] %v1930
    %1963 = vst [vmem:[%s12 + $0xf0] sm:$0xff] %v1931
    %1964 = vst [vmem:[%s12 + $0xf8] sm:$0xff] %v1932
    %v1965 = vmul.f32 %v1901, %v1901
    %v1966 = vmul.f32 %v1902, %v1902
    %v1967 = vmul.f32 %v1903, %v1903
    %v1968 = vmul.f32 %v1904, %v1904
    %v1969 = vmul.f32 %v1905, %v1905
    %v1970 = vmul.f32 %v1906, %v1906
    %v1971 = vmul.f32 %v1907, %v1907
    %v1972 = vmul.f32 %v1908, %v1908
    %v1973 = vmul.f32 %v1909, %v1909
    %v1974 = vmul.f32 %v1910, %v1910
    %v1975 = vmul.f32 %v1911, %v1911
    %v1976 = vmul.f32 %v1912, %v1912
    %v1977 = vmul.f32 %v1913, %v1913
    %v1978 = vmul.f32 %v1914, %v1914
    %v1979 = vmul.f32 %v1915, %v1915
    %v1980 = vmul.f32 %v1916, %v1916
    %v1981 = vmul.f32 %v1917, %v1917
    %v1982 = vmul.f32 %v1918, %v1918
    %v1983 = vmul.f32 %v1919, %v1919
    %v1984 = vmul.f32 %v1920, %v1920
    %v1985 = vmul.f32 %v1921, %v1921
    %v1986 = vmul.f32 %v1922, %v1922
    %v1987 = vmul.f32 %v1923, %v1923
    %v1988 = vmul.f32 %v1924, %v1924
    %v1989 = vmul.f32 %v1925, %v1925
    %v1990 = vmul.f32 %v1926, %v1926
    %v1991 = vmul.f32 %v1927, %v1927
    %v1992 = vmul.f32 %v1928, %v1928
    %v1993 = vmul.f32 %v1929, %v1929
    %v1994 = vmul.f32 %v1930, %v1930
    %v1995 = vmul.f32 %v1931, %v1931
    %v1996 = vmul.f32 %v1932, %v1932
    %v1997 = vadd.f32 %v1965, %v1966
    %v1998 = vadd.f32 %v1997, %v1967
    %v1999 = vadd.f32 %v1998, %v1968
    %v2000 = vadd.f32 %v1999, %v1969
    %v2001 = vadd.f32 %v2000, %v1970
    %v2002 = vadd.f32 %v2001, %v1971
    %v2003 = vadd.f32 %v2002, %v1972
    %v2004 = vadd.f32 %v2003, %v1973
    %v2005 = vadd.f32 %v2004, %v1974
    %v2006 = vadd.f32 %v2005, %v1975
    %v2007 = vadd.f32 %v2006, %v1976
    %v2008 = vadd.f32 %v2007, %v1977
    %v2009 = vadd.f32 %v2008, %v1978
    %v2010 = vadd.f32 %v2009, %v1979
    %v2011 = vadd.f32 %v2010, %v1980
    %v2012 = vadd.f32 %v2011, %v1981
    %v2013 = vadd.f32 %v2012, %v1982
    %v2014 = vadd.f32 %v2013, %v1983
    %v2015 = vadd.f32 %v2014, %v1984
    %v2016 = vadd.f32 %v2015, %v1985
    %v2017 = vadd.f32 %v2016, %v1986
    %v2018 = vadd.f32 %v2017, %v1987
    %v2019 = vadd.f32 %v2018, %v1988
    %v2020 = vadd.f32 %v2019, %v1989
    %v2021 = vadd.f32 %v2020, %v1990
    %v2022 = vadd.f32 %v2021, %v1991
    %v2023 = vadd.f32 %v2022, %v1992
    %v2024 = vadd.f32 %v2023, %v1993
    %v2025 = vadd.f32 %v2024, %v1994
    %v2026 = vadd.f32 %v2025, %v1995
    %v2027 = vadd.f32 %v2026, %v1996
    %v2028 = vrot.slane %v2027, 4
    %v2029 = vadd.f32 %v2027, %v2028
    %v2030 = vrot.slane %v2029, 2
    %v2031 = vadd.f32 %v2029, %v2030
    %v2032 = vrot.slane %v2031, 1
    %v2033 = vadd.f32 %v2031, %v2032
    %v2034 = vrsqrt.pop %v2033
    %v2035 = vmul.f32 %v2033, %v2034
    %vm2036 = vcmp.eq.f32.partialorder %v2033, inf
    %v2037 = vsel %vm2036, %v2033, %v2035
    %vm2038 = vcmp.eq.f32.partialorder %v2033, 0.0
    %v2039 = vand.u32 %v2033, 2147483648
    %v2040 = vsel %vm2038, %v2039, %v2037
    %2041 = vst [vmem:[%s16] sm:$0x1] %v2040
    %v2042 = vld [vmem:[%s6] sm:$0xff]
    %v2043 = vld [vmem:[%s6 + $0x8] sm:$0xff]
    %v2044 = vld [vmem:[%s6 + $0x10] sm:$0xff]
    %v2045 = vld [vmem:[%s6 + $0x18] sm:$0xff]
    %v2046 = vld [vmem:[%s6 + $0x20] sm:$0xff]
    %v2047 = vld [vmem:[%s6 + $0x28] sm:$0xff]
    %v2048 = vld [vmem:[%s6 + $0x30] sm:$0xff]
    %v2049 = vld [vmem:[%s6 + $0x38] sm:$0xff]
    %v2050 = vld [vmem:[%s6 + $0x40] sm:$0xff]
    %v2051 = vld [vmem:[%s6 + $0x48] sm:$0xff]
    %v2052 = vld [vmem:[%s6 + $0x50] sm:$0xff]
    %v2053 = vld [vmem:[%s6 + $0x58] sm:$0xff]
    %v2054 = vld [vmem:[%s6 + $0x60] sm:$0xff]
    %v2055 = vld [vmem:[%s6 + $0x68] sm:$0xff]
    %v2056 = vld [vmem:[%s6 + $0x70] sm:$0xff]
    %v2057 = vld [vmem:[%s6 + $0x78] sm:$0xff]
    %v2058 = vld [vmem:[%s7] sm:$0x1]
    %v2060 = vlaneseq
    %v2061 = vshrl.u32 %v2060, 7
    %v2062 = vsub.s32 0, %v2061
    %v2063 = vrot.slane %v2058, %v2062
    %2065 = vmatprep.subr.mxu0 0.0
    %2066 = vmatpush1.msra.mxu0 %v2042
    %2067 = vmatprep.subr.mxu0 0.0
    %2068 = vmatpush1.msra.mxu0 %v2043
    %2069 = vmatprep.subr.mxu0 0.0
    %2070 = vmatpush1.msra.mxu0 %v2044
    %2071 = vmatprep.subr.mxu0 0.0
    %2072 = vmatpush1.msra.mxu0 %v2045
    %2073 = vmatprep.subr.mxu0 0.0
    %2074 = vmatpush1.msra.mxu0 %v2046
    %2075 = vmatprep.subr.mxu0 0.0
    %2076 = vmatpush1.msra.mxu0 %v2047
    %2077 = vmatprep.subr.mxu0 0.0
    %2078 = vmatpush1.msra.mxu0 %v2048
    %2079 = vmatprep.subr.mxu0 0.0
    %2080 = vmatpush1.msra.mxu0 %v2049
    %2081 = vmatprep.subr.mxu0 0.0
    %2082 = vmatpush1.msra.mxu0 %v2050
    %2083 = vmatprep.subr.mxu0 0.0
    %2084 = vmatpush1.msra.mxu0 %v2051
    %2085 = vmatprep.subr.mxu0 0.0
    %2086 = vmatpush1.msra.mxu0 %v2052
    %2087 = vmatprep.subr.mxu0 0.0
    %2088 = vmatpush1.msra.mxu0 %v2053
    %2089 = vmatprep.subr.mxu0 0.0
    %2090 = vmatpush1.msra.mxu0 %v2054
    %2091 = vmatprep.subr.mxu0 0.0
    %2092 = vmatpush1.msra.mxu0 %v2055
    %2093 = vmatprep.subr.mxu0 0.0
    %2094 = vmatpush1.msra.mxu0 %v2056
    %2095 = vmatprep.subr.mxu0 0.0
    %2096 = vmatpush1.msra.mxu0 %v2057
    %2097 = vmatprep.subr.mxu0 0.0
    %2098 = vmatpush1.msra.mxu0 0.0
    %2099 = vmatprep.subr.mxu0 0.0
    %2100 = vmatpush1.msra.mxu0 0.0
    %2101 = vmatprep.subr.mxu0 0.0
    %2102 = vmatpush1.msra.mxu0 0.0
    %2103 = vmatprep.subr.mxu0 0.0
    %2104 = vmatpush1.msra.mxu0 0.0
    %2105 = vmatprep.subr.mxu0 0.0
    %2106 = vmatpush1.msra.mxu0 0.0
    %2107 = vmatprep.subr.mxu0 0.0
    %2108 = vmatpush1.msra.mxu0 0.0
    %2109 = vmatprep.subr.mxu0 0.0
    %2110 = vmatpush1.msra.mxu0 0.0
    %2111 = vmatprep.subr.mxu0 0.0
    %2112 = vmatpush1.msra.mxu0 0.0
    %2113 = vmatprep.subr.mxu0 0.0
    %2114 = vmatpush1.msra.mxu0 0.0
    %2115 = vmatprep.subr.mxu0 0.0
    %2116 = vmatpush1.msra.mxu0 0.0
    %2117 = vmatprep.subr.mxu0 0.0
    %2118 = vmatpush1.msra.mxu0 0.0
    %2119 = vmatprep.subr.mxu0 0.0
    %2120 = vmatpush1.msra.mxu0 0.0
    %2121 = vmatprep.subr.mxu0 0.0
    %2122 = vmatpush1.msra.mxu0 0.0
    %2123 = vmatprep.subr.mxu0 0.0
    %2124 = vmatpush1.msra.mxu0 0.0
    %2125 = vmatprep.subr.mxu0 0.0
    %2126 = vmatpush1.msra.mxu0 0.0
    %2127 = vmatprep.subr.mxu0 0.0
    %2128 = vmatpush1.msra.mxu0 0.0
    %2129 = vmatprep.mubr.f32.mxu0 0.0
    %2130 = vmatmul.mubr.f32.gmra.mrb[0].mxu0 %v1136
    %v2131 = vpop.f32.mrb[0].mxu0
    %v2132 = vadd.f32 %v2063, %v2131
    %v2133 = vpop.f32.mrb[0].mxu0
    %2134 = vdwg.mxu0
    %v2135 = vmax.f32 %v2132, 0.0
    %v2136 = vmul.f32 %v2135, 6.25e-06
    %2138 = vrot.lane.b32.xlu0 %v1136, 64
    %v2139 = vpop.permute.xlu0 %2138
    %2142 = vrot.lane.b32.xlu0 %v59, 64
    %v2143 = vpop.permute.xlu0 %2142
    %vm2145 = vcmask 523264
    %v2146 = vsel %vm2145, %v2135, %v2139
    %v2147 = vsel %vm2145, %v2139, %v2143
    %2148 = vxpose.xlu0.b32.start [1/16] %v2146, 128
    %2149 = vxpose.xlu0.b32.cont [2/16] 0.0, 128
    %2150 = vxpose.xlu0.b32.cont [3/16] 0.0, 128
    %2151 = vxpose.xlu0.b32.cont [4/16] 0.0, 128
    %2152 = vxpose.xlu0.b32.cont [5/16] 0.0, 128
    %2153 = vxpose.xlu0.b32.cont [6/16] 0.0, 128
    %2154 = vxpose.xlu0.b32.cont [7/16] 0.0, 128
    %2155 = vxpose.xlu0.b32.cont [8/16] 0.0, 128
    %2156 = vxpose.xlu0.b32.cont [9/16] 0.0, 128
    %2157 = vxpose.xlu0.b32.cont [10/16] 0.0, 128
    %2158 = vxpose.xlu0.b32.cont [11/16] 0.0, 128
    %2159 = vxpose.xlu0.b32.cont [12/16] 0.0, 128
    %2160 = vxpose.xlu0.b32.cont [13/16] 0.0, 128
    %2161 = vxpose.xlu0.b32.cont [14/16] 0.0, 128
    %2162 = vxpose.xlu0.b32.cont [15/16] 0.0, 128
    %2163 = vxpose.xlu0.b32.end [16/16] 0.0, 128
    %v2164 = vpop.trf.xlu0
    %v2165 = vpop.trf.xlu0
    %v2166 = vpop.trf.xlu0
    %v2167 = vpop.trf.xlu0
    %v2168 = vpop.trf.xlu0
    %v2169 = vpop.trf.xlu0
    %v2170 = vpop.trf.xlu0
    %v2171 = vpop.trf.xlu0
    %v2172 = vpop.trf.xlu0
    %v2173 = vpop.trf.xlu0
    %v2174 = vpop.trf.xlu0
    %v2175 = vpop.trf.xlu0
    %v2176 = vpop.trf.xlu0
    %v2177 = vpop.trf.xlu0
    %v2178 = vpop.trf.xlu0
    %v2179 = vpop.trf.xlu0
    %2180 = vxpose.xlu0.b32.start [1/16] %v2147, 128
    %2181 = vxpose.xlu0.b32.cont [2/16] 0.0, 128
    %2182 = vxpose.xlu0.b32.cont [3/16] 0.0, 128
    %2183 = vxpose.xlu0.b32.cont [4/16] 0.0, 128
    %2184 = vxpose.xlu0.b32.cont [5/16] 0.0, 128
    %2185 = vxpose.xlu0.b32.cont [6/16] 0.0, 128
    %2186 = vxpose.xlu0.b32.cont [7/16] 0.0, 128
    %2187 = vxpose.xlu0.b32.cont [8/16] 0.0, 128
    %2188 = vxpose.xlu0.b32.cont [9/16] 0.0, 128
    %2189 = vxpose.xlu0.b32.cont [10/16] 0.0, 128
    %2190 = vxpose.xlu0.b32.cont [11/16] 0.0, 128
    %2191 = vxpose.xlu0.b32.cont [12/16] 0.0, 128
    %2192 = vxpose.xlu0.b32.cont [13/16] 0.0, 128
    %2193 = vxpose.xlu0.b32.cont [14/16] 0.0, 128
    %2194 = vxpose.xlu0.b32.cont [15/16] 0.0, 128
    %2195 = vxpose.xlu0.b32.end [16/16] 0.0, 128
    %v2196 = vpop.trf.xlu0
    %v2197 = vpop.trf.xlu0
    %v2198 = vpop.trf.xlu0
    %v2199 = vpop.trf.xlu0
    %v2200 = vpop.trf.xlu0
    %v2201 = vpop.trf.xlu0
    %v2202 = vpop.trf.xlu0
    %v2203 = vpop.trf.xlu0
    %v2204 = vpop.trf.xlu0
    %v2205 = vpop.trf.xlu0
    %v2206 = vpop.trf.xlu0
    %v2207 = vpop.trf.xlu0
    %v2208 = vpop.trf.xlu0
    %v2209 = vpop.trf.xlu0
    %v2210 = vpop.trf.xlu0
    %v2211 = vpop.trf.xlu0
    %v2213 = vsel %vm255, %v2164, 0
    %v2216 = vsel %vm255, %v2165, 0
    %v2219 = vsel %vm255, %v2166, 0
    %v2222 = vsel %vm255, %v2167, 0
    %v2225 = vsel %vm255, %v2168, 0
    %v2228 = vsel %vm255, %v2169, 0
    %v2231 = vsel %vm255, %v2170, 0
    %v2234 = vsel %vm255, %v2171, 0
    %v2237 = vsel %vm255, %v2172, 0
    %v2240 = vsel %vm255, %v2173, 0
    %v2243 = vsel %vm255, %v2174, 0
    %v2246 = vsel %vm255, %v2175, 0
    %v2249 = vsel %vm255, %v2176, 0
    %v2252 = vsel %vm255, %v2177, 0
    %v2255 = vsel %vm255, %v2178, 0
    %v2258 = vsel %vm255, %v2179, 0
    %v2261 = vsel %vm255, %v2196, 0
    %v2264 = vsel %vm255, %v2197, 0
    %v2267 = vsel %vm255, %v2198, 0
    %v2270 = vsel %vm255, %v2199, 0
    %v2273 = vsel %vm255, %v2200, 0
    %v2276 = vsel %vm255, %v2201, 0
    %v2279 = vsel %vm255, %v2202, 0
    %v2282 = vsel %vm255, %v2203, 0
    %v2285 = vsel %vm255, %v2204, 0
    %v2288 = vsel %vm255, %v2205, 0
    %2290 = vmatprep.subr.mxu0 0.0
    %2291 = vmatpush1.msra.mxu0 %v2136
    %2292 = vmatprep.subr.mxu0 0.0
    %2293 = vmatpush1.msra.mxu0 0.0
    %2294 = vmatprep.subr.mxu0 0.0
    %2295 = vmatpush1.msra.mxu0 0.0
    %2296 = vmatprep.subr.mxu0 0.0
    %2297 = vmatpush1.msra.mxu0 0.0
    %2298 = vmatprep.subr.mxu0 0.0
    %2299 = vmatpush1.msra.mxu0 0.0
    %2300 = vmatprep.subr.mxu0 0.0
    %2301 = vmatpush1.msra.mxu0 0.0
    %2302 = vmatprep.subr.mxu0 0.0
    %2303 = vmatpush1.msra.mxu0 0.0
    %2304 = vmatprep.subr.mxu0 0.0
    %2305 = vmatpush1.msra.mxu0 0.0
    %2306 = vmatprep.subr.mxu0 0.0
    %2307 = vmatpush1.msra.mxu0 0.0
    %2308 = vmatprep.subr.mxu0 0.0
    %2309 = vmatpush1.msra.mxu0 0.0
    %2310 = vmatprep.subr.mxu0 0.0
    %2311 = vmatpush1.msra.mxu0 0.0
    %2312 = vmatprep.subr.mxu0 0.0
    %2313 = vmatpush1.msra.mxu0 0.0
    %2314 = vmatprep.subr.mxu0 0.0
    %2315 = vmatpush1.msra.mxu0 0.0
    %2316 = vmatprep.subr.mxu0 0.0
    %2317 = vmatpush1.msra.mxu0 0.0
    %2318 = vmatprep.subr.mxu0 0.0
    %2319 = vmatpush1.msra.mxu0 0.0
    %2320 = vmatprep.subr.mxu0 0.0
    %2321 = vmatpush1.msra.mxu0 0.0
    %2322 = vmatprep.subr.mxu0 0.0
    %2323 = vmatpush1.msra.mxu0 0.0
    %2324 = vmatprep.subr.mxu0 0.0
    %2325 = vmatpush1.msra.mxu0 0.0
    %2326 = vmatprep.subr.mxu0 0.0
    %2327 = vmatpush1.msra.mxu0 0.0
    %2328 = vmatprep.subr.mxu0 0.0
    %2329 = vmatpush1.msra.mxu0 0.0
    %2330 = vmatprep.subr.mxu0 0.0
    %2331 = vmatpush1.msra.mxu0 0.0
    %2332 = vmatprep.subr.mxu0 0.0
    %2333 = vmatpush1.msra.mxu0 0.0
    %2334 = vmatprep.subr.mxu0 0.0
    %2335 = vmatpush1.msra.mxu0 0.0
    %2336 = vmatprep.subr.mxu0 0.0
    %2337 = vmatpush1.msra.mxu0 0.0
    %2338 = vmatprep.subr.mxu0 0.0
    %2339 = vmatpush1.msra.mxu0 0.0
    %2340 = vmatprep.subr.mxu0 0.0
    %2341 = vmatpush1.msra.mxu0 0.0
    %2342 = vmatprep.subr.mxu0 0.0
    %2343 = vmatpush1.msra.mxu0 0.0
    %2344 = vmatprep.subr.mxu0 0.0
    %2345 = vmatpush1.msra.mxu0 0.0
    %2346 = vmatprep.subr.mxu0 0.0
    %2347 = vmatpush1.msra.mxu0 0.0
    %2348 = vmatprep.subr.mxu0 0.0
    %2349 = vmatpush1.msra.mxu0 0.0
    %2350 = vmatprep.subr.mxu0 0.0
    %2351 = vmatpush1.msra.mxu0 0.0
    %2352 = vmatprep.subr.mxu0 0.0
    %2353 = vmatpush1.msra.mxu0 0.0
    %2354 = vmatprep.mubr.f32.mxu0 0.0
    %2355 = vmatmul.mubr.f32.gmra.mrb[0].mxu0 %v2213
    %v2356 = vpop.f32.mrb[0].mxu0
    %v2357 = vadd.f32 0.0, %v2356
    %v2358 = vpop.f32.mrb[0].mxu0
    %2359 = vmatprep.mubr.f32.mxu0 0.0
    %2360 = vmatmul.mubr.f32.gmra.mrb[0].mxu0 %v2216
    %v2361 = vpop.f32.mrb[0].mxu0
    %v2362 = vadd.f32 0.0, %v2361
    %v2363 = vpop.f32.mrb[0].mxu0
    %2364 = vmatprep.mubr.f32.mxu0 0.0
    %2365 = vmatmul.mubr.f32.gmra.mrb[0].mxu0 %v2219
    %v2366 = vpop.f32.mrb[0].mxu0
    %v2367 = vadd.f32 0.0, %v2366
    %v2368 = vpop.f32.mrb[0].mxu0
    %2369 = vmatprep.mubr.f32.mxu0 0.0
    %2370 = vmatmul.mubr.f32.gmra.mrb[0].mxu0 %v2222
    %v2371 = vpop.f32.mrb[0].mxu0
    %v2372 = vadd.f32 0.0, %v2371
    %v2373 = vpop.f32.mrb[0].mxu0
    %2374 = vmatprep.mubr.f32.mxu0 0.0
    %2375 = vmatmul.mubr.f32.gmra.mrb[0].mxu0 %v2225
    %v2376 = vpop.f32.mrb[0].mxu0
    %v2377 = vadd.f32 0.0, %v2376
    %v2378 = vpop.f32.mrb[0].mxu0
    %2379 = vmatprep.mubr.f32.mxu0 0.0
    %2380 = vmatmul.mubr.f32.gmra.mrb[0].mxu0 %v2228
    %v2381 = vpop.f32.mrb[0].mxu0
    %v2382 = vadd.f32 0.0, %v2381
    %v2383 = vpop.f32.mrb[0].mxu0
    %2384 = vmatprep.mubr.f32.mxu0 0.0
    %2385 = vmatmul.mubr.f32.gmra.mrb[0].mxu0 %v2231
    %v2386 = vpop.f32.mrb[0].mxu0
    %v2387 = vadd.f32 0.0, %v2386
    %v2388 = vpop.f32.mrb[0].mxu0
    %2389 = vmatprep.mubr.f32.mxu0 0.0
    %2390 = vmatmul.mubr.f32.gmra.mrb[0].mxu0 %v2234
    %v2391 = vpop.f32.mrb[0].mxu0
    %v2392 = vadd.f32 0.0, %v2391
    %v2393 = vpop.f32.mrb[0].mxu0
    %2394 = vmatprep.mubr.f32.mxu0 0.0
    %2395 = vmatmul.mubr.f32.gmra.mrb[0].mxu0 %v2237
    %v2396 = vpop.f32.mrb[0].mxu0
    %v2397 = vadd.f32 0.0, %v2396
    %v2398 = vpop.f32.mrb[0].mxu0
    %2399 = vmatprep.mubr.f32.mxu0 0.0
    %2400 = vmatmul.mubr.f32.gmra.mrb[0].mxu0 %v2240
    %v2401 = vpop.f32.mrb[0].mxu0
    %v2402 = vadd.f32 0.0, %v2401
    %v2403 = vpop.f32.mrb[0].mxu0
    %2404 = vmatprep.mubr.f32.mxu0 0.0
    %2405 = vmatmul.mubr.f32.gmra.mrb[0].mxu0 %v2243
    %v2406 = vpop.f32.mrb[0].mxu0
    %v2407 = vadd.f32 0.0, %v2406
    %v2408 = vpop.f32.mrb[0].mxu0
    %2409 = vmatprep.mubr.f32.mxu0 0.0
    %2410 = vmatmul.mubr.f32.gmra.mrb[0].mxu0 %v2246
    %v2411 = vpop.f32.mrb[0].mxu0
    %v2412 = vadd.f32 0.0, %v2411
    %v2413 = vpop.f32.mrb[0].mxu0
    %2414 = vmatprep.mubr.f32.mxu0 0.0
    %2415 = vmatmul.mubr.f32.gmra.mrb[0].mxu0 %v2249
    %v2416 = vpop.f32.mrb[0].mxu0
    %v2417 = vadd.f32 0.0, %v2416
    %v2418 = vpop.f32.mrb[0].mxu0
    %2419 = vmatprep.mubr.f32.mxu0 0.0
    %2420 = vmatmul.mubr.f32.gmra.mrb[0].mxu0 %v2252
    %v2421 = vpop.f32.mrb[0].mxu0
    %v2422 = vadd.f32 0.0, %v2421
    %v2423 = vpop.f32.mrb[0].mxu0
    %2424 = vmatprep.mubr.f32.mxu0 0.0
    %2425 = vmatmul.mubr.f32.gmra.mrb[0].mxu0 %v2255
    %v2426 = vpop.f32.mrb[0].mxu0
    %v2427 = vadd.f32 0.0, %v2426
    %v2428 = vpop.f32.mrb[0].mxu0
    %2429 = vmatprep.mubr.f32.mxu0 0.0
    %2430 = vmatmul.mubr.f32.gmra.mrb[0].mxu0 %v2258
    %v2431 = vpop.f32.mrb[0].mxu0
    %v2432 = vadd.f32 0.0, %v2431
    %v2433 = vpop.f32.mrb[0].mxu0
    %2434 = vmatprep.mubr.f32.mxu0 0.0
    %2435 = vmatmul.mubr.f32.gmra.mrb[0].mxu0 %v2261
    %v2436 = vpop.f32.mrb[0].mxu0
    %v2437 = vadd.f32 0.0, %v2436
    %v2438 = vpop.f32.mrb[0].mxu0
    %2439 = vmatprep.mubr.f32.mxu0 0.0
    %2440 = vmatmul.mubr.f32.gmra.mrb[0].mxu0 %v2264
    %v2441 = vpop.f32.mrb[0].mxu0
    %v2442 = vadd.f32 0.0, %v2441
    %v2443 = vpop.f32.mrb[0].mxu0
    %2444 = vmatprep.mubr.f32.mxu0 0.0
    %2445 = vmatmul.mubr.f32.gmra.mrb[0].mxu0 %v2267
    %v2446 = vpop.f32.mrb[0].mxu0
    %v2447 = vadd.f32 0.0, %v2446
    %v2448 = vpop.f32.mrb[0].mxu0
    %2449 = vmatprep.mubr.f32.mxu0 0.0
    %2450 = vmatmul.mubr.f32.gmra.mrb[0].mxu0 %v2270
    %v2451 = vpop.f32.mrb[0].mxu0
    %v2452 = vadd.f32 0.0, %v2451
    %v2453 = vpop.f32.mrb[0].mxu0
    %2454 = vmatprep.mubr.f32.mxu0 0.0
    %2455 = vmatmul.mubr.f32.gmra.mrb[0].mxu0 %v2273
    %v2456 = vpop.f32.mrb[0].mxu0
    %v2457 = vadd.f32 0.0, %v2456
    %v2458 = vpop.f32.mrb[0].mxu0
    %2459 = vmatprep.mubr.f32.mxu0 0.0
    %2460 = vmatmul.mubr.f32.gmra.mrb[0].mxu0 %v2276
    %v2461 = vpop.f32.mrb[0].mxu0
    %v2462 = vadd.f32 0.0, %v2461
    %v2463 = vpop.f32.mrb[0].mxu0
    %2464 = vmatprep.mubr.f32.mxu0 0.0
    %2465 = vmatmul.mubr.f32.gmra.mrb[0].mxu0 %v2279
    %v2466 = vpop.f32.mrb[0].mxu0
    %v2467 = vadd.f32 0.0, %v2466
    %v2468 = vpop.f32.mrb[0].mxu0
    %2469 = vmatprep.mubr.f32.mxu0 0.0
    %2470 = vmatmul.mubr.f32.gmra.mrb[0].mxu0 %v2282
    %v2471 = vpop.f32.mrb[0].mxu0
    %v2472 = vadd.f32 0.0, %v2471
    %v2473 = vpop.f32.mrb[0].mxu0
    %2474 = vmatprep.mubr.f32.mxu0 0.0
    %2475 = vmatmul.mubr.f32.gmra.mrb[0].mxu0 %v2285
    %v2476 = vpop.f32.mrb[0].mxu0
    %v2477 = vadd.f32 0.0, %v2476
    %v2478 = vpop.f32.mrb[0].mxu0
    %2479 = vmatprep.mubr.f32.mxu0 0.0
    %2480 = vmatmul.mubr.f32.gmra.mrb[0].mxu0 %v2288
    %v2481 = vpop.f32.mrb[0].mxu0
    %v2482 = vadd.f32 0.0, %v2481
    %v2483 = vpop.f32.mrb[0].mxu0
    %2484 = vdwg.mxu0
    %v2485 = vsel %vm681, %v2357, 0.0
    %v2486 = vsel %vm683, %v2362, 0.0
    %v2487 = vsel %vm685, %v2367, 0.0
    %v2488 = vsel %vm687, %v2372, 0.0
    %v2489 = vsel %vm689, %v2377, 0.0
    %v2490 = vsel %vm691, %v2382, 0.0
    %v2491 = vsel %vm693, %v2387, 0.0
    %v2492 = vsel %vm695, %v2392, 0.0
    %v2494 = vsel %vm2145, %v2042, 0
    %v2497 = vsel %vm2145, %v2043, 0
    %v2500 = vsel %vm2145, %v2044, 0
    %v2503 = vsel %vm2145, %v2045, 0
    %v2506 = vsel %vm2145, %v2046, 0
    %v2509 = vsel %vm2145, %v2047, 0
    %v2512 = vsel %vm2145, %v2048, 0
    %v2515 = vsel %vm2145, %v2049, 0
    %v2518 = vsel %vm2145, %v2050, 0
    %v2521 = vsel %vm2145, %v2051, 0
    %v2524 = vsel %vm2145, %v2052, 0
    %v2527 = vsel %vm2145, %v2053, 0
    %v2530 = vsel %vm2145, %v2054, 0
    %v2533 = vsel %vm2145, %v2055, 0
    %v2536 = vsel %vm2145, %v2056, 0
    %v2539 = vsel %vm2145, %v2057, 0
    %2541 = vmatprep.subr.mxu0 0.0
    %2542 = vmatpush1.msra.mxu0 %v2485
    %2543 = vmatprep.subr.mxu0 0.0
    %2544 = vmatpush1.msra.mxu0 %v2486
    %2545 = vmatprep.subr.mxu0 0.0
    %2546 = vmatpush1.msra.mxu0 %v2487
    %2547 = vmatprep.subr.mxu0 0.0
    %2548 = vmatpush1.msra.mxu0 %v2488
    %2549 = vmatprep.subr.mxu0 0.0
    %2550 = vmatpush1.msra.mxu0 %v2489
    %2551 = vmatprep.subr.mxu0 0.0
    %2552 = vmatpush1.msra.mxu0 %v2490
    %2553 = vmatprep.subr.mxu0 0.0
    %2554 = vmatpush1.msra.mxu0 %v2491
    %2555 = vmatprep.subr.mxu0 0.0
    %2556 = vmatpush1.msra.mxu0 %v2492
    %2557 = vmatprep.subr.mxu0 0.0
    %2558 = vmatpush1.msra.mxu0 0.0
    %2559 = vmatprep.subr.mxu0 0.0
    %2560 = vmatpush1.msra.mxu0 0.0
    %2561 = vmatprep.subr.mxu0 0.0
    %2562 = vmatpush1.msra.mxu0 0.0
    %2563 = vmatprep.subr.mxu0 0.0
    %2564 = vmatpush1.msra.mxu0 0.0
    %2565 = vmatprep.subr.mxu0 0.0
    %2566 = vmatpush1.msra.mxu0 0.0
    %2567 = vmatprep.subr.mxu0 0.0
    %2568 = vmatpush1.msra.mxu0 0.0
    %2569 = vmatprep.subr.mxu0 0.0
    %2570 = vmatpush1.msra.mxu0 0.0
    %2571 = vmatprep.subr.mxu0 0.0
    %2572 = vmatpush1.msra.mxu0 0.0
    %2573 = vmatprep.subr.mxu0 0.0
    %2574 = vmatpush1.msra.mxu0 0.0
    %2575 = vmatprep.subr.mxu0 0.0
    %2576 = vmatpush1.msra.mxu0 0.0
    %2577 = vmatprep.subr.mxu0 0.0
    %2578 = vmatpush1.msra.mxu0 0.0
    %2579 = vmatprep.subr.mxu0 0.0
    %2580 = vmatpush1.msra.mxu0 0.0
    %2581 = vmatprep.subr.mxu0 0.0
    %2582 = vmatpush1.msra.mxu0 0.0
    %2583 = vmatprep.subr.mxu0 0.0
    %2584 = vmatpush1.msra.mxu0 0.0
    %2585 = vmatprep.subr.mxu0 0.0
    %2586 = vmatpush1.msra.mxu0 0.0
    %2587 = vmatprep.subr.mxu0 0.0
    %2588 = vmatpush1.msra.mxu0 0.0
    %2589 = vmatprep.subr.mxu0 0.0
    %2590 = vmatpush1.msra.mxu0 0.0
    %2591 = vmatprep.subr.mxu0 0.0
    %2592 = vmatpush1.msra.mxu0 0.0
    %2593 = vmatprep.subr.mxu0 0.0
    %2594 = vmatpush1.msra.mxu0 0.0
    %2595 = vmatprep.subr.mxu0 0.0
    %2596 = vmatpush1.msra.mxu0 0.0
    %2597 = vmatprep.subr.mxu0 0.0
    %2598 = vmatpush1.msra.mxu0 0.0
    %2599 = vmatprep.subr.mxu0 0.0
    %2600 = vmatpush1.msra.mxu0 0.0
    %2601 = vmatprep.subr.mxu0 0.0
    %2602 = vmatpush1.msra.mxu0 0.0
    %2603 = vmatprep.subr.mxu0 0.0
    %2604 = vmatpush1.msra.mxu0 0.0
    %2605 = vmatprep.mubr.f32.mxu0 0.0
    %2606 = vmatmul.mubr.f32.gmra.mrb[0].mxu0 %v2494
    %v2607 = vpop.f32.mrb[0].mxu0
    %v2608 = vadd.f32 0.0, %v2607
    %v2609 = vpop.f32.mrb[0].mxu0
    %2610 = vmatprep.mubr.f32.mxu0 0.0
    %2611 = vmatmul.mubr.f32.gmra.mrb[0].mxu0 %v2497
    %v2612 = vpop.f32.mrb[0].mxu0
    %v2613 = vadd.f32 0.0, %v2612
    %v2614 = vpop.f32.mrb[0].mxu0
    %2615 = vmatprep.mubr.f32.mxu0 0.0
    %2616 = vmatmul.mubr.f32.gmra.mrb[0].mxu0 %v2500
    %v2617 = vpop.f32.mrb[0].mxu0
    %v2618 = vadd.f32 0.0, %v2617
    %v2619 = vpop.f32.mrb[0].mxu0
    %2620 = vmatprep.mubr.f32.mxu0 0.0
    %2621 = vmatmul.mubr.f32.gmra.mrb[0].mxu0 %v2503
    %v2622 = vpop.f32.mrb[0].mxu0
    %v2623 = vadd.f32 0.0, %v2622
    %v2624 = vpop.f32.mrb[0].mxu0
    %2625 = vmatprep.mubr.f32.mxu0 0.0
    %2626 = vmatmul.mubr.f32.gmra.mrb[0].mxu0 %v2506
    %v2627 = vpop.f32.mrb[0].mxu0
    %v2628 = vadd.f32 0.0, %v2627
    %v2629 = vpop.f32.mrb[0].mxu0
    %2630 = vmatprep.mubr.f32.mxu0 0.0
    %2631 = vmatmul.mubr.f32.gmra.mrb[0].mxu0 %v2509
    %v2632 = vpop.f32.mrb[0].mxu0
    %v2633 = vadd.f32 0.0, %v2632
    %v2634 = vpop.f32.mrb[0].mxu0
    %2635 = vmatprep.mubr.f32.mxu0 0.0
    %2636 = vmatmul.mubr.f32.gmra.mrb[0].mxu0 %v2512
    %v2637 = vpop.f32.mrb[0].mxu0
    %v2638 = vadd.f32 0.0, %v2637
    %v2639 = vpop.f32.mrb[0].mxu0
    %2640 = vmatprep.mubr.f32.mxu0 0.0
    %2641 = vmatmul.mubr.f32.gmra.mrb[0].mxu0 %v2515
    %v2642 = vpop.f32.mrb[0].mxu0
    %v2643 = vadd.f32 0.0, %v2642
    %v2644 = vpop.f32.mrb[0].mxu0
    %2645 = vmatprep.mubr.f32.mxu0 0.0
    %2646 = vmatmul.mubr.f32.gmra.mrb[0].mxu0 %v2518
    %v2647 = vpop.f32.mrb[0].mxu0
    %v2648 = vadd.f32 0.0, %v2647
    %v2649 = vpop.f32.mrb[0].mxu0
    %2650 = vmatprep.mubr.f32.mxu0 0.0
    %2651 = vmatmul.mubr.f32.gmra.mrb[0].mxu0 %v2521
    %v2652 = vpop.f32.mrb[0].mxu0
    %v2653 = vadd.f32 0.0, %v2652
    %v2654 = vpop.f32.mrb[0].mxu0
    %2655 = vmatprep.mubr.f32.mxu0 0.0
    %2656 = vmatmul.mubr.f32.gmra.mrb[0].mxu0 %v2524
    %v2657 = vpop.f32.mrb[0].mxu0
    %v2658 = vadd.f32 0.0, %v2657
    %v2659 = vpop.f32.mrb[0].mxu0
    %2660 = vmatprep.mubr.f32.mxu0 0.0
    %2661 = vmatmul.mubr.f32.gmra.mrb[0].mxu0 %v2527
    %v2662 = vpop.f32.mrb[0].mxu0
    %v2663 = vadd.f32 0.0, %v2662
    %v2664 = vpop.f32.mrb[0].mxu0
    %2665 = vmatprep.mubr.f32.mxu0 0.0
    %2666 = vmatmul.mubr.f32.gmra.mrb[0].mxu0 %v2530
    %v2667 = vpop.f32.mrb[0].mxu0
    %v2668 = vadd.f32 0.0, %v2667
    %v2669 = vpop.f32.mrb[0].mxu0
    %2670 = vmatprep.mubr.f32.mxu0 0.0
    %2671 = vmatmul.mubr.f32.gmra.mrb[0].mxu0 %v2533
    %v2672 = vpop.f32.mrb[0].mxu0
    %v2673 = vadd.f32 0.0, %v2672
    %v2674 = vpop.f32.mrb[0].mxu0
    %2675 = vmatprep.mubr.f32.mxu0 0.0
    %2676 = vmatmul.mubr.f32.gmra.mrb[0].mxu0 %v2536
    %v2677 = vpop.f32.mrb[0].mxu0
    %v2678 = vadd.f32 0.0, %v2677
    %v2679 = vpop.f32.mrb[0].mxu0
    %2680 = vmatprep.mubr.f32.mxu0 0.0
    %2681 = vmatmul.mubr.f32.gmra.mrb[0].mxu0 %v2539
    %v2682 = vpop.f32.mrb[0].mxu0
    %v2683 = vadd.f32 0.0, %v2682
    %v2684 = vpop.f32.mrb[0].mxu0
    %2685 = vdwg.mxu0
    %v2686 = vsub.f32 %v2397, %v2608
    %v2687 = vsub.f32 %v2402, %v2613
    %v2688 = vsub.f32 %v2407, %v2618
    %v2689 = vsub.f32 %v2412, %v2623
    %v2690 = vsub.f32 %v2417, %v2628
    %v2691 = vsub.f32 %v2422, %v2633
    %v2692 = vsub.f32 %v2427, %v2638
    %v2693 = vsub.f32 %v2432, %v2643
    %v2694 = vsub.f32 %v2437, %v2648
    %v2695 = vsub.f32 %v2442, %v2653
    %v2696 = vsub.f32 %v2447, %v2658
    %v2697 = vsub.f32 %v2452, %v2663
    %v2698 = vsub.f32 %v2457, %v2668
    %v2699 = vsub.f32 %v2462, %v2673
    %v2700 = vsub.f32 %v2467, %v2678
    %v2701 = vsub.f32 %v2472, %v2683
    %v2702 = vadd.f32 %v2042, %v2686
    %v2703 = vadd.f32 %v2043, %v2687
    %v2704 = vadd.f32 %v2044, %v2688
    %v2705 = vadd.f32 %v2045, %v2689
    %v2706 = vadd.f32 %v2046, %v2690
    %v2707 = vadd.f32 %v2047, %v2691
    %v2708 = vadd.f32 %v2048, %v2692
    %v2709 = vadd.f32 %v2049, %v2693
    %v2710 = vadd.f32 %v2050, %v2694
    %v2711 = vadd.f32 %v2051, %v2695
    %v2712 = vadd.f32 %v2052, %v2696
    %v2713 = vadd.f32 %v2053, %v2697
    %v2714 = vadd.f32 %v2054, %v2698
    %v2715 = vadd.f32 %v2055, %v2699
    %v2716 = vadd.f32 %v2056, %v2700
    %v2717 = vadd.f32 %v2057, %v2701
    %v2718 = vmul.f32 %v2702, %v2702
    %v2719 = vmul.f32 %v2703, %v2703
    %v2720 = vmul.f32 %v2704, %v2704
    %v2721 = vmul.f32 %v2705, %v2705
    %v2722 = vmul.f32 %v2706, %v2706
    %v2723 = vmul.f32 %v2707, %v2707
    %v2724 = vmul.f32 %v2708, %v2708
    %v2725 = vmul.f32 %v2709, %v2709
    %v2726 = vmul.f32 %v2710, %v2710
    %v2727 = vmul.f32 %v2711, %v2711
    %v2728 = vmul.f32 %v2712, %v2712
    %v2729 = vmul.f32 %v2713, %v2713
    %v2730 = vmul.f32 %v2714, %v2714
    %v2731 = vmul.f32 %v2715, %v2715
    %v2732 = vmul.f32 %v2716, %v2716
    %v2733 = vmul.f32 %v2717, %v2717
    %v2734 = vsel %vm2145, %v2718, 0.0
    %v2735 = vsel %vm2145, %v2719, 0.0
    %v2736 = vadd.f32 %v2734, %v2735
    %v2737 = vsel %vm2145, %v2720, 0.0
    %v2738 = vadd.f32 %v2736, %v2737
    %v2739 = vsel %vm2145, %v2721, 0.0
    %v2740 = vadd.f32 %v2738, %v2739
    %v2741 = vsel %vm2145, %v2722, 0.0
    %v2742 = vadd.f32 %v2740, %v2741
    %v2743 = vsel %vm2145, %v2723, 0.0
    %v2744 = vadd.f32 %v2742, %v2743
    %v2745 = vsel %vm2145, %v2724, 0.0
    %v2746 = vadd.f32 %v2744, %v2745
    %v2747 = vsel %vm2145, %v2725, 0.0
    %v2748 = vadd.f32 %v2746, %v2747
    %v2749 = vsel %vm2145, %v2726, 0.0
    %v2750 = vadd.f32 %v2748, %v2749
    %v2751 = vsel %vm2145, %v2727, 0.0
    %v2752 = vadd.f32 %v2750, %v2751
    %v2753 = vsel %vm2145, %v2728, 0.0
    %v2754 = vadd.f32 %v2752, %v2753
    %v2755 = vsel %vm2145, %v2729, 0.0
    %v2756 = vadd.f32 %v2754, %v2755
    %v2757 = vsel %vm2145, %v2730, 0.0
    %v2758 = vadd.f32 %v2756, %v2757
    %v2759 = vsel %vm2145, %v2731, 0.0
    %v2760 = vadd.f32 %v2758, %v2759
    %v2761 = vsel %vm2145, %v2732, 0.0
    %v2762 = vadd.f32 %v2760, %v2761
    %v2763 = vsel %vm2145, %v2733, 0.0
    %v2764 = vadd.f32 %v2762, %v2763
    %v2765 = vrot.slane %v2764, 4
    %v2766 = vadd.f32 %v2764, %v2765
    %v2767 = vrot.slane %v2766, 2
    %v2768 = vadd.f32 %v2766, %v2767
    %v2769 = vrot.slane %v2768, 1
    %v2770 = vadd.f32 %v2768, %v2769
    %vm2771 = vcmp.ge.f32.partialorder %v2770, 1e-16
    %v2772 = vmax.f32 %v2770, 1e-30
    %v2773 = vrsqrt.pop %v2772
    %v2774 = vsel %vm2771, %v2773, 1e+08
    %v2775 = vmul.f32 %v2702, %v2774
    %v2776 = vmul.f32 %v2703, %v2774
    %v2777 = vmul.f32 %v2704, %v2774
    %v2778 = vmul.f32 %v2705, %v2774
    %v2779 = vmul.f32 %v2706, %v2774
    %v2780 = vmul.f32 %v2707, %v2774
    %v2781 = vmul.f32 %v2708, %v2774
    %v2782 = vmul.f32 %v2709, %v2774
    %v2783 = vmul.f32 %v2710, %v2774
    %v2784 = vmul.f32 %v2711, %v2774
    %v2785 = vmul.f32 %v2712, %v2774
    %v2786 = vmul.f32 %v2713, %v2774
    %v2787 = vmul.f32 %v2714, %v2774
    %v2788 = vmul.f32 %v2715, %v2774
    %v2789 = vmul.f32 %v2716, %v2774
    %v2790 = vmul.f32 %v2717, %v2774
    %2791 = vst.msk [vmem:[%s13] sm:$0xff] %vm2145, %v2775
    %2792 = vst.msk [vmem:[%s13 + $0x8] sm:$0xff] %vm2145, %v2776
    %2793 = vst.msk [vmem:[%s13 + $0x10] sm:$0xff] %vm2145, %v2777
    %2794 = vst.msk [vmem:[%s13 + $0x18] sm:$0xff] %vm2145, %v2778
    %2795 = vst.msk [vmem:[%s13 + $0x20] sm:$0xff] %vm2145, %v2779
    %2796 = vst.msk [vmem:[%s13 + $0x28] sm:$0xff] %vm2145, %v2780
    %2797 = vst.msk [vmem:[%s13 + $0x30] sm:$0xff] %vm2145, %v2781
    %2798 = vst.msk [vmem:[%s13 + $0x38] sm:$0xff] %vm2145, %v2782
    %2799 = vst.msk [vmem:[%s13 + $0x40] sm:$0xff] %vm2145, %v2783
    %2800 = vst.msk [vmem:[%s13 + $0x48] sm:$0xff] %vm2145, %v2784
    %2801 = vst.msk [vmem:[%s13 + $0x50] sm:$0xff] %vm2145, %v2785
    %2802 = vst.msk [vmem:[%s13 + $0x58] sm:$0xff] %vm2145, %v2786
    %2803 = vst.msk [vmem:[%s13 + $0x60] sm:$0xff] %vm2145, %v2787
    %2804 = vst.msk [vmem:[%s13 + $0x68] sm:$0xff] %vm2145, %v2788
    %2805 = vst.msk [vmem:[%s13 + $0x70] sm:$0xff] %vm2145, %v2789
    %2806 = vst.msk [vmem:[%s13 + $0x78] sm:$0xff] %vm2145, %v2790
    %v2807 = vmul.f32 %v2775, %v2775
    %v2808 = vmul.f32 %v2776, %v2776
    %v2809 = vmul.f32 %v2777, %v2777
    %v2810 = vmul.f32 %v2778, %v2778
    %v2811 = vmul.f32 %v2779, %v2779
    %v2812 = vmul.f32 %v2780, %v2780
    %v2813 = vmul.f32 %v2781, %v2781
    %v2814 = vmul.f32 %v2782, %v2782
    %v2815 = vmul.f32 %v2783, %v2783
    %v2816 = vmul.f32 %v2784, %v2784
    %v2817 = vmul.f32 %v2785, %v2785
    %v2818 = vmul.f32 %v2786, %v2786
    %v2819 = vmul.f32 %v2787, %v2787
    %v2820 = vmul.f32 %v2788, %v2788
    %v2821 = vmul.f32 %v2789, %v2789
    %v2822 = vmul.f32 %v2790, %v2790
    %v2823 = vsel %vm2145, %v2807, 0.0
    %v2824 = vsel %vm2145, %v2808, 0.0
    %v2825 = vadd.f32 %v2823, %v2824
    %v2826 = vsel %vm2145, %v2809, 0.0
    %v2827 = vadd.f32 %v2825, %v2826
    %v2828 = vsel %vm2145, %v2810, 0.0
    %v2829 = vadd.f32 %v2827, %v2828
    %v2830 = vsel %vm2145, %v2811, 0.0
    %v2831 = vadd.f32 %v2829, %v2830
    %v2832 = vsel %vm2145, %v2812, 0.0
    %v2833 = vadd.f32 %v2831, %v2832
    %v2834 = vsel %vm2145, %v2813, 0.0
    %v2835 = vadd.f32 %v2833, %v2834
    %v2836 = vsel %vm2145, %v2814, 0.0
    %v2837 = vadd.f32 %v2835, %v2836
    %v2838 = vsel %vm2145, %v2815, 0.0
    %v2839 = vadd.f32 %v2837, %v2838
    %v2840 = vsel %vm2145, %v2816, 0.0
    %v2841 = vadd.f32 %v2839, %v2840
    %v2842 = vsel %vm2145, %v2817, 0.0
    %v2843 = vadd.f32 %v2841, %v2842
    %v2844 = vsel %vm2145, %v2818, 0.0
    %v2845 = vadd.f32 %v2843, %v2844
    %v2846 = vsel %vm2145, %v2819, 0.0
    %v2847 = vadd.f32 %v2845, %v2846
    %v2848 = vsel %vm2145, %v2820, 0.0
    %v2849 = vadd.f32 %v2847, %v2848
    %v2850 = vsel %vm2145, %v2821, 0.0
    %v2851 = vadd.f32 %v2849, %v2850
    %v2852 = vsel %vm2145, %v2822, 0.0
    %v2853 = vadd.f32 %v2851, %v2852
    %v2854 = vrot.slane %v2853, 4
    %v2855 = vadd.f32 %v2853, %v2854
    %v2856 = vrot.slane %v2855, 2
    %v2857 = vadd.f32 %v2855, %v2856
    %v2858 = vrot.slane %v2857, 1
    %v2859 = vadd.f32 %v2857, %v2858
    %v2860 = vrsqrt.pop %v2859
    %v2861 = vmul.f32 %v2859, %v2860
    %vm2862 = vcmp.eq.f32.partialorder %v2859, inf
    %v2863 = vsel %vm2862, %v2859, %v2861
    %vm2864 = vcmp.eq.f32.partialorder %v2859, 0.0
    %v2865 = vand.u32 %v2859, 2147483648
    %v2866 = vsel %vm2864, %v2865, %v2863
    %vm2867 = vcmask 516096
    %2868 = vst.msk [vmem:[%s17] sm:$0x1] %vm2867, %v2866
    %v2869 = vld [vmem:[%s8] sm:$0xff]
    %v2870 = vld [vmem:[%s8 + $0x8] sm:$0xff]
    %v2871 = vld [vmem:[%s8 + $0x10] sm:$0xff]
    %v2872 = vld [vmem:[%s8 + $0x18] sm:$0xff]
    %v2873 = vld [vmem:[%s8 + $0x20] sm:$0xff]
    %v2874 = vld [vmem:[%s8 + $0x28] sm:$0xff]
    %v2875 = vld [vmem:[%s8 + $0x30] sm:$0xff]
    %v2876 = vld [vmem:[%s8 + $0x38] sm:$0xff]
    %v2877 = vld [vmem:[%s9] sm:$0x1]
    %v2879 = vlaneseq
    %v2880 = vshrl.u32 %v2879, 7
    %v2881 = vsub.s32 0, %v2880
    %v2882 = vrot.slane %v2877, %v2881
    %v2885 = vsel %vm2145, %v2135, 0
    %2887 = vmatprep.subr.mxu0 0.0
    %2888 = vmatpush1.msra.mxu0 %v2869
    %2889 = vmatprep.subr.mxu0 0.0
    %2890 = vmatpush1.msra.mxu0 %v2870
    %2891 = vmatprep.subr.mxu0 0.0
    %2892 = vmatpush1.msra.mxu0 %v2871
    %2893 = vmatprep.subr.mxu0 0.0
    %2894 = vmatpush1.msra.mxu0 %v2872
    %2895 = vmatprep.subr.mxu0 0.0
    %2896 = vmatpush1.msra.mxu0 %v2873
    %2897 = vmatprep.subr.mxu0 0.0
    %2898 = vmatpush1.msra.mxu0 %v2874
    %2899 = vmatprep.subr.mxu0 0.0
    %2900 = vmatpush1.msra.mxu0 %v2875
    %2901 = vmatprep.subr.mxu0 0.0
    %2902 = vmatpush1.msra.mxu0 %v2876
    %2903 = vmatprep.subr.mxu0 0.0
    %2904 = vmatpush1.msra.mxu0 0.0
    %2905 = vmatprep.subr.mxu0 0.0
    %2906 = vmatpush1.msra.mxu0 0.0
    %2907 = vmatprep.subr.mxu0 0.0
    %2908 = vmatpush1.msra.mxu0 0.0
    %2909 = vmatprep.subr.mxu0 0.0
    %2910 = vmatpush1.msra.mxu0 0.0
    %2911 = vmatprep.subr.mxu0 0.0
    %2912 = vmatpush1.msra.mxu0 0.0
    %2913 = vmatprep.subr.mxu0 0.0
    %2914 = vmatpush1.msra.mxu0 0.0
    %2915 = vmatprep.subr.mxu0 0.0
    %2916 = vmatpush1.msra.mxu0 0.0
    %2917 = vmatprep.subr.mxu0 0.0
    %2918 = vmatpush1.msra.mxu0 0.0
    %2919 = vmatprep.subr.mxu0 0.0
    %2920 = vmatpush1.msra.mxu0 0.0
    %2921 = vmatprep.subr.mxu0 0.0
    %2922 = vmatpush1.msra.mxu0 0.0
    %2923 = vmatprep.subr.mxu0 0.0
    %2924 = vmatpush1.msra.mxu0 0.0
    %2925 = vmatprep.subr.mxu0 0.0
    %2926 = vmatpush1.msra.mxu0 0.0
    %2927 = vmatprep.subr.mxu0 0.0
    %2928 = vmatpush1.msra.mxu0 0.0
    %2929 = vmatprep.subr.mxu0 0.0
    %2930 = vmatpush1.msra.mxu0 0.0
    %2931 = vmatprep.subr.mxu0 0.0
    %2932 = vmatpush1.msra.mxu0 0.0
    %2933 = vmatprep.subr.mxu0 0.0
    %2934 = vmatpush1.msra.mxu0 0.0
    %2935 = vmatprep.subr.mxu0 0.0
    %2936 = vmatpush1.msra.mxu0 0.0
    %2937 = vmatprep.subr.mxu0 0.0
    %2938 = vmatpush1.msra.mxu0 0.0
    %2939 = vmatprep.subr.mxu0 0.0
    %2940 = vmatpush1.msra.mxu0 0.0
    %2941 = vmatprep.subr.mxu0 0.0
    %2942 = vmatpush1.msra.mxu0 0.0
    %2943 = vmatprep.subr.mxu0 0.0
    %2944 = vmatpush1.msra.mxu0 0.0
    %2945 = vmatprep.subr.mxu0 0.0
    %2946 = vmatpush1.msra.mxu0 0.0
    %2947 = vmatprep.subr.mxu0 0.0
    %2948 = vmatpush1.msra.mxu0 0.0
    %2949 = vmatprep.subr.mxu0 0.0
    %2950 = vmatpush1.msra.mxu0 0.0
    %2951 = vmatprep.mubr.f32.mxu0 0.0
    %2952 = vmatmul.mubr.f32.gmra.mrb[0].mxu0 %v2885
    %v2953 = vpop.f32.mrb[0].mxu0
    %v2954 = vadd.f32 %v2882, %v2953
    %v2955 = vpop.f32.mrb[0].mxu0
    %2956 = vdwg.mxu0
    %v2957 = vmul.f32 %v2477, 20000.0
    %v2958 = vmul.f32 %v2482, 20000.0
    %v2959 = vsel %vm2145, %v2957, inf
    %v2960 = vsel %vm2145, %v2958, inf
    %v2961 = vmin.f32 %v2959, %v2960
    %2962 = vmin.xlane.f32.xlu0 %v2961
    %v2963 = vpop.xlane.xlu0 %2962
    %v2964 = vrot.slane %v2963, 4
    %v2965 = vmin.f32 %v2963, %v2964
    %v2966 = vrot.slane %v2965, 2
    %v2967 = vmin.f32 %v2965, %v2966
    %v2968 = vrot.slane %v2967, 1
    %v2969 = vmin.f32 %v2967, %v2968
    %s2970 = vtos %v2969
    %v2971 = vsel %vm2145, %v2957, -inf
    %v2972 = vsel %vm2145, %v2958, -inf
    %v2973 = vmax.f32 %v2971, %v2972
    %2974 = vmax.xlane.f32.xlu0 %v2973
    %v2975 = vpop.xlane.xlu0 %2974
    %v2976 = vrot.slane %v2975, 4
    %v2977 = vmax.f32 %v2975, %v2976
    %v2978 = vrot.slane %v2977, 2
    %v2979 = vmax.f32 %v2977, %v2978
    %v2980 = vrot.slane %v2979, 1
    %v2981 = vmax.f32 %v2979, %v2980
    %s2982 = vtos %v2981
    %s2983 = ssub.f32 %s2982, %s2970
    %p2984 = scmp.gt.f32.partialorder %s2983, 1e-08
    %v2985 = vstv %s2970
    %v2986 = vsub.f32 %v2957, %v2985
    %v2987 = vsub.f32 %v2958, %v2985
    %s2988 = smax.f32 %s2983, 1e-08
    %v2989 = vstv %s2988
    %v2990 = vrcp.pop %v2989
    %v2991 = vmul.f32 %v2986, %v2990
    %v2992 = vmul.f32 %v2987, %v2990
    %s2993 = scalar_select %p2984, 1, 0
    %v2994 = vstv %s2993
    %vm2995 = vcmp.eq.s32.totalorder %v2994, 1
    %v2996 = vsel %vm2995, %v2991, %v2957
    %v2997 = vsel %vm2995, %v2992, %v2958
    %2998 = vst.msk [vmem:[%s14] sm:$0xff] %vm2145, %v2996
    %2999 = vst.msk [vmem:[%s14 + $0x8] sm:$0xff] %vm2145, %v2997
    %vm3000 = vcmask 130048
    %v3001 = vsel %vm3000, %v2954, -inf
    %3002 = vmax.xlane.f32.xlu0 %v3001
    %v3003 = vpop.xlane.xlu0 %3002
    %v3004 = vsub.f32 %v2954, %v3003
    %v3005 = vmul.f32 %v3004, 1.442695
    %v3006 = vpow.pop %v3005
    %v3007 = vsel %vm3000, %v3006, 0.0
    %3008 = vadd.xlane.f32.xlu0 %v3007
    %v3009 = vpop.xlane.xlu0 %3008
    %v3010 = vrcp.pop %v3009
    %v3011 = vmul.f32 %v3006, %v3010
    %3012 = vst.msk [vmem:[#allocation5] sm:$0xff] %vm3000, %v3011
    // Predicated region
    $region46: #{nn_forward.1} parent=1 // pred_check
      _
    $region47: #{nn_forward.1} parent=1 // pred_check_branch
      %3014 = sbr.rel (0) target = $region49
    $region48: #{nn_forward.1} parent=1 // pred_region
      %s3016 = ssub.s32 128, 128
      %3017 = vsyncadd [#allocation4], %s3016
      %s3019 = sshll.u32 [#allocation5], 4
      %s3020 = int_to_ptr.vmem [resolvable:$true] %s3019
      %3022 = dma.vmem_to_hbm [thread:$0]  %s3020, 128, %s10, [#allocation4]
    $region49: #{nn_forward.1} parent=1 // pred_fallthru
      _
    // Predicated region
    $region50: #{nn_forward.1} parent=1 // pred_check
      _
    $region51: #{nn_forward.1} parent=1 // pred_check_branch
      %3024 = sbr.rel (0) target = $region53
    $region52: #{nn_forward.1} parent=1 // pred_region
      _
    $region53: #{nn_forward.1} parent=1 // pred_fallthru
      _
    // Predicated region
    $region54: #{nn_forward.1} parent=1 // pred_check
      _
    $region55: #{nn_forward.1} parent=1 // pred_check_branch
      %3026 = sbr.rel (0) target = $region57
    $region56: #{nn_forward.1} parent=1 // pred_region
      _
    $region57: #{nn_forward.1} parent=1 // pred_fallthru
      _
    // Predicated region
    $region58: #{nn_forward.1} parent=1 // pred_check
      _
    $region59: #{nn_forward.1} parent=1 // pred_check_branch
      %3028 = sbr.rel (0) target = $region61
    $region60: #{nn_forward.1} parent=1 // pred_region
      _
    $region61: #{nn_forward.1} parent=1 // pred_fallthru
      _
    // Predicated region
    $region62: #{nn_forward.1} parent=1 // pred_check
      _
    $region63: #{nn_forward.1} parent=1 // pred_check_branch
      %3030 = sbr.rel (0) target = $region65
    $region64: #{nn_forward.1} parent=1 // pred_region
      _
    $region65: #{nn_forward.1} parent=1 // pred_fallthru
      _
    // Predicated region
    $region66: #{nn_forward.1} parent=1 // pred_check
      _
    $region67: #{nn_forward.1} parent=1 // pred_check_branch
      %3032 = sbr.rel (0) target = $region69
    $region68: #{nn_forward.1} parent=1 // pred_region
      _
    $region69: #{nn_forward.1} parent=1 // pred_fallthru
      _
    // Predicated region
    $region70: #{nn_forward.1} parent=1 // pred_check
      _
    $region71: #{nn_forward.1} parent=1 // pred_check_branch
      %3034 = sbr.rel (0) target = $region73
    $region72: #{nn_forward.1} parent=1 // pred_region
      _
    $region73: #{nn_forward.1} parent=1 // pred_fallthru
      _
    // Predicated region
    $region74: #{nn_forward.1} parent=1 // pred_check
      _
    $region75: #{nn_forward.1} parent=1 // pred_check_branch
      %3036 = sbr.rel (0) target = $region77
    $region76: #{nn_forward.1} parent=1 // pred_region
      _
    $region77: #{nn_forward.1} parent=1 // pred_fallthru
      _
    // Predicated region
    $region78: #{nn_forward.1} parent=1 // pred_check
      _
    $region79: #{nn_forward.1} parent=1 // pred_check_branch
      %3038 = sbr.rel (0) target = $region81
    $region80: #{nn_forward.1} parent=1 // pred_region
      %3039 = dma.done [#allocation4], 128
    $region81: #{nn_forward.1} parent=1 // pred_fallthru
      _
    // Predicated region
    $region82: #{nn_forward.1} parent=1 // pred_check
      _
    $region83: #{nn_forward.1} parent=1 // pred_check_branch
      %3041 = sbr.rel (0) target = $region85
    $region84: #{nn_forward.1} parent=1 // pred_region
      _
    $region85: #{nn_forward.1} parent=1 // pred_fallthru
      _
    // Predicated region
    $region86: #{nn_forward.1} parent=1 // pred_check
      _
    $region87: #{nn_forward.1} parent=1 // pred_check_branch
      %3043 = sbr.rel (0) target = $region89
    $region88: #{nn_forward.1} parent=1 // pred_region
      _
    $region89: #{nn_forward.1} parent=1 // pred_fallthru
      _
    // Predicated region
    $region90: #{nn_forward.1} parent=1 // pred_check
      _
    $region91: #{nn_forward.1} parent=1 // pred_check_branch
      %3045 = sbr.rel (0) target = $region93
    $region92: #{nn_forward.1} parent=1 // pred_region
      _
    $region93: #{nn_forward.1} parent=1 // pred_fallthru
      _
    // Predicated region
    $region94: #{nn_forward.1} parent=1 // pred_check
      _
    $region95: #{nn_forward.1} parent=1 // pred_check_branch
      %3047 = sbr.rel (0) target = $region97
    $region96: #{nn_forward.1} parent=1 // pred_region
      _
    $region97: #{nn_forward.1} parent=1 // pred_fallthru
      _
    // Predicated region
    $region98: #{nn_forward.1} parent=1 // pred_check
      _
    $region99: #{nn_forward.1} parent=1 // pred_check_branch
      %3049 = sbr.rel (0) target = $region101
    $region100: #{nn_forward.1} parent=1 // pred_region
      _
    $region101: #{nn_forward.1} parent=1 // pred_fallthru
      _
    // Predicated region
    $region102: #{nn_forward.1} parent=1 // pred_check
      _
    $region103: #{nn_forward.1} parent=1 // pred_check_branch
      %3051 = sbr.rel (0) target = $region105
    $region104: #{nn_forward.1} parent=1 // pred_region
      _
    $region105: #{nn_forward.1} parent=1 // pred_fallthru
      _
    // Predicated region
    $region106: #{nn_forward.1} parent=1 // pred_check
      _
    $region107: #{nn_forward.1} parent=1 // pred_check_branch
      %3053 = sbr.rel (0) target = $region109
    $region108: #{nn_forward.1} parent=1 // pred_region
      _
    $region109: #{nn_forward.1} parent=1 // pred_fallthru
      _
    %3054 = vsyncpa [#allocation3], 1
    %3055 = vsyncpa [#allocation4], 1

</llo_original>
